<compile_context>
chip_gen: v7x
topology: tpu7x:2x2x1
jax: 0.10.0
libtpu: 0.0.40
codegen_flags: <defaults>
</compile_context>

<pallas_src>
import math
import functools

import jax
import jax.numpy as jnp
from jax.experimental import pallas as pl
from jax.experimental.pallas import tpu as pltpu

LN_EPS = 1e-12  # BERT LayerNorm eps


# ----------------------------- in-kernel helpers -----------------------------
def _ln(x, g, b):
    mu = jnp.mean(x, axis=-1, keepdims=True)
    var = jnp.mean(jnp.square(x - mu), axis=-1, keepdims=True)
    return (x - mu) * jax.lax.rsqrt(var + LN_EPS) * g + b


# ------------------------------ fused Pallas kernel ---------------------------
def fused_bert_kernel(emb_ref, mask_ref, eg_ref, eb_ref,
                      wq_ref, bq_ref, wk_ref, bk_ref, wv_ref, bv_ref,
                      wo_ref, bo_ref, g1_ref, b1_ref,
                      wi_ref, bi_ref, wf_ref, bf_ref, g2_ref, b2_ref,
                      o_ref, *, num_layers, num_heads, head_dim, bb, seq):
    H = num_heads * head_dim
    M = bb * seq                                   # batch*seq rows for the MXU

    # Embedding LayerNorm on the flattened (B*S, H) slab.
    x = emb_ref[...].reshape(M, H)                 # (M, H) f32
    h = _ln(x, eg_ref[...], eb_ref[...])

    # Additive attention bias built in-kernel from the (bb, 1, S) key mask;
    # never materialized as (B, S, S) in HBM.
    neg_bias = (1.0 - mask_ref[...]) * -10000.0    # (bb, 1, S)

    scale = 1.0 / math.sqrt(head_dim)

    for l in range(num_layers):                    # static unroll; weights stay in VMEM
        wq_l, wk_l, wv_l, wo_l = wq_ref[l], wk_ref[l], wv_ref[l], wo_ref[l]
        wi_l, wf_l = wi_ref[l], wf_ref[l]

        xb = h.astype(jnp.bfloat16)
        q = jnp.dot(xb, wq_l, preferred_element_type=jnp.float32) + bq_ref[l]
        k = jnp.dot(xb, wk_l, preferred_element_type=jnp.float32) + bk_ref[l]
        v = jnp.dot(xb, wv_l, preferred_element_type=jnp.float32) + bv_ref[l]
        q3 = q.reshape(bb, seq, H)
        k3 = k.reshape(bb, seq, H)
        v3 = v.reshape(bb, seq, H)

        # Per-head attention.  Head loop is static & small; the output
        # projection is fused per head (ctx_h @ Wo[h]) and accumulated, so no
        # lane-concatenate is needed and the MXU output is full H lanes.
        # TODO(synk): a fully batched (B, NH) head contraction would need a
        # lane-splitting H -> (NH, head_dim) reshape whose Mosaic lowering is
        # less robust; kept as a static per-head loop instead.
        attn = jnp.zeros((M, H), jnp.float32)
        for hh in range(num_heads):
            lo = hh * head_dim
            qh = q3[:, :, lo:lo + head_dim].astype(jnp.bfloat16)
            kh = k3[:, :, lo:lo + head_dim].astype(jnp.bfloat16)
            vh = v3[:, :, lo:lo + head_dim].astype(jnp.bfloat16)
            s = jnp.einsum("bqd,bkd->bqk", qh, kh,
                           preferred_element_type=jnp.float32) * scale + neg_bias
            s = s - jnp.max(s, axis=-1, keepdims=True)
            p = jnp.exp(s)
            p = p * pl.reciprocal(jnp.sum(p, axis=-1, keepdims=True), approx=True)
            ctx = jnp.einsum("bqk,bkd->bqd", p.astype(jnp.bfloat16), vh,
                             preferred_element_type=jnp.float32)
            attn = attn + jnp.dot(ctx.reshape(M, head_dim).astype(jnp.bfloat16),
                                  wo_l[lo:lo + head_dim, :],
                                  preferred_element_type=jnp.float32)
        attn = attn + bo_ref[l]
        h1 = _ln(h + attn, g1_ref[l], b1_ref[l])

        inter = jnp.dot(h1.astype(jnp.bfloat16), wi_l,
                        preferred_element_type=jnp.float32) + bi_ref[l]
        # TODO(synk): BERT uses exact erf GELU; tanh approximation used for
        # guaranteed Mosaic lowering (~1e-3 relative difference).
        inter = 0.5 * inter * (1.0 + jnp.tanh(
            0.7978845608028654 * (inter + 0.044715 * inter * inter * inter)))
        ffn = jnp.dot(inter.astype(jnp.bfloat16), wf_l,
                      preferred_element_type=jnp.float32) + bf_ref[l]
        h = _ln(h1 + ffn, g2_ref[l], b2_ref[l])

    o_ref[...] = h.reshape(bb, seq, H)


def _pick_batch_block(batch, seq, target_rows=256):
    """Rows per grid step ~ target_rows (MXU-friendly M).  Prefer >=2 grid
    steps (v7x has 2 TensorCores) only when that keeps M >= 128 per step;
    at toy sizes we prioritize folding the whole batch into one M block.
    v5e note: 128-row tiles are already MXU-native there."""
    bb = max(1, min(batch, max(1, target_rows // seq)))
    while bb > 1 and batch // bb < 2 and (bb // 2) * seq >= 128:
        bb //= 2
    while batch % bb:
        bb -= 1
    return bb


def fused_bert_forward(emb, maskf, params, *, num_heads):
    B, S, H = emb.shape
    L = params["wq"].shape[0]
    head_dim = H // num_heads
    bb = _pick_batch_block(B, S)
    nb = B // bb

    weight_names = ["wq", "bq", "wk", "bk", "wv", "bv", "wo", "bo",
                    "ln1_g", "ln1_b", "wi", "bi", "wf", "bf", "ln2_g", "ln2_b"]
    weights = [params[n] for n in weight_names]

    def resident(a):
        # Whole (layer-stacked) weight tensor resident in VMEM; same block for
        # every grid step, so it is fetched once.
        # (pipeline_mode=pl.Buffered(1) would drop the second buffer on v7x's
        #  64 MiB VMEM for real-size models; unnecessary at these sizes.)
        return pl.BlockSpec(a.shape, lambda i, _nd=a.ndim: (0,) * _nd)

    in_specs = ([pl.BlockSpec((bb, S, H), lambda i: (i, 0, 0)),
                 pl.BlockSpec((bb, 1, S), lambda i: (i, 0, 0)),
                 resident(params["emb_ln_g"]), resident(params["emb_ln_b"])]
                + [resident(w) for w in weights])

    kernel = functools.partial(fused_bert_kernel, num_layers=L,
                               num_heads=num_heads, head_dim=head_dim,
                               bb=bb, seq=S)
    return pl.pallas_call(
        kernel,
        grid=(nb,),
        in_specs=in_specs,
        out_specs=pl.BlockSpec((bb, S, H), lambda i: (i, 0, 0)),
        out_shape=jax.ShapeDtypeStruct((B, S, H), jnp.float32),
        compiler_params=pltpu.CompilerParams(
            dimension_semantics=("parallel",),
            vmem_limit_bytes=64 * 1024 * 1024),
    )(emb, maskf, params["emb_ln_g"], params["emb_ln_b"], *weights)


# ------------------------------ host-side glue -------------------------------
def get_seg_ids(ids, sep_id):
    """Vectorized PytorchTransformersEmbedderModule.get_seg_ids.

    seg[i] = (# of [SEP] strictly before i) % 2, zeroed for positions strictly
    after the last [SEP] (matches the per-row python loop in the reference)."""
    is_sep = (ids == sep_id).astype(jnp.int32)
    excl_cum = jnp.cumsum(is_sep, axis=1) - is_sep                    # seps before i
    sep_at_or_after = jnp.flip(jnp.cumsum(jnp.flip(is_sep, 1), 1), 1) > 0
    return jnp.where(sep_at_or_after, excl_cum % 2, 0)


def bert_embedder_forward(ids_raw, params, *, sep_id, pad_id, num_heads):
    """Forward of BertEmbedderModule (embeddings_mode='top')."""
    B, S = ids_raw.shape
    assert S <= 512
    mask = (ids_raw != 0)
    ids = jnp.where(ids_raw == 0, pad_id + 2, ids_raw) - 2   # back to BERT-native ids
    token_types = get_seg_ids(ids, sep_id)

    # Embedding gathers are data-dependent lookups -> host-side glue
    # (LayerNorm + all encoder layers run inside the fused Pallas kernel).
    emb = (params["word_emb"][ids]
           + params["pos_emb"][jnp.arange(S)][None, :, :]
           + params["type_emb"][token_types])
    maskf = mask.astype(jnp.float32)[:, None, :]             # (B, 1, S) key mask

    # prepare_output with embeddings_mode='top' -> last hidden layer
    return fused_bert_forward(emb, maskf, params, num_heads=num_heads)


def init_params(key, *, vocab, hidden, inter, num_layers, max_pos, type_vocab=2):
    keys = iter(jax.random.split(key, 3 + 12 * num_layers))

    def rnd(shape):
        return jax.random.normal(next(keys), shape, jnp.float32) * 0.02

    params = {
        "word_emb": rnd((vocab, hidden)),
        "pos_emb": rnd((max_pos, hidden)),
        "type_emb": rnd((type_vocab, hidden)),
        "emb_ln_g": jnp.ones((1, hidden), jnp.float32),
        "emb_ln_b": jnp.zeros((1, hidden), jnp.float32),
    }

    per_layer = {n: [] for n in ["wq", "bq", "wk", "bk", "wv", "bv",
                                 "wo", "bo", "wi", "bi", "wf", "bf"]}
    for _ in range(num_layers):
        per_layer["wq"].append(rnd((hidden, hidden)))
        per_layer["bq"].append(rnd((1, hidden)))
        per_layer["wk"].append(rnd((hidden, hidden)))
        per_layer["bk"].append(rnd((1, hidden)))
        per_layer["wv"].append(rnd((hidden, hidden)))
        per_layer["bv"].append(rnd((1, hidden)))
        per_layer["wo"].append(rnd((hidden, hidden)))
        per_layer["bo"].append(rnd((1, hidden)))
        per_layer["wi"].append(rnd((hidden, inter)))
        per_layer["bi"].append(rnd((1, inter)))
        per_layer["wf"].append(rnd((inter, hidden)))
        per_layer["bf"].append(rnd((1, hidden)))

    matmul_weights = {"wq", "wk", "wv", "wo", "wi", "wf"}
    for name, vals in per_layer.items():
        stacked = jnp.stack(vals)                       # (L, ...)
        params[name] = (stacked.astype(jnp.bfloat16)
                        if name in matmul_weights else stacked)

    params["ln1_g"] = jnp.ones((num_layers, 1, hidden), jnp.float32)
    params["ln1_b"] = jnp.zeros((num_layers, 1, hidden), jnp.float32)
    params["ln2_g"] = jnp.ones((num_layers, 1, hidden), jnp.float32)
    params["ln2_b"] = jnp.zeros((num_layers, 1, hidden), jnp.float32)
    return params


if __name__ == "__main__":
    # Small synthetic BERT config
    B, S, H, NH, INTER, L, VOCAB = 2, 8, 128, 2, 256, 2, 64
    CLS_ID, SEP_ID, PAD_ID = 3, 4, 0      # BERT-native ids (synthetic vocab)

    key = jax.random.PRNGKey(0)
    params = init_params(key, vocab=VOCAB, hidden=H, inter=INTER,
                         num_layers=L, max_pos=S)

    # AllenNLP-style indexed ids = bert_id + 2, with 0 for padding.
    ids_raw = jnp.array(
        [[CLS_ID + 2, 12, 13, 14, SEP_ID + 2, 22, 23, SEP_ID + 2],
         [CLS_ID + 2, 17, 18, SEP_ID + 2, 0, 0, 0, 0]],
        dtype=jnp.int32)

    out = bert_embedder_forward(ids_raw, params, sep_id=SEP_ID, pad_id=PAD_ID,
                                num_heads=NH)
    out = jax.block_until_ready(out)
    assert out.shape == (B, S, H) and out.dtype == jnp.float32
    assert bool(jnp.all(jnp.isfinite(out)))
    print("KERNEL_OK")
</pallas_src>

<mosaic_0001>
module attributes {stable_mosaic.version = 11 : i64} {
  func.func @fused_bert_kernel(%arg0: i32, %arg1: memref<2x8x128xf32, #tpu.memory_space<vmem>>, %arg2: memref<2x1x8xf32, #tpu.memory_space<vmem>>, %arg3: memref<1x128xf32, #tpu.memory_space<vmem>>, %arg4: memref<1x128xf32, #tpu.memory_space<vmem>>, %arg5: memref<2x128x128xbf16, #tpu.memory_space<vmem>>, %arg6: memref<2x1x128xf32, #tpu.memory_space<vmem>>, %arg7: memref<2x128x128xbf16, #tpu.memory_space<vmem>>, %arg8: memref<2x1x128xf32, #tpu.memory_space<vmem>>, %arg9: memref<2x128x128xbf16, #tpu.memory_space<vmem>>, %arg10: memref<2x1x128xf32, #tpu.memory_space<vmem>>, %arg11: memref<2x128x128xbf16, #tpu.memory_space<vmem>>, %arg12: memref<2x1x128xf32, #tpu.memory_space<vmem>>, %arg13: memref<2x1x128xf32, #tpu.memory_space<vmem>>, %arg14: memref<2x1x128xf32, #tpu.memory_space<vmem>>, %arg15: memref<2x128x256xbf16, #tpu.memory_space<vmem>>, %arg16: memref<2x1x256xf32, #tpu.memory_space<vmem>>, %arg17: memref<2x256x128xbf16, #tpu.memory_space<vmem>>, %arg18: memref<2x1x128xf32, #tpu.memory_space<vmem>>, %arg19: memref<2x1x128xf32, #tpu.memory_space<vmem>>, %arg20: memref<2x1x128xf32, #tpu.memory_space<vmem>>, %arg21: memref<2x8x128xf32, #tpu.memory_space<vmem>>) attributes {dimension_semantics = [#tpu.dimension_semantics<parallel>], iteration_bounds = array<i64: 1>, scalar_prefetch = 0 : i64, scratch_operands = 0 : i64, tpu.core_type = #tpu.core_type<tc>, window_params = [{transform_indices = @transform_0, window_bounds = array<i64: 2, 8, 128>}, {transform_indices = @transform_1, window_bounds = array<i64: 2, 1, 8>}, {pipeline_mode = #tpu.pipeline_mode<synchronous>, transform_indices = @transform_2, window_bounds = array<i64: 1, 128>}, {pipeline_mode = #tpu.pipeline_mode<synchronous>, transform_indices = @transform_3, window_bounds = array<i64: 1, 128>}, {pipeline_mode = #tpu.pipeline_mode<synchronous>, transform_indices = @transform_4, window_bounds = array<i64: 2, 128, 128>}, {pipeline_mode = #tpu.pipeline_mode<synchronous>, transform_indices = @transform_5, window_bounds = array<i64: 2, 1, 128>}, {pipeline_mode = #tpu.pipeline_mode<synchronous>, transform_indices = @transform_6, window_bounds = array<i64: 2, 128, 128>}, {pipeline_mode = #tpu.pipeline_mode<synchronous>, transform_indices = @transform_7, window_bounds = array<i64: 2, 1, 128>}, {pipeline_mode = #tpu.pipeline_mode<synchronous>, transform_indices = @transform_8, window_bounds = array<i64: 2, 128, 128>}, {pipeline_mode = #tpu.pipeline_mode<synchronous>, transform_indices = @transform_9, window_bounds = array<i64: 2, 1, 128>}, {pipeline_mode = #tpu.pipeline_mode<synchronous>, transform_indices = @transform_10, window_bounds = array<i64: 2, 128, 128>}, {pipeline_mode = #tpu.pipeline_mode<synchronous>, transform_indices = @transform_11, window_bounds = array<i64: 2, 1, 128>}, {pipeline_mode = #tpu.pipeline_mode<synchronous>, transform_indices = @transform_12, window_bounds = array<i64: 2, 1, 128>}, {pipeline_mode = #tpu.pipeline_mode<synchronous>, transform_indices = @transform_13, window_bounds = array<i64: 2, 1, 128>}, {pipeline_mode = #tpu.pipeline_mode<synchronous>, transform_indices = @transform_14, window_bounds = array<i64: 2, 128, 256>}, {pipeline_mode = #tpu.pipeline_mode<synchronous>, transform_indices = @transform_15, window_bounds = array<i64: 2, 1, 256>}, {pipeline_mode = #tpu.pipeline_mode<synchronous>, transform_indices = @transform_16, window_bounds = array<i64: 2, 256, 128>}, {pipeline_mode = #tpu.pipeline_mode<synchronous>, transform_indices = @transform_17, window_bounds = array<i64: 2, 1, 128>}, {pipeline_mode = #tpu.pipeline_mode<synchronous>, transform_indices = @transform_18, window_bounds = array<i64: 2, 1, 128>}, {pipeline_mode = #tpu.pipeline_mode<synchronous>, transform_indices = @transform_19, window_bounds = array<i64: 2, 1, 128>}, {transform_indices = @transform_20, window_bounds = array<i64: 2, 8, 128>}]} {
    %c0 = arith.constant 0 : index
    %c0_0 = arith.constant 0 : index
    %c0_1 = arith.constant 0 : index
    %0 = vector.load %arg1[%c0, %c0_0, %c0_1] : memref<2x8x128xf32, #tpu.memory_space<vmem>>, vector<2x8x128xf32>
    %1 = vector.shape_cast %0 : vector<2x8x128xf32> to vector<16x128xf32>
    %c0_2 = arith.constant 0 : index
    %c0_3 = arith.constant 0 : index
    %2 = vector.load %arg3[%c0_2, %c0_3] : memref<1x128xf32, #tpu.memory_space<vmem>>, vector<1x128xf32>
    %c0_4 = arith.constant 0 : index
    %c0_5 = arith.constant 0 : index
    %3 = vector.load %arg4[%c0_4, %c0_5] : memref<1x128xf32, #tpu.memory_space<vmem>>, vector<1x128xf32>
    %cst = arith.constant dense<0.000000e+00> : vector<16xf32>
    %4 = vector.multi_reduction <add>, %1, %cst [1] : vector<16x128xf32> to vector<16xf32>
    %5 = vector.shape_cast %4 : vector<16xf32> to vector<16x1xf32>
    %cst_6 = arith.constant 1.280000e+02 : f32
    %6 = vector.broadcast %cst_6 : f32 to vector<16x1xf32>
    %7 = arith.divf %5, %6 : vector<16x1xf32>
    %8 = vector.broadcast %7 : vector<16x1xf32> to vector<16x128xf32>
    %9 = arith.subf %1, %8 : vector<16x128xf32>
    %10 = arith.mulf %9, %9 : vector<16x128xf32>
    %cst_7 = arith.constant dense<0.000000e+00> : vector<16xf32>
    %11 = vector.multi_reduction <add>, %10, %cst_7 [1] : vector<16x128xf32> to vector<16xf32>
    %12 = vector.shape_cast %11 : vector<16xf32> to vector<16x1xf32>
    %cst_8 = arith.constant 1.280000e+02 : f32
    %13 = vector.broadcast %cst_8 : f32 to vector<16x1xf32>
    %14 = arith.divf %12, %13 : vector<16x1xf32>
    %15 = vector.broadcast %7 : vector<16x1xf32> to vector<16x128xf32>
    %16 = arith.subf %1, %15 : vector<16x128xf32>
    %cst_9 = arith.constant 9.99999996E-13 : f32
    %17 = vector.broadcast %cst_9 : f32 to vector<16x1xf32>
    %18 = arith.addf %14, %17 : vector<16x1xf32>
    %19 = math.rsqrt %18 : vector<16x1xf32>
    %20 = vector.broadcast %19 : vector<16x1xf32> to vector<16x128xf32>
    %21 = arith.mulf %16, %20 : vector<16x128xf32>
    %22 = vector.broadcast %2 : vector<1x128xf32> to vector<16x128xf32>
    %23 = arith.mulf %21, %22 : vector<16x128xf32>
    %24 = vector.broadcast %3 : vector<1x128xf32> to vector<16x128xf32>
    %25 = arith.addf %23, %24 : vector<16x128xf32>
    %c0_10 = arith.constant 0 : index
    %c0_11 = arith.constant 0 : index
    %c0_12 = arith.constant 0 : index
    %26 = vector.load %arg2[%c0_10, %c0_11, %c0_12] : memref<2x1x8xf32, #tpu.memory_space<vmem>>, vector<2x1x8xf32>
    %cst_13 = arith.constant 1.000000e+00 : f32
    %27 = vector.broadcast %cst_13 : f32 to vector<2x1x8xf32>
    %28 = arith.subf %27, %26 : vector<2x1x8xf32>
    %cst_14 = arith.constant -1.000000e+04 : f32
    %29 = vector.broadcast %cst_14 : f32 to vector<2x1x8xf32>
    %30 = arith.mulf %28, %29 : vector<2x1x8xf32>
    %c0_15 = arith.constant 0 : index
    %c0_16 = arith.constant 0 : index
    %c0_17 = arith.constant 0 : index
    %31 = vector.load %arg5[%c0_15, %c0_16, %c0_17] : memref<2x128x128xbf16, #tpu.memory_space<vmem>>, vector<1x128x128xbf16>
    %32 = vector.shape_cast %31 : vector<1x128x128xbf16> to vector<128x128xbf16>
    %c0_18 = arith.constant 0 : index
    %c0_19 = arith.constant 0 : index
    %c0_20 = arith.constant 0 : index
    %33 = vector.load %arg7[%c0_18, %c0_19, %c0_20] : memref<2x128x128xbf16, #tpu.memory_space<vmem>>, vector<1x128x128xbf16>
    %34 = vector.shape_cast %33 : vector<1x128x128xbf16> to vector<128x128xbf16>
    %c0_21 = arith.constant 0 : index
    %c0_22 = arith.constant 0 : index
    %c0_23 = arith.constant 0 : index
    %35 = vector.load %arg9[%c0_21, %c0_22, %c0_23] : memref<2x128x128xbf16, #tpu.memory_space<vmem>>, vector<1x128x128xbf16>
    %36 = vector.shape_cast %35 : vector<1x128x128xbf16> to vector<128x128xbf16>
    %c0_24 = arith.constant 0 : index
    %c0_25 = arith.constant 0 : index
    %c0_26 = arith.constant 0 : index
    %37 = vector.load %arg11[%c0_24, %c0_25, %c0_26] : memref<2x128x128xbf16, #tpu.memory_space<vmem>>, vector<1x128x128xbf16>
    %38 = vector.shape_cast %37 : vector<1x128x128xbf16> to vector<128x128xbf16>
    %c0_27 = arith.constant 0 : index
    %c0_28 = arith.constant 0 : index
    %c0_29 = arith.constant 0 : index
    %39 = vector.load %arg15[%c0_27, %c0_28, %c0_29] : memref<2x128x256xbf16, #tpu.memory_space<vmem>>, vector<1x128x256xbf16>
    %40 = vector.shape_cast %39 : vector<1x128x256xbf16> to vector<128x256xbf16>
    %c0_30 = arith.constant 0 : index
    %c0_31 = arith.constant 0 : index
    %c0_32 = arith.constant 0 : index
    %41 = vector.load %arg17[%c0_30, %c0_31, %c0_32] : memref<2x256x128xbf16, #tpu.memory_space<vmem>>, vector<1x256x128xbf16>
    %42 = vector.shape_cast %41 : vector<1x256x128xbf16> to vector<256x128xbf16>
    %43 = arith.truncf %25 : vector<16x128xf32> to vector<16x128xbf16>
    %cst_33 = arith.constant dense<0.000000e+00> : vector<16x128xf32>
    %44 = tpu.matmul %43, %32, %cst_33 {dimension_numbers = #tpu.dot_dimension_numbers<[1], [0], [0], [1], [0, 0, 1, 1], [], []>} : vector<16x128xbf16>, vector<128x128xbf16>, vector<16x128xf32> -> vector<16x128xf32>
    %c0_34 = arith.constant 0 : index
    %c0_35 = arith.constant 0 : index
    %c0_36 = arith.constant 0 : index
    %45 = vector.load %arg6[%c0_34, %c0_35, %c0_36] : memref<2x1x128xf32, #tpu.memory_space<vmem>>, vector<1x1x128xf32>
    %46 = vector.shape_cast %45 : vector<1x1x128xf32> to vector<1x128xf32>
    %47 = vector.broadcast %46 : vector<1x128xf32> to vector<16x128xf32>
    %48 = arith.addf %44, %47 : vector<16x128xf32>
    %cst_37 = arith.constant dense<0.000000e+00> : vector<16x128xf32>
    %49 = tpu.matmul %43, %34, %cst_37 {dimension_numbers = #tpu.dot_dimension_numbers<[1], [0], [0], [1], [0, 0, 1, 1], [], []>} : vector<16x128xbf16>, vector<128x128xbf16>, vector<16x128xf32> -> vector<16x128xf32>
    %c0_38 = arith.constant 0 : index
    %c0_39 = arith.constant 0 : index
    %c0_40 = arith.constant 0 : index
    %50 = vector.load %arg8[%c0_38, %c0_39, %c0_40] : memref<2x1x128xf32, #tpu.memory_space<vmem>>, vector<1x1x128xf32>
    %51 = vector.shape_cast %50 : vector<1x1x128xf32> to vector<1x128xf32>
    %52 = vector.broadcast %51 : vector<1x128xf32> to vector<16x128xf32>
    %53 = arith.addf %49, %52 : vector<16x128xf32>
    %cst_41 = arith.constant dense<0.000000e+00> : vector<16x128xf32>
    %54 = tpu.matmul %43, %36, %cst_41 {dimension_numbers = #tpu.dot_dimension_numbers<[1], [0], [0], [1], [0, 0, 1, 1], [], []>} : vector<16x128xbf16>, vector<128x128xbf16>, vector<16x128xf32> -> vector<16x128xf32>
    %c0_42 = arith.constant 0 : index
    %c0_43 = arith.constant 0 : index
    %c0_44 = arith.constant 0 : index
    %55 = vector.load %arg10[%c0_42, %c0_43, %c0_44] : memref<2x1x128xf32, #tpu.memory_space<vmem>>, vector<1x1x128xf32>
    %56 = vector.shape_cast %55 : vector<1x1x128xf32> to vector<1x128xf32>
    %57 = vector.broadcast %56 : vector<1x128xf32> to vector<16x128xf32>
    %58 = arith.addf %54, %57 : vector<16x128xf32>
    %59 = vector.shape_cast %48 : vector<16x128xf32> to vector<2x8x128xf32>
    %60 = vector.shape_cast %53 : vector<16x128xf32> to vector<2x8x128xf32>
    %61 = vector.shape_cast %58 : vector<16x128xf32> to vector<2x8x128xf32>
    %cst_45 = arith.constant 0.000000e+00 : f32
    %62 = vector.broadcast %cst_45 : f32 to vector<16x128xf32>
    %63 = vector.extract_strided_slice %59 {offsets = [0, 0, 0], sizes = [2, 8, 64], strides = [1, 1, 1]} : vector<2x8x128xf32> to vector<2x8x64xf32>
    %64 = arith.truncf %63 : vector<2x8x64xf32> to vector<2x8x64xbf16>
    %65 = vector.extract_strided_slice %60 {offsets = [0, 0, 0], sizes = [2, 8, 64], strides = [1, 1, 1]} : vector<2x8x128xf32> to vector<2x8x64xf32>
    %66 = arith.truncf %65 : vector<2x8x64xf32> to vector<2x8x64xbf16>
    %67 = vector.extract_strided_slice %61 {offsets = [0, 0, 0], sizes = [2, 8, 64], strides = [1, 1, 1]} : vector<2x8x128xf32> to vector<2x8x64xf32>
    %68 = arith.truncf %67 : vector<2x8x64xf32> to vector<2x8x64xbf16>
    "tpu.trace_start"() <{level = 10 : i32, message = "bqd,bkd->bqk"}> : () -> ()
    %cst_46 = arith.constant dense<0.000000e+00> : vector<2x8x8xf32>
    %69 = tpu.matmul %64, %66, %cst_46 {dimension_numbers = #tpu.dot_dimension_numbers<[2], [2], [1], [1], [0, 0, 0, 1, 1, 1], [0], [0]>} : vector<2x8x64xbf16>, vector<2x8x64xbf16>, vector<2x8x8xf32> -> vector<2x8x8xf32>
    "tpu.trace_stop"() : () -> ()
    %cst_47 = arith.constant 1.250000e-01 : f32
    %70 = vector.broadcast %cst_47 : f32 to vector<2x8x8xf32>
    %71 = arith.mulf %69, %70 : vector<2x8x8xf32>
    %72 = vector.broadcast %30 : vector<2x1x8xf32> to vector<2x8x8xf32>
    %73 = arith.addf %71, %72 : vector<2x8x8xf32>
    %cst_48 = arith.constant dense<0xFF800000> : vector<2x8xf32>
    %74 = vector.multi_reduction <maximumf>, %73, %cst_48 [2] : vector<2x8x8xf32> to vector<2x8xf32>
    %75 = vector.shape_cast %74 : vector<2x8xf32> to vector<2x8x1xf32>
    %76 = vector.broadcast %75 : vector<2x8x1xf32> to vector<2x8x8xf32>
    %77 = arith.subf %73, %76 : vector<2x8x8xf32>
    %78 = math.exp %77 : vector<2x8x8xf32>
    %cst_49 = arith.constant dense<0.000000e+00> : vector<2x8xf32>
    %79 = vector.multi_reduction <add>, %78, %cst_49 [2] : vector<2x8x8xf32> to vector<2x8xf32>
    %80 = vector.shape_cast %79 : vector<2x8xf32> to vector<2x8x1xf32>
    %81 = tpu.reciprocal %80 {approx = true} : vector<2x8x1xf32> -> vector<2x8x1xf32>
    %82 = vector.broadcast %81 : vector<2x8x1xf32> to vector<2x8x8xf32>
    %83 = arith.mulf %78, %82 : vector<2x8x8xf32>
    %84 = arith.truncf %83 : vector<2x8x8xf32> to vector<2x8x8xbf16>
    "tpu.trace_start"() <{level = 10 : i32, message = "bqk,bkd->bqd"}> : () -> ()
    %cst_50 = arith.constant dense<0.000000e+00> : vector<2x8x64xf32>
    %85 = tpu.matmul %84, %68, %cst_50 {dimension_numbers = #tpu.dot_dimension_numbers<[2], [1], [1], [2], [0, 0, 0, 1, 1, 2], [0], [0]>} : vector<2x8x8xbf16>, vector<2x8x64xbf16>, vector<2x8x64xf32> -> vector<2x8x64xf32>
    "tpu.trace_stop"() : () -> ()
    %86 = vector.shape_cast %85 : vector<2x8x64xf32> to vector<16x64xf32>
    %87 = arith.truncf %86 : vector<16x64xf32> to vector<16x64xbf16>
    %88 = vector.extract_strided_slice %38 {offsets = [0, 0], sizes = [64, 128], strides = [1, 1]} : vector<128x128xbf16> to vector<64x128xbf16>
    %cst_51 = arith.constant dense<0.000000e+00> : vector<16x128xf32>
    %89 = tpu.matmul %87, %88, %cst_51 {dimension_numbers = #tpu.dot_dimension_numbers<[1], [0], [0], [1], [0, 0, 1, 1], [], []>} : vector<16x64xbf16>, vector<64x128xbf16>, vector<16x128xf32> -> vector<16x128xf32>
    %90 = arith.addf %62, %89 : vector<16x128xf32>
    %91 = vector.extract_strided_slice %59 {offsets = [0, 0, 64], sizes = [2, 8, 64], strides = [1, 1, 1]} : vector<2x8x128xf32> to vector<2x8x64xf32>
    %92 = arith.truncf %91 : vector<2x8x64xf32> to vector<2x8x64xbf16>
    %93 = vector.extract_strided_slice %60 {offsets = [0, 0, 64], sizes = [2, 8, 64], strides = [1, 1, 1]} : vector<2x8x128xf32> to vector<2x8x64xf32>
    %94 = arith.truncf %93 : vector<2x8x64xf32> to vector<2x8x64xbf16>
    %95 = vector.extract_strided_slice %61 {offsets = [0, 0, 64], sizes = [2, 8, 64], strides = [1, 1, 1]} : vector<2x8x128xf32> to vector<2x8x64xf32>
    %96 = arith.truncf %95 : vector<2x8x64xf32> to vector<2x8x64xbf16>
    "tpu.trace_start"() <{level = 10 : i32, message = "bqd,bkd->bqk"}> : () -> ()
    %cst_52 = arith.constant dense<0.000000e+00> : vector<2x8x8xf32>
    %97 = tpu.matmul %92, %94, %cst_52 {dimension_numbers = #tpu.dot_dimension_numbers<[2], [2], [1], [1], [0, 0, 0, 1, 1, 1], [0], [0]>} : vector<2x8x64xbf16>, vector<2x8x64xbf16>, vector<2x8x8xf32> -> vector<2x8x8xf32>
    "tpu.trace_stop"() : () -> ()
    %cst_53 = arith.constant 1.250000e-01 : f32
    %98 = vector.broadcast %cst_53 : f32 to vector<2x8x8xf32>
    %99 = arith.mulf %97, %98 : vector<2x8x8xf32>
    %100 = vector.broadcast %30 : vector<2x1x8xf32> to vector<2x8x8xf32>
    %101 = arith.addf %99, %100 : vector<2x8x8xf32>
    %cst_54 = arith.constant dense<0xFF800000> : vector<2x8xf32>
    %102 = vector.multi_reduction <maximumf>, %101, %cst_54 [2] : vector<2x8x8xf32> to vector<2x8xf32>
    %103 = vector.shape_cast %102 : vector<2x8xf32> to vector<2x8x1xf32>
    %104 = vector.broadcast %103 : vector<2x8x1xf32> to vector<2x8x8xf32>
    %105 = arith.subf %101, %104 : vector<2x8x8xf32>
    %106 = math.exp %105 : vector<2x8x8xf32>
    %cst_55 = arith.constant dense<0.000000e+00> : vector<2x8xf32>
    %107 = vector.multi_reduction <add>, %106, %cst_55 [2] : vector<2x8x8xf32> to vector<2x8xf32>
    %108 = vector.shape_cast %107 : vector<2x8xf32> to vector<2x8x1xf32>
    %109 = tpu.reciprocal %108 {approx = true} : vector<2x8x1xf32> -> vector<2x8x1xf32>
    %110 = vector.broadcast %109 : vector<2x8x1xf32> to vector<2x8x8xf32>
    %111 = arith.mulf %106, %110 : vector<2x8x8xf32>
    %112 = arith.truncf %111 : vector<2x8x8xf32> to vector<2x8x8xbf16>
    "tpu.trace_start"() <{level = 10 : i32, message = "bqk,bkd->bqd"}> : () -> ()
    %cst_56 = arith.constant dense<0.000000e+00> : vector<2x8x64xf32>
    %113 = tpu.matmul %112, %96, %cst_56 {dimension_numbers = #tpu.dot_dimension_numbers<[2], [1], [1], [2], [0, 0, 0, 1, 1, 2], [0], [0]>} : vector<2x8x8xbf16>, vector<2x8x64xbf16>, vector<2x8x64xf32> -> vector<2x8x64xf32>
    "tpu.trace_stop"() : () -> ()
    %114 = vector.shape_cast %113 : vector<2x8x64xf32> to vector<16x64xf32>
    %115 = arith.truncf %114 : vector<16x64xf32> to vector<16x64xbf16>
    %116 = vector.extract_strided_slice %38 {offsets = [64, 0], sizes = [64, 128], strides = [1, 1]} : vector<128x128xbf16> to vector<64x128xbf16>
    %cst_57 = arith.constant dense<0.000000e+00> : vector<16x128xf32>
    %117 = tpu.matmul %115, %116, %cst_57 {dimension_numbers = #tpu.dot_dimension_numbers<[1], [0], [0], [1], [0, 0, 1, 1], [], []>} : vector<16x64xbf16>, vector<64x128xbf16>, vector<16x128xf32> -> vector<16x128xf32>
    %118 = arith.addf %90, %117 : vector<16x128xf32>
    %c0_58 = arith.constant 0 : index
    %c0_59 = arith.constant 0 : index
    %c0_60 = arith.constant 0 : index
    %119 = vector.load %arg12[%c0_58, %c0_59, %c0_60] : memref<2x1x128xf32, #tpu.memory_space<vmem>>, vector<1x1x128xf32>
    %120 = vector.shape_cast %119 : vector<1x1x128xf32> to vector<1x128xf32>
    %121 = vector.broadcast %120 : vector<1x128xf32> to vector<16x128xf32>
    %122 = arith.addf %118, %121 : vector<16x128xf32>
    %123 = arith.addf %25, %122 : vector<16x128xf32>
    %c0_61 = arith.constant 0 : index
    %c0_62 = arith.constant 0 : index
    %c0_63 = arith.constant 0 : index
    %124 = vector.load %arg13[%c0_61, %c0_62, %c0_63] : memref<2x1x128xf32, #tpu.memory_space<vmem>>, vector<1x1x128xf32>
    %125 = vector.shape_cast %124 : vector<1x1x128xf32> to vector<1x128xf32>
    %c0_64 = arith.constant 0 : index
    %c0_65 = arith.constant 0 : index
    %c0_66 = arith.constant 0 : index
    %126 = vector.load %arg14[%c0_64, %c0_65, %c0_66] : memref<2x1x128xf32, #tpu.memory_space<vmem>>, vector<1x1x128xf32>
    %127 = vector.shape_cast %126 : vector<1x1x128xf32> to vector<1x128xf32>
    %cst_67 = arith.constant dense<0.000000e+00> : vector<16xf32>
    %128 = vector.multi_reduction <add>, %123, %cst_67 [1] : vector<16x128xf32> to vector<16xf32>
    %129 = vector.shape_cast %128 : vector<16xf32> to vector<16x1xf32>
    %cst_68 = arith.constant 1.280000e+02 : f32
    %130 = vector.broadcast %cst_68 : f32 to vector<16x1xf32>
    %131 = arith.divf %129, %130 : vector<16x1xf32>
    %132 = vector.broadcast %131 : vector<16x1xf32> to vector<16x128xf32>
    %133 = arith.subf %123, %132 : vector<16x128xf32>
    %134 = arith.mulf %133, %133 : vector<16x128xf32>
    %cst_69 = arith.constant dense<0.000000e+00> : vector<16xf32>
    %135 = vector.multi_reduction <add>, %134, %cst_69 [1] : vector<16x128xf32> to vector<16xf32>
    %136 = vector.shape_cast %135 : vector<16xf32> to vector<16x1xf32>
    %cst_70 = arith.constant 1.280000e+02 : f32
    %137 = vector.broadcast %cst_70 : f32 to vector<16x1xf32>
    %138 = arith.divf %136, %137 : vector<16x1xf32>
    %139 = vector.broadcast %131 : vector<16x1xf32> to vector<16x128xf32>
    %140 = arith.subf %123, %139 : vector<16x128xf32>
    %cst_71 = arith.constant 9.99999996E-13 : f32
    %141 = vector.broadcast %cst_71 : f32 to vector<16x1xf32>
    %142 = arith.addf %138, %141 : vector<16x1xf32>
    %143 = math.rsqrt %142 : vector<16x1xf32>
    %144 = vector.broadcast %143 : vector<16x1xf32> to vector<16x128xf32>
    %145 = arith.mulf %140, %144 : vector<16x128xf32>
    %146 = vector.broadcast %125 : vector<1x128xf32> to vector<16x128xf32>
    %147 = arith.mulf %145, %146 : vector<16x128xf32>
    %148 = vector.broadcast %127 : vector<1x128xf32> to vector<16x128xf32>
    %149 = arith.addf %147, %148 : vector<16x128xf32>
    %150 = arith.truncf %149 : vector<16x128xf32> to vector<16x128xbf16>
    %cst_72 = arith.constant dense<0.000000e+00> : vector<16x256xf32>
    %151 = tpu.matmul %150, %40, %cst_72 {dimension_numbers = #tpu.dot_dimension_numbers<[1], [0], [0], [1], [0, 0, 1, 1], [], []>} : vector<16x128xbf16>, vector<128x256xbf16>, vector<16x256xf32> -> vector<16x256xf32>
    %c0_73 = arith.constant 0 : index
    %c0_74 = arith.constant 0 : index
    %c0_75 = arith.constant 0 : index
    %152 = vector.load %arg16[%c0_73, %c0_74, %c0_75] : memref<2x1x256xf32, #tpu.memory_space<vmem>>, vector<1x1x256xf32>
    %153 = vector.shape_cast %152 : vector<1x1x256xf32> to vector<1x256xf32>
    %154 = vector.broadcast %153 : vector<1x256xf32> to vector<16x256xf32>
    %155 = arith.addf %151, %154 : vector<16x256xf32>
    %cst_76 = arith.constant 5.000000e-01 : f32
    %156 = vector.broadcast %cst_76 : f32 to vector<16x256xf32>
    %157 = arith.mulf %156, %155 : vector<16x256xf32>
    %cst_77 = arith.constant 4.471500e-02 : f32
    %158 = vector.broadcast %cst_77 : f32 to vector<16x256xf32>
    %159 = arith.mulf %158, %155 : vector<16x256xf32>
    %160 = arith.mulf %159, %155 : vector<16x256xf32>
    %161 = arith.mulf %160, %155 : vector<16x256xf32>
    %162 = arith.addf %155, %161 : vector<16x256xf32>
    %cst_78 = arith.constant 0.797884583 : f32
    %163 = vector.broadcast %cst_78 : f32 to vector<16x256xf32>
    %164 = arith.mulf %163, %162 : vector<16x256xf32>
    %165 = math.tanh %164 : vector<16x256xf32>
    %cst_79 = arith.constant 1.000000e+00 : f32
    %166 = vector.broadcast %cst_79 : f32 to vector<16x256xf32>
    %167 = arith.addf %166, %165 : vector<16x256xf32>
    %168 = arith.mulf %157, %167 : vector<16x256xf32>
    %169 = arith.truncf %168 : vector<16x256xf32> to vector<16x256xbf16>
    %cst_80 = arith.constant dense<0.000000e+00> : vector<16x128xf32>
    %170 = tpu.matmul %169, %42, %cst_80 {dimension_numbers = #tpu.dot_dimension_numbers<[1], [0], [0], [1], [0, 0, 1, 1], [], []>} : vector<16x256xbf16>, vector<256x128xbf16>, vector<16x128xf32> -> vector<16x128xf32>
    %c0_81 = arith.constant 0 : index
    %c0_82 = arith.constant 0 : index
    %c0_83 = arith.constant 0 : index
    %171 = vector.load %arg18[%c0_81, %c0_82, %c0_83] : memref<2x1x128xf32, #tpu.memory_space<vmem>>, vector<1x1x128xf32>
    %172 = vector.shape_cast %171 : vector<1x1x128xf32> to vector<1x128xf32>
    %173 = vector.broadcast %172 : vector<1x128xf32> to vector<16x128xf32>
    %174 = arith.addf %170, %173 : vector<16x128xf32>
    %175 = arith.addf %149, %174 : vector<16x128xf32>
    %c0_84 = arith.constant 0 : index
    %c0_85 = arith.constant 0 : index
    %c0_86 = arith.constant 0 : index
    %176 = vector.load %arg19[%c0_84, %c0_85, %c0_86] : memref<2x1x128xf32, #tpu.memory_space<vmem>>, vector<1x1x128xf32>
    %177 = vector.shape_cast %176 : vector<1x1x128xf32> to vector<1x128xf32>
    %c0_87 = arith.constant 0 : index
    %c0_88 = arith.constant 0 : index
    %c0_89 = arith.constant 0 : index
    %178 = vector.load %arg20[%c0_87, %c0_88, %c0_89] : memref<2x1x128xf32, #tpu.memory_space<vmem>>, vector<1x1x128xf32>
    %179 = vector.shape_cast %178 : vector<1x1x128xf32> to vector<1x128xf32>
    %cst_90 = arith.constant dense<0.000000e+00> : vector<16xf32>
    %180 = vector.multi_reduction <add>, %175, %cst_90 [1] : vector<16x128xf32> to vector<16xf32>
    %181 = vector.shape_cast %180 : vector<16xf32> to vector<16x1xf32>
    %cst_91 = arith.constant 1.280000e+02 : f32
    %182 = vector.broadcast %cst_91 : f32 to vector<16x1xf32>
    %183 = arith.divf %181, %182 : vector<16x1xf32>
    %184 = vector.broadcast %183 : vector<16x1xf32> to vector<16x128xf32>
    %185 = arith.subf %175, %184 : vector<16x128xf32>
    %186 = arith.mulf %185, %185 : vector<16x128xf32>
    %cst_92 = arith.constant dense<0.000000e+00> : vector<16xf32>
    %187 = vector.multi_reduction <add>, %186, %cst_92 [1] : vector<16x128xf32> to vector<16xf32>
    %188 = vector.shape_cast %187 : vector<16xf32> to vector<16x1xf32>
    %cst_93 = arith.constant 1.280000e+02 : f32
    %189 = vector.broadcast %cst_93 : f32 to vector<16x1xf32>
    %190 = arith.divf %188, %189 : vector<16x1xf32>
    %191 = vector.broadcast %183 : vector<16x1xf32> to vector<16x128xf32>
    %192 = arith.subf %175, %191 : vector<16x128xf32>
    %cst_94 = arith.constant 9.99999996E-13 : f32
    %193 = vector.broadcast %cst_94 : f32 to vector<16x1xf32>
    %194 = arith.addf %190, %193 : vector<16x1xf32>
    %195 = math.rsqrt %194 : vector<16x1xf32>
    %196 = vector.broadcast %195 : vector<16x1xf32> to vector<16x128xf32>
    %197 = arith.mulf %192, %196 : vector<16x128xf32>
    %198 = vector.broadcast %177 : vector<1x128xf32> to vector<16x128xf32>
    %199 = arith.mulf %197, %198 : vector<16x128xf32>
    %200 = vector.broadcast %179 : vector<1x128xf32> to vector<16x128xf32>
    %201 = arith.addf %199, %200 : vector<16x128xf32>
    %c1 = arith.constant 1 : index
    %c0_95 = arith.constant 0 : index
    %c0_96 = arith.constant 0 : index
    %202 = vector.load %arg5[%c1, %c0_95, %c0_96] : memref<2x128x128xbf16, #tpu.memory_space<vmem>>, vector<1x128x128xbf16>
    %203 = vector.shape_cast %202 : vector<1x128x128xbf16> to vector<128x128xbf16>
    %c1_97 = arith.constant 1 : index
    %c0_98 = arith.constant 0 : index
    %c0_99 = arith.constant 0 : index
    %204 = vector.load %arg7[%c1_97, %c0_98, %c0_99] : memref<2x128x128xbf16, #tpu.memory_space<vmem>>, vector<1x128x128xbf16>
    %205 = vector.shape_cast %204 : vector<1x128x128xbf16> to vector<128x128xbf16>
    %c1_100 = arith.constant 1 : index
    %c0_101 = arith.constant 0 : index
    %c0_102 = arith.constant 0 : index
    %206 = vector.load %arg9[%c1_100, %c0_101, %c0_102] : memref<2x128x128xbf16, #tpu.memory_space<vmem>>, vector<1x128x128xbf16>
    %207 = vector.shape_cast %206 : vector<1x128x128xbf16> to vector<128x128xbf16>
    %c1_103 = arith.constant 1 : index
    %c0_104 = arith.constant 0 : index
    %c0_105 = arith.constant 0 : index
    %208 = vector.load %arg11[%c1_103, %c0_104, %c0_105] : memref<2x128x128xbf16, #tpu.memory_space<vmem>>, vector<1x128x128xbf16>
    %209 = vector.shape_cast %208 : vector<1x128x128xbf16> to vector<128x128xbf16>
    %c1_106 = arith.constant 1 : index
    %c0_107 = arith.constant 0 : index
    %c0_108 = arith.constant 0 : index
    %210 = vector.load %arg15[%c1_106, %c0_107, %c0_108] : memref<2x128x256xbf16, #tpu.memory_space<vmem>>, vector<1x128x256xbf16>
    %211 = vector.shape_cast %210 : vector<1x128x256xbf16> to vector<128x256xbf16>
    %c1_109 = arith.constant 1 : index
    %c0_110 = arith.constant 0 : index
    %c0_111 = arith.constant 0 : index
    %212 = vector.load %arg17[%c1_109, %c0_110, %c0_111] : memref<2x256x128xbf16, #tpu.memory_space<vmem>>, vector<1x256x128xbf16>
    %213 = vector.shape_cast %212 : vector<1x256x128xbf16> to vector<256x128xbf16>
    %214 = arith.truncf %201 : vector<16x128xf32> to vector<16x128xbf16>
    %cst_112 = arith.constant dense<0.000000e+00> : vector<16x128xf32>
    %215 = tpu.matmul %214, %203, %cst_112 {dimension_numbers = #tpu.dot_dimension_numbers<[1], [0], [0], [1], [0, 0, 1, 1], [], []>} : vector<16x128xbf16>, vector<128x128xbf16>, vector<16x128xf32> -> vector<16x128xf32>
    %c1_113 = arith.constant 1 : index
    %c0_114 = arith.constant 0 : index
    %c0_115 = arith.constant 0 : index
    %216 = vector.load %arg6[%c1_113, %c0_114, %c0_115] : memref<2x1x128xf32, #tpu.memory_space<vmem>>, vector<1x1x128xf32>
    %217 = vector.shape_cast %216 : vector<1x1x128xf32> to vector<1x128xf32>
    %218 = vector.broadcast %217 : vector<1x128xf32> to vector<16x128xf32>
    %219 = arith.addf %215, %218 : vector<16x128xf32>
    %cst_116 = arith.constant dense<0.000000e+00> : vector<16x128xf32>
    %220 = tpu.matmul %214, %205, %cst_116 {dimension_numbers = #tpu.dot_dimension_numbers<[1], [0], [0], [1], [0, 0, 1, 1], [], []>} : vector<16x128xbf16>, vector<128x128xbf16>, vector<16x128xf32> -> vector<16x128xf32>
    %c1_117 = arith.constant 1 : index
    %c0_118 = arith.constant 0 : index
    %c0_119 = arith.constant 0 : index
    %221 = vector.load %arg8[%c1_117, %c0_118, %c0_119] : memref<2x1x128xf32, #tpu.memory_space<vmem>>, vector<1x1x128xf32>
    %222 = vector.shape_cast %221 : vector<1x1x128xf32> to vector<1x128xf32>
    %223 = vector.broadcast %222 : vector<1x128xf32> to vector<16x128xf32>
    %224 = arith.addf %220, %223 : vector<16x128xf32>
    %cst_120 = arith.constant dense<0.000000e+00> : vector<16x128xf32>
    %225 = tpu.matmul %214, %207, %cst_120 {dimension_numbers = #tpu.dot_dimension_numbers<[1], [0], [0], [1], [0, 0, 1, 1], [], []>} : vector<16x128xbf16>, vector<128x128xbf16>, vector<16x128xf32> -> vector<16x128xf32>
    %c1_121 = arith.constant 1 : index
    %c0_122 = arith.constant 0 : index
    %c0_123 = arith.constant 0 : index
    %226 = vector.load %arg10[%c1_121, %c0_122, %c0_123] : memref<2x1x128xf32, #tpu.memory_space<vmem>>, vector<1x1x128xf32>
    %227 = vector.shape_cast %226 : vector<1x1x128xf32> to vector<1x128xf32>
    %228 = vector.broadcast %227 : vector<1x128xf32> to vector<16x128xf32>
    %229 = arith.addf %225, %228 : vector<16x128xf32>
    %230 = vector.shape_cast %219 : vector<16x128xf32> to vector<2x8x128xf32>
    %231 = vector.shape_cast %224 : vector<16x128xf32> to vector<2x8x128xf32>
    %232 = vector.shape_cast %229 : vector<16x128xf32> to vector<2x8x128xf32>
    %cst_124 = arith.constant 0.000000e+00 : f32
    %233 = vector.broadcast %cst_124 : f32 to vector<16x128xf32>
    %234 = vector.extract_strided_slice %230 {offsets = [0, 0, 0], sizes = [2, 8, 64], strides = [1, 1, 1]} : vector<2x8x128xf32> to vector<2x8x64xf32>
    %235 = arith.truncf %234 : vector<2x8x64xf32> to vector<2x8x64xbf16>
    %236 = vector.extract_strided_slice %231 {offsets = [0, 0, 0], sizes = [2, 8, 64], strides = [1, 1, 1]} : vector<2x8x128xf32> to vector<2x8x64xf32>
    %237 = arith.truncf %236 : vector<2x8x64xf32> to vector<2x8x64xbf16>
    %238 = vector.extract_strided_slice %232 {offsets = [0, 0, 0], sizes = [2, 8, 64], strides = [1, 1, 1]} : vector<2x8x128xf32> to vector<2x8x64xf32>
    %239 = arith.truncf %238 : vector<2x8x64xf32> to vector<2x8x64xbf16>
    "tpu.trace_start"() <{level = 10 : i32, message = "bqd,bkd->bqk"}> : () -> ()
    %cst_125 = arith.constant dense<0.000000e+00> : vector<2x8x8xf32>
    %240 = tpu.matmul %235, %237, %cst_125 {dimension_numbers = #tpu.dot_dimension_numbers<[2], [2], [1], [1], [0, 0, 0, 1, 1, 1], [0], [0]>} : vector<2x8x64xbf16>, vector<2x8x64xbf16>, vector<2x8x8xf32> -> vector<2x8x8xf32>
    "tpu.trace_stop"() : () -> ()
    %cst_126 = arith.constant 1.250000e-01 : f32
    %241 = vector.broadcast %cst_126 : f32 to vector<2x8x8xf32>
    %242 = arith.mulf %240, %241 : vector<2x8x8xf32>
    %243 = vector.broadcast %30 : vector<2x1x8xf32> to vector<2x8x8xf32>
    %244 = arith.addf %242, %243 : vector<2x8x8xf32>
    %cst_127 = arith.constant dense<0xFF800000> : vector<2x8xf32>
    %245 = vector.multi_reduction <maximumf>, %244, %cst_127 [2] : vector<2x8x8xf32> to vector<2x8xf32>
    %246 = vector.shape_cast %245 : vector<2x8xf32> to vector<2x8x1xf32>
    %247 = vector.broadcast %246 : vector<2x8x1xf32> to vector<2x8x8xf32>
    %248 = arith.subf %244, %247 : vector<2x8x8xf32>
    %249 = math.exp %248 : vector<2x8x8xf32>
    %cst_128 = arith.constant dense<0.000000e+00> : vector<2x8xf32>
    %250 = vector.multi_reduction <add>, %249, %cst_128 [2] : vector<2x8x8xf32> to vector<2x8xf32>
    %251 = vector.shape_cast %250 : vector<2x8xf32> to vector<2x8x1xf32>
    %252 = tpu.reciprocal %251 {approx = true} : vector<2x8x1xf32> -> vector<2x8x1xf32>
    %253 = vector.broadcast %252 : vector<2x8x1xf32> to vector<2x8x8xf32>
    %254 = arith.mulf %249, %253 : vector<2x8x8xf32>
    %255 = arith.truncf %254 : vector<2x8x8xf32> to vector<2x8x8xbf16>
    "tpu.trace_start"() <{level = 10 : i32, message = "bqk,bkd->bqd"}> : () -> ()
    %cst_129 = arith.constant dense<0.000000e+00> : vector<2x8x64xf32>
    %256 = tpu.matmul %255, %239, %cst_129 {dimension_numbers = #tpu.dot_dimension_numbers<[2], [1], [1], [2], [0, 0, 0, 1, 1, 2], [0], [0]>} : vector<2x8x8xbf16>, vector<2x8x64xbf16>, vector<2x8x64xf32> -> vector<2x8x64xf32>
    "tpu.trace_stop"() : () -> ()
    %257 = vector.shape_cast %256 : vector<2x8x64xf32> to vector<16x64xf32>
    %258 = arith.truncf %257 : vector<16x64xf32> to vector<16x64xbf16>
    %259 = vector.extract_strided_slice %209 {offsets = [0, 0], sizes = [64, 128], strides = [1, 1]} : vector<128x128xbf16> to vector<64x128xbf16>
    %cst_130 = arith.constant dense<0.000000e+00> : vector<16x128xf32>
    %260 = tpu.matmul %258, %259, %cst_130 {dimension_numbers = #tpu.dot_dimension_numbers<[1], [0], [0], [1], [0, 0, 1, 1], [], []>} : vector<16x64xbf16>, vector<64x128xbf16>, vector<16x128xf32> -> vector<16x128xf32>
    %261 = arith.addf %233, %260 : vector<16x128xf32>
    %262 = vector.extract_strided_slice %230 {offsets = [0, 0, 64], sizes = [2, 8, 64], strides = [1, 1, 1]} : vector<2x8x128xf32> to vector<2x8x64xf32>
    %263 = arith.truncf %262 : vector<2x8x64xf32> to vector<2x8x64xbf16>
    %264 = vector.extract_strided_slice %231 {offsets = [0, 0, 64], sizes = [2, 8, 64], strides = [1, 1, 1]} : vector<2x8x128xf32> to vector<2x8x64xf32>
    %265 = arith.truncf %264 : vector<2x8x64xf32> to vector<2x8x64xbf16>
    %266 = vector.extract_strided_slice %232 {offsets = [0, 0, 64], sizes = [2, 8, 64], strides = [1, 1, 1]} : vector<2x8x128xf32> to vector<2x8x64xf32>
    %267 = arith.truncf %266 : vector<2x8x64xf32> to vector<2x8x64xbf16>
    "tpu.trace_start"() <{level = 10 : i32, message = "bqd,bkd->bqk"}> : () -> ()
    %cst_131 = arith.constant dense<0.000000e+00> : vector<2x8x8xf32>
    %268 = tpu.matmul %263, %265, %cst_131 {dimension_numbers = #tpu.dot_dimension_numbers<[2], [2], [1], [1], [0, 0, 0, 1, 1, 1], [0], [0]>} : vector<2x8x64xbf16>, vector<2x8x64xbf16>, vector<2x8x8xf32> -> vector<2x8x8xf32>
    "tpu.trace_stop"() : () -> ()
    %cst_132 = arith.constant 1.250000e-01 : f32
    %269 = vector.broadcast %cst_132 : f32 to vector<2x8x8xf32>
    %270 = arith.mulf %268, %269 : vector<2x8x8xf32>
    %271 = vector.broadcast %30 : vector<2x1x8xf32> to vector<2x8x8xf32>
    %272 = arith.addf %270, %271 : vector<2x8x8xf32>
    %cst_133 = arith.constant dense<0xFF800000> : vector<2x8xf32>
    %273 = vector.multi_reduction <maximumf>, %272, %cst_133 [2] : vector<2x8x8xf32> to vector<2x8xf32>
    %274 = vector.shape_cast %273 : vector<2x8xf32> to vector<2x8x1xf32>
    %275 = vector.broadcast %274 : vector<2x8x1xf32> to vector<2x8x8xf32>
    %276 = arith.subf %272, %275 : vector<2x8x8xf32>
    %277 = math.exp %276 : vector<2x8x8xf32>
    %cst_134 = arith.constant dense<0.000000e+00> : vector<2x8xf32>
    %278 = vector.multi_reduction <add>, %277, %cst_134 [2] : vector<2x8x8xf32> to vector<2x8xf32>
    %279 = vector.shape_cast %278 : vector<2x8xf32> to vector<2x8x1xf32>
    %280 = tpu.reciprocal %279 {approx = true} : vector<2x8x1xf32> -> vector<2x8x1xf32>
    %281 = vector.broadcast %280 : vector<2x8x1xf32> to vector<2x8x8xf32>
    %282 = arith.mulf %277, %281 : vector<2x8x8xf32>
    %283 = arith.truncf %282 : vector<2x8x8xf32> to vector<2x8x8xbf16>
    "tpu.trace_start"() <{level = 10 : i32, message = "bqk,bkd->bqd"}> : () -> ()
    %cst_135 = arith.constant dense<0.000000e+00> : vector<2x8x64xf32>
    %284 = tpu.matmul %283, %267, %cst_135 {dimension_numbers = #tpu.dot_dimension_numbers<[2], [1], [1], [2], [0, 0, 0, 1, 1, 2], [0], [0]>} : vector<2x8x8xbf16>, vector<2x8x64xbf16>, vector<2x8x64xf32> -> vector<2x8x64xf32>
    "tpu.trace_stop"() : () -> ()
    %285 = vector.shape_cast %284 : vector<2x8x64xf32> to vector<16x64xf32>
    %286 = arith.truncf %285 : vector<16x64xf32> to vector<16x64xbf16>
    %287 = vector.extract_strided_slice %209 {offsets = [64, 0], sizes = [64, 128], strides = [1, 1]} : vector<128x128xbf16> to vector<64x128xbf16>
    %cst_136 = arith.constant dense<0.000000e+00> : vector<16x128xf32>
    %288 = tpu.matmul %286, %287, %cst_136 {dimension_numbers = #tpu.dot_dimension_numbers<[1], [0], [0], [1], [0, 0, 1, 1], [], []>} : vector<16x64xbf16>, vector<64x128xbf16>, vector<16x128xf32> -> vector<16x128xf32>
    %289 = arith.addf %261, %288 : vector<16x128xf32>
    %c1_137 = arith.constant 1 : index
    %c0_138 = arith.constant 0 : index
    %c0_139 = arith.constant 0 : index
    %290 = vector.load %arg12[%c1_137, %c0_138, %c0_139] : memref<2x1x128xf32, #tpu.memory_space<vmem>>, vector<1x1x128xf32>
    %291 = vector.shape_cast %290 : vector<1x1x128xf32> to vector<1x128xf32>
    %292 = vector.broadcast %291 : vector<1x128xf32> to vector<16x128xf32>
    %293 = arith.addf %289, %292 : vector<16x128xf32>
    %294 = arith.addf %201, %293 : vector<16x128xf32>
    %c1_140 = arith.constant 1 : index
    %c0_141 = arith.constant 0 : index
    %c0_142 = arith.constant 0 : index
    %295 = vector.load %arg13[%c1_140, %c0_141, %c0_142] : memref<2x1x128xf32, #tpu.memory_space<vmem>>, vector<1x1x128xf32>
    %296 = vector.shape_cast %295 : vector<1x1x128xf32> to vector<1x128xf32>
    %c1_143 = arith.constant 1 : index
    %c0_144 = arith.constant 0 : index
    %c0_145 = arith.constant 0 : index
    %297 = vector.load %arg14[%c1_143, %c0_144, %c0_145] : memref<2x1x128xf32, #tpu.memory_space<vmem>>, vector<1x1x128xf32>
    %298 = vector.shape_cast %297 : vector<1x1x128xf32> to vector<1x128xf32>
    %cst_146 = arith.constant dense<0.000000e+00> : vector<16xf32>
    %299 = vector.multi_reduction <add>, %294, %cst_146 [1] : vector<16x128xf32> to vector<16xf32>
    %300 = vector.shape_cast %299 : vector<16xf32> to vector<16x1xf32>
    %cst_147 = arith.constant 1.280000e+02 : f32
    %301 = vector.broadcast %cst_147 : f32 to vector<16x1xf32>
    %302 = arith.divf %300, %301 : vector<16x1xf32>
    %303 = vector.broadcast %302 : vector<16x1xf32> to vector<16x128xf32>
    %304 = arith.subf %294, %303 : vector<16x128xf32>
    %305 = arith.mulf %304, %304 : vector<16x128xf32>
    %cst_148 = arith.constant dense<0.000000e+00> : vector<16xf32>
    %306 = vector.multi_reduction <add>, %305, %cst_148 [1] : vector<16x128xf32> to vector<16xf32>
    %307 = vector.shape_cast %306 : vector<16xf32> to vector<16x1xf32>
    %cst_149 = arith.constant 1.280000e+02 : f32
    %308 = vector.broadcast %cst_149 : f32 to vector<16x1xf32>
    %309 = arith.divf %307, %308 : vector<16x1xf32>
    %310 = vector.broadcast %302 : vector<16x1xf32> to vector<16x128xf32>
    %311 = arith.subf %294, %310 : vector<16x128xf32>
    %cst_150 = arith.constant 9.99999996E-13 : f32
    %312 = vector.broadcast %cst_150 : f32 to vector<16x1xf32>
    %313 = arith.addf %309, %312 : vector<16x1xf32>
    %314 = math.rsqrt %313 : vector<16x1xf32>
    %315 = vector.broadcast %314 : vector<16x1xf32> to vector<16x128xf32>
    %316 = arith.mulf %311, %315 : vector<16x128xf32>
    %317 = vector.broadcast %296 : vector<1x128xf32> to vector<16x128xf32>
    %318 = arith.mulf %316, %317 : vector<16x128xf32>
    %319 = vector.broadcast %298 : vector<1x128xf32> to vector<16x128xf32>
    %320 = arith.addf %318, %319 : vector<16x128xf32>
    %321 = arith.truncf %320 : vector<16x128xf32> to vector<16x128xbf16>
    %cst_151 = arith.constant dense<0.000000e+00> : vector<16x256xf32>
    %322 = tpu.matmul %321, %211, %cst_151 {dimension_numbers = #tpu.dot_dimension_numbers<[1], [0], [0], [1], [0, 0, 1, 1], [], []>} : vector<16x128xbf16>, vector<128x256xbf16>, vector<16x256xf32> -> vector<16x256xf32>
    %c1_152 = arith.constant 1 : index
    %c0_153 = arith.constant 0 : index
    %c0_154 = arith.constant 0 : index
    %323 = vector.load %arg16[%c1_152, %c0_153, %c0_154] : memref<2x1x256xf32, #tpu.memory_space<vmem>>, vector<1x1x256xf32>
    %324 = vector.shape_cast %323 : vector<1x1x256xf32> to vector<1x256xf32>
    %325 = vector.broadcast %324 : vector<1x256xf32> to vector<16x256xf32>
    %326 = arith.addf %322, %325 : vector<16x256xf32>
    %cst_155 = arith.constant 5.000000e-01 : f32
    %327 = vector.broadcast %cst_155 : f32 to vector<16x256xf32>
    %328 = arith.mulf %327, %326 : vector<16x256xf32>
    %cst_156 = arith.constant 4.471500e-02 : f32
    %329 = vector.broadcast %cst_156 : f32 to vector<16x256xf32>
    %330 = arith.mulf %329, %326 : vector<16x256xf32>
    %331 = arith.mulf %330, %326 : vector<16x256xf32>
    %332 = arith.mulf %331, %326 : vector<16x256xf32>
    %333 = arith.addf %326, %332 : vector<16x256xf32>
    %cst_157 = arith.constant 0.797884583 : f32
    %334 = vector.broadcast %cst_157 : f32 to vector<16x256xf32>
    %335 = arith.mulf %334, %333 : vector<16x256xf32>
    %336 = math.tanh %335 : vector<16x256xf32>
    %cst_158 = arith.constant 1.000000e+00 : f32
    %337 = vector.broadcast %cst_158 : f32 to vector<16x256xf32>
    %338 = arith.addf %337, %336 : vector<16x256xf32>
    %339 = arith.mulf %328, %338 : vector<16x256xf32>
    %340 = arith.truncf %339 : vector<16x256xf32> to vector<16x256xbf16>
    %cst_159 = arith.constant dense<0.000000e+00> : vector<16x128xf32>
    %341 = tpu.matmul %340, %213, %cst_159 {dimension_numbers = #tpu.dot_dimension_numbers<[1], [0], [0], [1], [0, 0, 1, 1], [], []>} : vector<16x256xbf16>, vector<256x128xbf16>, vector<16x128xf32> -> vector<16x128xf32>
    %c1_160 = arith.constant 1 : index
    %c0_161 = arith.constant 0 : index
    %c0_162 = arith.constant 0 : index
    %342 = vector.load %arg18[%c1_160, %c0_161, %c0_162] : memref<2x1x128xf32, #tpu.memory_space<vmem>>, vector<1x1x128xf32>
    %343 = vector.shape_cast %342 : vector<1x1x128xf32> to vector<1x128xf32>
    %344 = vector.broadcast %343 : vector<1x128xf32> to vector<16x128xf32>
    %345 = arith.addf %341, %344 : vector<16x128xf32>
    %346 = arith.addf %320, %345 : vector<16x128xf32>
    %c1_163 = arith.constant 1 : index
    %c0_164 = arith.constant 0 : index
    %c0_165 = arith.constant 0 : index
    %347 = vector.load %arg19[%c1_163, %c0_164, %c0_165] : memref<2x1x128xf32, #tpu.memory_space<vmem>>, vector<1x1x128xf32>
    %348 = vector.shape_cast %347 : vector<1x1x128xf32> to vector<1x128xf32>
    %c1_166 = arith.constant 1 : index
    %c0_167 = arith.constant 0 : index
    %c0_168 = arith.constant 0 : index
    %349 = vector.load %arg20[%c1_166, %c0_167, %c0_168] : memref<2x1x128xf32, #tpu.memory_space<vmem>>, vector<1x1x128xf32>
    %350 = vector.shape_cast %349 : vector<1x1x128xf32> to vector<1x128xf32>
    %cst_169 = arith.constant dense<0.000000e+00> : vector<16xf32>
    %351 = vector.multi_reduction <add>, %346, %cst_169 [1] : vector<16x128xf32> to vector<16xf32>
    %352 = vector.shape_cast %351 : vector<16xf32> to vector<16x1xf32>
    %cst_170 = arith.constant 1.280000e+02 : f32
    %353 = vector.broadcast %cst_170 : f32 to vector<16x1xf32>
    %354 = arith.divf %352, %353 : vector<16x1xf32>
    %355 = vector.broadcast %354 : vector<16x1xf32> to vector<16x128xf32>
    %356 = arith.subf %346, %355 : vector<16x128xf32>
    %357 = arith.mulf %356, %356 : vector<16x128xf32>
    %cst_171 = arith.constant dense<0.000000e+00> : vector<16xf32>
    %358 = vector.multi_reduction <add>, %357, %cst_171 [1] : vector<16x128xf32> to vector<16xf32>
    %359 = vector.shape_cast %358 : vector<16xf32> to vector<16x1xf32>
    %cst_172 = arith.constant 1.280000e+02 : f32
    %360 = vector.broadcast %cst_172 : f32 to vector<16x1xf32>
    %361 = arith.divf %359, %360 : vector<16x1xf32>
    %362 = vector.broadcast %354 : vector<16x1xf32> to vector<16x128xf32>
    %363 = arith.subf %346, %362 : vector<16x128xf32>
    %cst_173 = arith.constant 9.99999996E-13 : f32
    %364 = vector.broadcast %cst_173 : f32 to vector<16x1xf32>
    %365 = arith.addf %361, %364 : vector<16x1xf32>
    %366 = math.rsqrt %365 : vector<16x1xf32>
    %367 = vector.broadcast %366 : vector<16x1xf32> to vector<16x128xf32>
    %368 = arith.mulf %363, %367 : vector<16x128xf32>
    %369 = vector.broadcast %348 : vector<1x128xf32> to vector<16x128xf32>
    %370 = arith.mulf %368, %369 : vector<16x128xf32>
    %371 = vector.broadcast %350 : vector<1x128xf32> to vector<16x128xf32>
    %372 = arith.addf %370, %371 : vector<16x128xf32>
    %373 = vector.shape_cast %372 : vector<16x128xf32> to vector<2x8x128xf32>
    %c0_174 = arith.constant 0 : index
    %c0_175 = arith.constant 0 : index
    %c0_176 = arith.constant 0 : index
    %374 = vector.load %arg21[%c0_174, %c0_175, %c0_176] : memref<2x8x128xf32, #tpu.memory_space<vmem>>, vector<2x8x128xf32>
    tpu.vector_store %arg21[%c0_174, %c0_175, %c0_176], %373 {strides = array<i32>} : memref<2x8x128xf32, #tpu.memory_space<vmem>>, vector<2x8x128xf32>,
    return
  }
  func.func @transform_0(%arg0: i32) -> (i32, i32, i32) {
    %c0_i32 = arith.constant 0 : i32
    %c0_i32_0 = arith.constant 0 : i32
    %c0_i32_1 = arith.constant 0 : i32
    return %arg0, %c0_i32, %c0_i32_0 : i32, i32, i32
  }
  func.func @transform_1(%arg0: i32) -> (i32, i32, i32) {
    %c0_i32 = arith.constant 0 : i32
    %c0_i32_0 = arith.constant 0 : i32
    %c0_i32_1 = arith.constant 0 : i32
    return %arg0, %c0_i32, %c0_i32_0 : i32, i32, i32
  }
  func.func @transform_2(%arg0: i32) -> (i32, i32) {
    %c0_i32 = arith.constant 0 : i32
    %c0_i32_0 = arith.constant 0 : i32
    %c0_i32_1 = arith.constant 0 : i32
    return %c0_i32, %c0_i32_0 : i32, i32
  }
  func.func @transform_3(%arg0: i32) -> (i32, i32) {
    %c0_i32 = arith.constant 0 : i32
    %c0_i32_0 = arith.constant 0 : i32
    %c0_i32_1 = arith.constant 0 : i32
    return %c0_i32, %c0_i32_0 : i32, i32
  }
  func.func @transform_4(%arg0: i32) -> (i32, i32, i32) {
    %c0_i32 = arith.constant 0 : i32
    %c0_i32_0 = arith.constant 0 : i32
    %c0_i32_1 = arith.constant 0 : i32
    %c0_i32_2 = arith.constant 0 : i32
    return %c0_i32, %c0_i32_0, %c0_i32_1 : i32, i32, i32
  }
  func.func @transform_5(%arg0: i32) -> (i32, i32, i32) {
    %c0_i32 = arith.constant 0 : i32
    %c0_i32_0 = arith.constant 0 : i32
    %c0_i32_1 = arith.constant 0 : i32
    %c0_i32_2 = arith.constant 0 : i32
    return %c0_i32, %c0_i32_0, %c0_i32_1 : i32, i32, i32
  }
  func.func @transform_6(%arg0: i32) -> (i32, i32, i32) {
    %c0_i32 = arith.constant 0 : i32
    %c0_i32_0 = arith.constant 0 : i32
    %c0_i32_1 = arith.constant 0 : i32
    %c0_i32_2 = arith.constant 0 : i32
    return %c0_i32, %c0_i32_0, %c0_i32_1 : i32, i32, i32
  }
  func.func @transform_7(%arg0: i32) -> (i32, i32, i32) {
    %c0_i32 = arith.constant 0 : i32
    %c0_i32_0 = arith.constant 0 : i32
    %c0_i32_1 = arith.constant 0 : i32
    %c0_i32_2 = arith.constant 0 : i32
    return %c0_i32, %c0_i32_0, %c0_i32_1 : i32, i32, i32
  }
  func.func @transform_8(%arg0: i32) -> (i32, i32, i32) {
    %c0_i32 = arith.constant 0 : i32
    %c0_i32_0 = arith.constant 0 : i32
    %c0_i32_1 = arith.constant 0 : i32
    %c0_i32_2 = arith.constant 0 : i32
    return %c0_i32, %c0_i32_0, %c0_i32_1 : i32, i32, i32
  }
  func.func @transform_9(%arg0: i32) -> (i32, i32, i32) {
    %c0_i32 = arith.constant 0 : i32
    %c0_i32_0 = arith.constant 0 : i32
    %c0_i32_1 = arith.constant 0 : i32
    %c0_i32_2 = arith.constant 0 : i32
    return %c0_i32, %c0_i32_0, %c0_i32_1 : i32, i32, i32
  }
  func.func @transform_10(%arg0: i32) -> (i32, i32, i32) {
    %c0_i32 = arith.constant 0 : i32
    %c0_i32_0 = arith.constant 0 : i32
    %c0_i32_1 = arith.constant 0 : i32
    %c0_i32_2 = arith.constant 0 : i32
    return %c0_i32, %c0_i32_0, %c0_i32_1 : i32, i32, i32
  }
  func.func @transform_11(%arg0: i32) -> (i32, i32, i32) {
    %c0_i32 = arith.constant 0 : i32
    %c0_i32_0 = arith.constant 0 : i32
    %c0_i32_1 = arith.constant 0 : i32
    %c0_i32_2 = arith.constant 0 : i32
    return %c0_i32, %c0_i32_0, %c0_i32_1 : i32, i32, i32
  }
  func.func @transform_12(%arg0: i32) -> (i32, i32, i32) {
    %c0_i32 = arith.constant 0 : i32
    %c0_i32_0 = arith.constant 0 : i32
    %c0_i32_1 = arith.constant 0 : i32
    %c0_i32_2 = arith.constant 0 : i32
    return %c0_i32, %c0_i32_0, %c0_i32_1 : i32, i32, i32
  }
  func.func @transform_13(%arg0: i32) -> (i32, i32, i32) {
    %c0_i32 = arith.constant 0 : i32
    %c0_i32_0 = arith.constant 0 : i32
    %c0_i32_1 = arith.constant 0 : i32
    %c0_i32_2 = arith.constant 0 : i32
    return %c0_i32, %c0_i32_0, %c0_i32_1 : i32, i32, i32
  }
  func.func @transform_14(%arg0: i32) -> (i32, i32, i32) {
    %c0_i32 = arith.constant 0 : i32
    %c0_i32_0 = arith.constant 0 : i32
    %c0_i32_1 = arith.constant 0 : i32
    %c0_i32_2 = arith.constant 0 : i32
    return %c0_i32, %c0_i32_0, %c0_i32_1 : i32, i32, i32
  }
  func.func @transform_15(%arg0: i32) -> (i32, i32, i32) {
    %c0_i32 = arith.constant 0 : i32
    %c0_i32_0 = arith.constant 0 : i32
    %c0_i32_1 = arith.constant 0 : i32
    %c0_i32_2 = arith.constant 0 : i32
    return %c0_i32, %c0_i32_0, %c0_i32_1 : i32, i32, i32
  }
  func.func @transform_16(%arg0: i32) -> (i32, i32, i32) {
    %c0_i32 = arith.constant 0 : i32
    %c0_i32_0 = arith.constant 0 : i32
    %c0_i32_1 = arith.constant 0 : i32
    %c0_i32_2 = arith.constant 0 : i32
    return %c0_i32, %c0_i32_0, %c0_i32_1 : i32, i32, i32
  }
  func.func @transform_17(%arg0: i32) -> (i32, i32, i32) {
    %c0_i32 = arith.constant 0 : i32
    %c0_i32_0 = arith.constant 0 : i32
    %c0_i32_1 = arith.constant 0 : i32
    %c0_i32_2 = arith.constant 0 : i32
    return %c0_i32, %c0_i32_0, %c0_i32_1 : i32, i32, i32
  }
  func.func @transform_18(%arg0: i32) -> (i32, i32, i32) {
    %c0_i32 = arith.constant 0 : i32
    %c0_i32_0 = arith.constant 0 : i32
    %c0_i32_1 = arith.constant 0 : i32
    %c0_i32_2 = arith.constant 0 : i32
    return %c0_i32, %c0_i32_0, %c0_i32_1 : i32, i32, i32
  }
  func.func @transform_19(%arg0: i32) -> (i32, i32, i32) {
    %c0_i32 = arith.constant 0 : i32
    %c0_i32_0 = arith.constant 0 : i32
    %c0_i32_1 = arith.constant 0 : i32
    %c0_i32_2 = arith.constant 0 : i32
    return %c0_i32, %c0_i32_0, %c0_i32_1 : i32, i32, i32
  }
  func.func @transform_20(%arg0: i32) -> (i32, i32, i32) {
    %c0_i32 = arith.constant 0 : i32
    %c0_i32_0 = arith.constant 0 : i32
    %c0_i32_1 = arith.constant 0 : i32
    return %arg0, %c0_i32, %c0_i32_0 : i32, i32, i32
  }
}

</mosaic_0001>

<llo_original>
// kernel: tpu_custom_call.1
$region0: #{tpu_custom_call.1}
  #allocation0 [shape = 'u32[]', space=smem, size = 0x4, offset = 0x4, fixed_abs, tag = 'smem constant byte address 0x4 - core index']
  #allocation1 [shape = 'u32[144,128]{1,0:T(1,128)}', space=vmem, size = 0x12000, scoped, tag = 'internal scratch']
  %s0 = inlined_call_operand.hbm [shape: f32[2,8,128], index: 0, kind: input, shape index: {}]
  %s1 = inlined_call_operand.hbm [shape: f32[2,1,8], index: 1, kind: input, shape index: {}]
  %s2 = inlined_call_operand.hbm [shape: f32[1,128], index: 2, kind: input, shape index: {}]
  %s3 = inlined_call_operand.hbm [shape: f32[1,128], index: 3, kind: input, shape index: {}]
  %s4 = inlined_call_operand.hbm [shape: bf16[2,128,128], index: 4, kind: input, shape index: {}]
  %s5 = inlined_call_operand.hbm [shape: f32[2,1,128], index: 5, kind: input, shape index: {}]
  %s6 = inlined_call_operand.hbm [shape: bf16[2,128,128], index: 6, kind: input, shape index: {}]
  %s7 = inlined_call_operand.hbm [shape: f32[2,1,128], index: 7, kind: input, shape index: {}]
  %s8 = inlined_call_operand.hbm [shape: bf16[2,128,128], index: 8, kind: input, shape index: {}]
  %s9 = inlined_call_operand.hbm [shape: f32[2,1,128], index: 9, kind: input, shape index: {}]
  %s10 = inlined_call_operand.hbm [shape: bf16[2,128,128], index: 10, kind: input, shape index: {}]
  %s11 = inlined_call_operand.hbm [shape: f32[2,1,128], index: 11, kind: input, shape index: {}]
  %s12 = inlined_call_operand.hbm [shape: f32[2,1,128], index: 12, kind: input, shape index: {}]
  %s13 = inlined_call_operand.hbm [shape: f32[2,1,128], index: 13, kind: input, shape index: {}]
  %s14 = inlined_call_operand.hbm [shape: bf16[2,128,256], index: 14, kind: input, shape index: {}]
  %s15 = inlined_call_operand.hbm [shape: f32[2,1,256], index: 15, kind: input, shape index: {}]
  %s16 = inlined_call_operand.hbm [shape: bf16[2,256,128], index: 16, kind: input, shape index: {}]
  %s17 = inlined_call_operand.hbm [shape: f32[2,1,128], index: 17, kind: input, shape index: {}]
  %s18 = inlined_call_operand.hbm [shape: f32[2,1,128], index: 18, kind: input, shape index: {}]
  %s19 = inlined_call_operand.hbm [shape: f32[2,1,128], index: 19, kind: input, shape index: {}]
  %s20 = inlined_call_operand.hbm [shape: f32[2,8,128], index: 20, kind: output, shape index: {}]
  %s21 = sld [smem:[#allocation0]]
  $region170: #{tpu_custom_call.1} parent=0
    _
  %s23 = ssub.s32 1, %s21
  %s24 = scalar_select 0, %s23, %s21
  $region1: #{tpu_custom_call.1} parent=0
    #allocation2 [shape = 'u8[8192]{0}', space=vmem, size = 0x2000, scoped, tag = 'input window, operand 0, single buffered']
    #allocation3 [shape = 's32[1]{0}', space=sflag, size = 0x4, scoped, tag = 'scoped memory for tpu_custom_call.1']
    #allocation4 [shape = 's32[1]{0}', space=sflag, size = 0x4, scoped, tag = 'scoped memory for tpu_custom_call.1']
    #allocation5 [shape = 'u8[1024]{0}', space=vmem, size = 0x400, scoped, tag = 'input window, operand 1, single buffered']
    #allocation6 [shape = 's32[1]{0}', space=sflag, size = 0x4, scoped, tag = 'scoped memory for tpu_custom_call.1']
    #allocation7 [shape = 'u8[512]{0}', space=vmem, size = 0x400, scoped, tag = 'input window, operand 2, single buffered']
    #allocation8 [shape = 'u8[512]{0}', space=vmem, size = 0x400, scoped, tag = 'input window, operand 3, single buffered']
    #allocation9 [shape = 's32[1]{0}', space=sflag, size = 0x4, scoped, tag = 'scoped memory for tpu_custom_call.1']
    #allocation10 [shape = 'u8[65536]{0}', space=vmem, size = 0x10000, scoped, tag = 'input window, operand 4, single buffered']
    #allocation11 [shape = 'u8[1024]{0}', space=vmem, size = 0x400, scoped, tag = 'input window, operand 5, single buffered']
    #allocation12 [shape = 's32[1]{0}', space=sflag, size = 0x4, scoped, tag = 'scoped memory for tpu_custom_call.1']
    #allocation13 [shape = 'u8[65536]{0}', space=vmem, size = 0x10000, scoped, tag = 'input window, operand 6, single buffered']
    #allocation14 [shape = 'u8[1024]{0}', space=vmem, size = 0x400, scoped, tag = 'input window, operand 7, single buffered']
    #allocation15 [shape = 's32[1]{0}', space=sflag, size = 0x4, scoped, tag = 'scoped memory for tpu_custom_call.1']
    #allocation16 [shape = 'u8[65536]{0}', space=vmem, size = 0x10000, scoped, tag = 'input window, operand 8, single buffered']
    #allocation17 [shape = 'u8[1024]{0}', space=vmem, size = 0x400, scoped, tag = 'input window, operand 9, single buffered']
    #allocation18 [shape = 's32[1]{0}', space=sflag, size = 0x4, scoped, tag = 'scoped memory for tpu_custom_call.1']
    #allocation19 [shape = 'u8[65536]{0}', space=vmem, size = 0x10000, scoped, tag = 'input window, operand 10, single buffered']
    #allocation20 [shape = 'u8[1024]{0}', space=vmem, size = 0x400, scoped, tag = 'input window, operand 11, single buffered']
    #allocation21 [shape = 's32[1]{0}', space=sflag, size = 0x4, scoped, tag = 'scoped memory for tpu_custom_call.1']
    #allocation22 [shape = 'u8[1024]{0}', space=vmem, size = 0x400, scoped, tag = 'input window, operand 12, single buffered']
    #allocation23 [shape = 'u8[1024]{0}', space=vmem, size = 0x400, scoped, tag = 'input window, operand 13, single buffered']
    #allocation24 [shape = 's32[1]{0}', space=sflag, size = 0x4, scoped, tag = 'scoped memory for tpu_custom_call.1']
    #allocation25 [shape = 'u8[131072]{0}', space=vmem, size = 0x20000, scoped, tag = 'input window, operand 14, single buffered']
    #allocation26 [shape = 'u8[2048]{0}', space=vmem, size = 0x800, scoped, tag = 'input window, operand 15, single buffered']
    #allocation27 [shape = 's32[1]{0}', space=sflag, size = 0x4, scoped, tag = 'scoped memory for tpu_custom_call.1']
    #allocation28 [shape = 'u8[131072]{0}', space=vmem, size = 0x20000, scoped, tag = 'input window, operand 16, single buffered']
    #allocation29 [shape = 'u8[1024]{0}', space=vmem, size = 0x400, scoped, tag = 'input window, operand 17, single buffered']
    #allocation30 [shape = 's32[1]{0}', space=sflag, size = 0x4, scoped, tag = 'scoped memory for tpu_custom_call.1']
    #allocation31 [shape = 'u8[1024]{0}', space=vmem, size = 0x400, scoped, tag = 'input window, operand 18, single buffered']
    #allocation32 [shape = 'u8[1024]{0}', space=vmem, size = 0x400, scoped, tag = 'input window, operand 19, single buffered']
    #allocation33 [shape = 's32[1]{0}', space=sflag, size = 0x4, scoped, tag = 'scoped memory for tpu_custom_call.1']
    #allocation34 [shape = 'u8[8192]{0}', space=vmem, size = 0x2000, scoped, tag = 'output window, operand 0, single buffered']
    %25 = vsyncpa [#allocation3], 0
    %26 = vsyncpa [#allocation6], 0
    %27 = vsyncpa [#allocation9], 0
    %28 = vsyncpa [#allocation12], 0
    %29 = vsyncpa [#allocation15], 0
    %30 = vsyncpa [#allocation18], 0
    %31 = vsyncpa [#allocation21], 0
    %32 = vsyncpa [#allocation24], 0
    %33 = vsyncpa [#allocation27], 0
    %34 = vsyncpa [#allocation30], 0
    %35 = vsyncpa [#allocation33], 0
    %36 = vsyncpa [#allocation4], 0
    // Predicated region
    $region2: #{tpu_custom_call.1} parent=1 // pred_check
      _
    $region3: #{tpu_custom_call.1} parent=1 // pred_check_branch
      %38 = sbr.rel (0) target = $region5
    $region4: #{tpu_custom_call.1} parent=1 // pred_region
      %s40 = ssub.s32 256, 256
      %41 = vsyncadd [#allocation3], %s40
      %s42 = sshll.u32 [#allocation2], 4
      %s43 = int_to_ptr.vmem [resolvable:$true] %s42
      %48 = dma.hbm_to_vmem [thread:$0]  %s0, 256, %s43, [#allocation3], 128, 128, 8
    $region5: #{tpu_custom_call.1} parent=1 // pred_fallthru
      _
    // Predicated region
    $region6: #{tpu_custom_call.1} parent=1 // pred_check
      _
    $region7: #{tpu_custom_call.1} parent=1 // pred_check_branch
      %50 = sbr.rel (0) target = $region9
    $region8: #{tpu_custom_call.1} parent=1 // pred_region
      %s52 = ssub.s32 32, 32
      %53 = vsyncadd [#allocation6], %s52
      %s54 = sshll.u32 [#allocation5], 4
      %s55 = int_to_ptr.vmem [resolvable:$true] %s54
      %60 = dma.hbm_to_vmem [thread:$0]  %s1, 32, %s55, [#allocation6], 16, 16, 1
    $region9: #{tpu_custom_call.1} parent=1 // pred_fallthru
      _
    // Predicated region
    $region10: #{tpu_custom_call.1} parent=1 // pred_check
      _
    $region11: #{tpu_custom_call.1} parent=1 // pred_check_branch
      %62 = sbr.rel (0) target = $region13
    $region12: #{tpu_custom_call.1} parent=1 // pred_region
      %s64 = ssub.s32 16, 16
      %65 = vsyncadd [#allocation6], %s64
      %s67 = sshll.u32 [#allocation7], 4
      %s68 = int_to_ptr.vmem [resolvable:$true] %s67
      %70 = dma.hbm_to_vmem [thread:$0]  %s2, 16, %s68, [#allocation6]
    $region13: #{tpu_custom_call.1} parent=1 // pred_fallthru
      _
    // Predicated region
    $region14: #{tpu_custom_call.1} parent=1 // pred_check
      _
    $region15: #{tpu_custom_call.1} parent=1 // pred_check_branch
      %72 = sbr.rel (0) target = $region17
    $region16: #{tpu_custom_call.1} parent=1 // pred_region
      %s74 = ssub.s32 16, 16
      %75 = vsyncadd [#allocation9], %s74
      %s77 = sshll.u32 [#allocation8], 4
      %s78 = int_to_ptr.vmem [resolvable:$true] %s77
      %80 = dma.hbm_to_vmem [thread:$0]  %s3, 16, %s78, [#allocation9]
    $region17: #{tpu_custom_call.1} parent=1 // pred_fallthru
      _
    // Predicated region
    $region18: #{tpu_custom_call.1} parent=1 // pred_check
      _
    $region19: #{tpu_custom_call.1} parent=1 // pred_check_branch
      %82 = sbr.rel (0) target = $region21
    $region20: #{tpu_custom_call.1} parent=1 // pred_region
      %s84 = ssub.s32 2048, 2048
      %85 = vsyncadd [#allocation9], %s84
      %s86 = sshll.u32 [#allocation10], 4
      %s87 = int_to_ptr.vmem [resolvable:$true] %s86
      %92 = dma.hbm_to_vmem [thread:$0]  %s4, 2048, %s87, [#allocation9], 64, 64, 4
    $region21: #{tpu_custom_call.1} parent=1 // pred_fallthru
      _
    // Predicated region
    $region22: #{tpu_custom_call.1} parent=1 // pred_check
      _
    $region23: #{tpu_custom_call.1} parent=1 // pred_check_branch
      %94 = sbr.rel (0) target = $region25
    $region24: #{tpu_custom_call.1} parent=1 // pred_region
      %s96 = ssub.s32 32, 32
      %97 = vsyncadd [#allocation12], %s96
      %s98 = sshll.u32 [#allocation11], 4
      %s99 = int_to_ptr.vmem [resolvable:$true] %s98
      %104 = dma.hbm_to_vmem [thread:$0]  %s5, 32, %s99, [#allocation12], 16, 16, 1
    $region25: #{tpu_custom_call.1} parent=1 // pred_fallthru
      _
    // Predicated region
    $region26: #{tpu_custom_call.1} parent=1 // pred_check
      _
    $region27: #{tpu_custom_call.1} parent=1 // pred_check_branch
      %106 = sbr.rel (0) target = $region29
    $region28: #{tpu_custom_call.1} parent=1 // pred_region
      %s108 = ssub.s32 2048, 2048
      %109 = vsyncadd [#allocation12], %s108
      %s110 = sshll.u32 [#allocation13], 4
      %s111 = int_to_ptr.vmem [resolvable:$true] %s110
      %116 = dma.hbm_to_vmem [thread:$0]  %s6, 2048, %s111, [#allocation12], 64, 64, 4
    $region29: #{tpu_custom_call.1} parent=1 // pred_fallthru
      _
    // Predicated region
    $region30: #{tpu_custom_call.1} parent=1 // pred_check
      _
    $region31: #{tpu_custom_call.1} parent=1 // pred_check_branch
      %118 = sbr.rel (0) target = $region33
    $region32: #{tpu_custom_call.1} parent=1 // pred_region
      %s120 = ssub.s32 32, 32
      %121 = vsyncadd [#allocation15], %s120
      %s122 = sshll.u32 [#allocation14], 4
      %s123 = int_to_ptr.vmem [resolvable:$true] %s122
      %128 = dma.hbm_to_vmem [thread:$0]  %s7, 32, %s123, [#allocation15], 16, 16, 1
    $region33: #{tpu_custom_call.1} parent=1 // pred_fallthru
      _
    // Predicated region
    $region34: #{tpu_custom_call.1} parent=1 // pred_check
      _
    $region35: #{tpu_custom_call.1} parent=1 // pred_check_branch
      %130 = sbr.rel (0) target = $region37
    $region36: #{tpu_custom_call.1} parent=1 // pred_region
      %s132 = ssub.s32 2048, 2048
      %133 = vsyncadd [#allocation15], %s132
      %s134 = sshll.u32 [#allocation16], 4
      %s135 = int_to_ptr.vmem [resolvable:$true] %s134
      %140 = dma.hbm_to_vmem [thread:$0]  %s8, 2048, %s135, [#allocation15], 64, 64, 4
    $region37: #{tpu_custom_call.1} parent=1 // pred_fallthru
      _
    // Predicated region
    $region38: #{tpu_custom_call.1} parent=1 // pred_check
      _
    $region39: #{tpu_custom_call.1} parent=1 // pred_check_branch
      %142 = sbr.rel (0) target = $region41
    $region40: #{tpu_custom_call.1} parent=1 // pred_region
      %s144 = ssub.s32 32, 32
      %145 = vsyncadd [#allocation18], %s144
      %s146 = sshll.u32 [#allocation17], 4
      %s147 = int_to_ptr.vmem [resolvable:$true] %s146
      %152 = dma.hbm_to_vmem [thread:$0]  %s9, 32, %s147, [#allocation18], 16, 16, 1
    $region41: #{tpu_custom_call.1} parent=1 // pred_fallthru
      _
    // Predicated region
    $region42: #{tpu_custom_call.1} parent=1 // pred_check
      _
    $region43: #{tpu_custom_call.1} parent=1 // pred_check_branch
      %154 = sbr.rel (0) target = $region45
    $region44: #{tpu_custom_call.1} parent=1 // pred_region
      %s156 = ssub.s32 2048, 2048
      %157 = vsyncadd [#allocation18], %s156
      %s158 = sshll.u32 [#allocation19], 4
      %s159 = int_to_ptr.vmem [resolvable:$true] %s158
      %164 = dma.hbm_to_vmem [thread:$0]  %s10, 2048, %s159, [#allocation18], 64, 64, 4
    $region45: #{tpu_custom_call.1} parent=1 // pred_fallthru
      _
    // Predicated region
    $region46: #{tpu_custom_call.1} parent=1 // pred_check
      _
    $region47: #{tpu_custom_call.1} parent=1 // pred_check_branch
      %166 = sbr.rel (0) target = $region49
    $region48: #{tpu_custom_call.1} parent=1 // pred_region
      %s168 = ssub.s32 32, 32
      %169 = vsyncadd [#allocation21], %s168
      %s170 = sshll.u32 [#allocation20], 4
      %s171 = int_to_ptr.vmem [resolvable:$true] %s170
      %176 = dma.hbm_to_vmem [thread:$0]  %s11, 32, %s171, [#allocation21], 16, 16, 1
    $region49: #{tpu_custom_call.1} parent=1 // pred_fallthru
      _
    // Predicated region
    $region50: #{tpu_custom_call.1} parent=1 // pred_check
      _
    $region51: #{tpu_custom_call.1} parent=1 // pred_check_branch
      %178 = sbr.rel (0) target = $region53
    $region52: #{tpu_custom_call.1} parent=1 // pred_region
      %s180 = ssub.s32 32, 32
      %181 = vsyncadd [#allocation21], %s180
      %s182 = sshll.u32 [#allocation22], 4
      %s183 = int_to_ptr.vmem [resolvable:$true] %s182
      %188 = dma.hbm_to_vmem [thread:$0]  %s12, 32, %s183, [#allocation21], 16, 16, 1
    $region53: #{tpu_custom_call.1} parent=1 // pred_fallthru
      _
    // Predicated region
    $region54: #{tpu_custom_call.1} parent=1 // pred_check
      _
    $region55: #{tpu_custom_call.1} parent=1 // pred_check_branch
      %190 = sbr.rel (0) target = $region57
    $region56: #{tpu_custom_call.1} parent=1 // pred_region
      %s192 = ssub.s32 32, 32
      %193 = vsyncadd [#allocation24], %s192
      %s194 = sshll.u32 [#allocation23], 4
      %s195 = int_to_ptr.vmem [resolvable:$true] %s194
      %200 = dma.hbm_to_vmem [thread:$0]  %s13, 32, %s195, [#allocation24], 16, 16, 1
    $region57: #{tpu_custom_call.1} parent=1 // pred_fallthru
      _
    // Predicated region
    $region58: #{tpu_custom_call.1} parent=1 // pred_check
      _
    $region59: #{tpu_custom_call.1} parent=1 // pred_check_branch
      %202 = sbr.rel (0) target = $region61
    $region60: #{tpu_custom_call.1} parent=1 // pred_region
      %s204 = ssub.s32 4096, 4096
      %205 = vsyncadd [#allocation24], %s204
      %s206 = sshll.u32 [#allocation25], 4
      %s207 = int_to_ptr.vmem [resolvable:$true] %s206
      %212 = dma.hbm_to_vmem [thread:$0]  %s14, 4096, %s207, [#allocation24], 128, 128, 8
    $region61: #{tpu_custom_call.1} parent=1 // pred_fallthru
      _
    // Predicated region
    $region62: #{tpu_custom_call.1} parent=1 // pred_check
      _
    $region63: #{tpu_custom_call.1} parent=1 // pred_check_branch
      %214 = sbr.rel (0) target = $region65
    $region64: #{tpu_custom_call.1} parent=1 // pred_region
      %s216 = ssub.s32 64, 64
      %217 = vsyncadd [#allocation27], %s216
      %s218 = sshll.u32 [#allocation26], 4
      %s219 = int_to_ptr.vmem [resolvable:$true] %s218
      %224 = dma.hbm_to_vmem [thread:$0]  %s15, 64, %s219, [#allocation27], 32, 32, 2
    $region65: #{tpu_custom_call.1} parent=1 // pred_fallthru
      _
    // Predicated region
    $region66: #{tpu_custom_call.1} parent=1 // pred_check
      _
    $region67: #{tpu_custom_call.1} parent=1 // pred_check_branch
      %226 = sbr.rel (0) target = $region69
    $region68: #{tpu_custom_call.1} parent=1 // pred_region
      %s228 = ssub.s32 4096, 4096
      %229 = vsyncadd [#allocation27], %s228
      %s230 = sshll.u32 [#allocation28], 4
      %s231 = int_to_ptr.vmem [resolvable:$true] %s230
      %236 = dma.hbm_to_vmem [thread:$0]  %s16, 4096, %s231, [#allocation27], 64, 64, 4
    $region69: #{tpu_custom_call.1} parent=1 // pred_fallthru
      _
    // Predicated region
    $region70: #{tpu_custom_call.1} parent=1 // pred_check
      _
    $region71: #{tpu_custom_call.1} parent=1 // pred_check_branch
      %238 = sbr.rel (0) target = $region73
    $region72: #{tpu_custom_call.1} parent=1 // pred_region
      %s240 = ssub.s32 32, 32
      %241 = vsyncadd [#allocation30], %s240
      %s242 = sshll.u32 [#allocation29], 4
      %s243 = int_to_ptr.vmem [resolvable:$true] %s242
      %248 = dma.hbm_to_vmem [thread:$0]  %s17, 32, %s243, [#allocation30], 16, 16, 1
    $region73: #{tpu_custom_call.1} parent=1 // pred_fallthru
      _
    // Predicated region
    $region74: #{tpu_custom_call.1} parent=1 // pred_check
      _
    $region75: #{tpu_custom_call.1} parent=1 // pred_check_branch
      %250 = sbr.rel (0) target = $region77
    $region76: #{tpu_custom_call.1} parent=1 // pred_region
      %s252 = ssub.s32 32, 32
      %253 = vsyncadd [#allocation30], %s252
      %s254 = sshll.u32 [#allocation31], 4
      %s255 = int_to_ptr.vmem [resolvable:$true] %s254
      %260 = dma.hbm_to_vmem [thread:$0]  %s18, 32, %s255, [#allocation30], 16, 16, 1
    $region77: #{tpu_custom_call.1} parent=1 // pred_fallthru
      _
    // Predicated region
    $region78: #{tpu_custom_call.1} parent=1 // pred_check
      _
    $region79: #{tpu_custom_call.1} parent=1 // pred_check_branch
      %262 = sbr.rel (0) target = $region81
    $region80: #{tpu_custom_call.1} parent=1 // pred_region
      %s264 = ssub.s32 32, 32
      %265 = vsyncadd [#allocation33], %s264
      %s266 = sshll.u32 [#allocation32], 4
      %s267 = int_to_ptr.vmem [resolvable:$true] %s266
      %272 = dma.hbm_to_vmem [thread:$0]  %s19, 32, %s267, [#allocation33], 16, 16, 1
    $region81: #{tpu_custom_call.1} parent=1 // pred_fallthru
      _
    // Predicated region
    $region82: #{tpu_custom_call.1} parent=1 // pred_check
      _
    $region83: #{tpu_custom_call.1} parent=1 // pred_check_branch
      %274 = sbr.rel (0) target = $region85
    $region84: #{tpu_custom_call.1} parent=1 // pred_region
      %275 = dma.done [#allocation3], 256
    $region85: #{tpu_custom_call.1} parent=1 // pred_fallthru
      _
    // Predicated region
    $region86: #{tpu_custom_call.1} parent=1 // pred_check
      _
    $region87: #{tpu_custom_call.1} parent=1 // pred_check_branch
      %277 = sbr.rel (0) target = $region89
    $region88: #{tpu_custom_call.1} parent=1 // pred_region
      %278 = dma.done [#allocation6], 32
    $region89: #{tpu_custom_call.1} parent=1 // pred_fallthru
      _
    // Predicated region
    $region90: #{tpu_custom_call.1} parent=1 // pred_check
      _
    $region91: #{tpu_custom_call.1} parent=1 // pred_check_branch
      %280 = sbr.rel (0) target = $region93
    $region92: #{tpu_custom_call.1} parent=1 // pred_region
      %281 = dma.done [#allocation6], 16
    $region93: #{tpu_custom_call.1} parent=1 // pred_fallthru
      _
    // Predicated region
    $region94: #{tpu_custom_call.1} parent=1 // pred_check
      _
    $region95: #{tpu_custom_call.1} parent=1 // pred_check_branch
      %283 = sbr.rel (0) target = $region97
    $region96: #{tpu_custom_call.1} parent=1 // pred_region
      %284 = dma.done [#allocation9], 16
    $region97: #{tpu_custom_call.1} parent=1 // pred_fallthru
      _
    // Predicated region
    $region98: #{tpu_custom_call.1} parent=1 // pred_check
      _
    $region99: #{tpu_custom_call.1} parent=1 // pred_check_branch
      %286 = sbr.rel (0) target = $region101
    $region100: #{tpu_custom_call.1} parent=1 // pred_region
      %287 = dma.done [#allocation9], 2048
    $region101: #{tpu_custom_call.1} parent=1 // pred_fallthru
      _
    // Predicated region
    $region102: #{tpu_custom_call.1} parent=1 // pred_check
      _
    $region103: #{tpu_custom_call.1} parent=1 // pred_check_branch
      %289 = sbr.rel (0) target = $region105
    $region104: #{tpu_custom_call.1} parent=1 // pred_region
      %290 = dma.done [#allocation12], 32
    $region105: #{tpu_custom_call.1} parent=1 // pred_fallthru
      _
    // Predicated region
    $region106: #{tpu_custom_call.1} parent=1 // pred_check
      _
    $region107: #{tpu_custom_call.1} parent=1 // pred_check_branch
      %292 = sbr.rel (0) target = $region109
    $region108: #{tpu_custom_call.1} parent=1 // pred_region
      %293 = dma.done [#allocation12], 2048
    $region109: #{tpu_custom_call.1} parent=1 // pred_fallthru
      _
    // Predicated region
    $region110: #{tpu_custom_call.1} parent=1 // pred_check
      _
    $region111: #{tpu_custom_call.1} parent=1 // pred_check_branch
      %295 = sbr.rel (0) target = $region113
    $region112: #{tpu_custom_call.1} parent=1 // pred_region
      %296 = dma.done [#allocation15], 32
    $region113: #{tpu_custom_call.1} parent=1 // pred_fallthru
      _
    // Predicated region
    $region114: #{tpu_custom_call.1} parent=1 // pred_check
      _
    $region115: #{tpu_custom_call.1} parent=1 // pred_check_branch
      %298 = sbr.rel (0) target = $region117
    $region116: #{tpu_custom_call.1} parent=1 // pred_region
      %299 = dma.done [#allocation15], 2048
    $region117: #{tpu_custom_call.1} parent=1 // pred_fallthru
      _
    // Predicated region
    $region118: #{tpu_custom_call.1} parent=1 // pred_check
      _
    $region119: #{tpu_custom_call.1} parent=1 // pred_check_branch
      %301 = sbr.rel (0) target = $region121
    $region120: #{tpu_custom_call.1} parent=1 // pred_region
      %302 = dma.done [#allocation18], 32
    $region121: #{tpu_custom_call.1} parent=1 // pred_fallthru
      _
    // Predicated region
    $region122: #{tpu_custom_call.1} parent=1 // pred_check
      _
    $region123: #{tpu_custom_call.1} parent=1 // pred_check_branch
      %304 = sbr.rel (0) target = $region125
    $region124: #{tpu_custom_call.1} parent=1 // pred_region
      %305 = dma.done [#allocation18], 2048
    $region125: #{tpu_custom_call.1} parent=1 // pred_fallthru
      _
    // Predicated region
    $region126: #{tpu_custom_call.1} parent=1 // pred_check
      _
    $region127: #{tpu_custom_call.1} parent=1 // pred_check_branch
      %307 = sbr.rel (0) target = $region129
    $region128: #{tpu_custom_call.1} parent=1 // pred_region
      %308 = dma.done [#allocation21], 32
    $region129: #{tpu_custom_call.1} parent=1 // pred_fallthru
      _
    // Predicated region
    $region130: #{tpu_custom_call.1} parent=1 // pred_check
      _
    $region131: #{tpu_custom_call.1} parent=1 // pred_check_branch
      %310 = sbr.rel (0) target = $region133
    $region132: #{tpu_custom_call.1} parent=1 // pred_region
      %311 = dma.done [#allocation21], 32
    $region133: #{tpu_custom_call.1} parent=1 // pred_fallthru
      _
    // Predicated region
    $region134: #{tpu_custom_call.1} parent=1 // pred_check
      _
    $region135: #{tpu_custom_call.1} parent=1 // pred_check_branch
      %313 = sbr.rel (0) target = $region137
    $region136: #{tpu_custom_call.1} parent=1 // pred_region
      %314 = dma.done [#allocation24], 32
    $region137: #{tpu_custom_call.1} parent=1 // pred_fallthru
      _
    // Predicated region
    $region138: #{tpu_custom_call.1} parent=1 // pred_check
      _
    $region139: #{tpu_custom_call.1} parent=1 // pred_check_branch
      %316 = sbr.rel (0) target = $region141
    $region140: #{tpu_custom_call.1} parent=1 // pred_region
      %317 = dma.done [#allocation24], 4096
    $region141: #{tpu_custom_call.1} parent=1 // pred_fallthru
      _
    // Predicated region
    $region142: #{tpu_custom_call.1} parent=1 // pred_check
      _
    $region143: #{tpu_custom_call.1} parent=1 // pred_check_branch
      %319 = sbr.rel (0) target = $region145
    $region144: #{tpu_custom_call.1} parent=1 // pred_region
      %320 = dma.done [#allocation27], 64
    $region145: #{tpu_custom_call.1} parent=1 // pred_fallthru
      _
    // Predicated region
    $region146: #{tpu_custom_call.1} parent=1 // pred_check
      _
    $region147: #{tpu_custom_call.1} parent=1 // pred_check_branch
      %322 = sbr.rel (0) target = $region149
    $region148: #{tpu_custom_call.1} parent=1 // pred_region
      %323 = dma.done [#allocation27], 4096
    $region149: #{tpu_custom_call.1} parent=1 // pred_fallthru
      _
    // Predicated region
    $region150: #{tpu_custom_call.1} parent=1 // pred_check
      _
    $region151: #{tpu_custom_call.1} parent=1 // pred_check_branch
      %325 = sbr.rel (0) target = $region153
    $region152: #{tpu_custom_call.1} parent=1 // pred_region
      %326 = dma.done [#allocation30], 32
    $region153: #{tpu_custom_call.1} parent=1 // pred_fallthru
      _
    // Predicated region
    $region154: #{tpu_custom_call.1} parent=1 // pred_check
      _
    $region155: #{tpu_custom_call.1} parent=1 // pred_check_branch
      %328 = sbr.rel (0) target = $region157
    $region156: #{tpu_custom_call.1} parent=1 // pred_region
      %329 = dma.done [#allocation30], 32
    $region157: #{tpu_custom_call.1} parent=1 // pred_fallthru
      _
    // Predicated region
    $region158: #{tpu_custom_call.1} parent=1 // pred_check
      _
    $region159: #{tpu_custom_call.1} parent=1 // pred_check_branch
      %331 = sbr.rel (0) target = $region161
    $region160: #{tpu_custom_call.1} parent=1 // pred_region
      %332 = dma.done [#allocation33], 32
    $region161: #{tpu_custom_call.1} parent=1 // pred_fallthru
      _
    %v334 = vld [vmem:[#allocation2] sm:$0xff]
    %v335 = vld [vmem:[#allocation2 + $0x8] sm:$0xff]
    %v336 = vld [vmem:[#allocation7] sm:$0x1]
    %v337 = vld [vmem:[#allocation8] sm:$0x1]
    %338 = vadd.xlane.f32.xlu0 %v334
    %v339 = vpop.xlane.xlu0 %338
    %340 = vadd.xlane.f32.xlu0 %v335
    %v341 = vpop.xlane.xlu0 %340
    %v342 = vrcp.pop 128.0
    %v343 = vmul.f32 %v339, %v342
    %v344 = vmul.f32 %v341, %v342
    %v345 = vsub.f32 %v334, %v343
    %v346 = vsub.f32 %v335, %v344
    %v347 = vmul.f32 %v345, %v345
    %v348 = vmul.f32 %v346, %v346
    %349 = vadd.xlane.f32.xlu0 %v347
    %v350 = vpop.xlane.xlu0 %349
    %351 = vadd.xlane.f32.xlu0 %v348
    %v352 = vpop.xlane.xlu0 %351
    %v353 = vmul.f32 %v350, %v342
    %v354 = vmul.f32 %v352, %v342
    %v355 = vadd.f32 %v353, 1e-12
    %v356 = vadd.f32 %v354, 1e-12
    %v357 = vrsqrt.pop %v355
    %v358 = vrsqrt.pop %v356
    %v359 = vmul.f32 %v345, %v357
    %v360 = vmul.f32 %v346, %v358
    %v362 = vlaneseq
    %v363 = vshrl.u32 %v362, 7
    %v364 = vsub.s32 0, %v363
    %v365 = vrot.slane %v336, %v364
    %v367 = vmul.f32 %v359, %v365
    %v368 = vmul.f32 %v360, %v365
    %v370 = vlaneseq
    %v371 = vshrl.u32 %v370, 7
    %v372 = vsub.s32 0, %v371
    %v373 = vrot.slane %v337, %v372
    %v375 = vadd.f32 %v367, %v373
    %v376 = vadd.f32 %v368, %v373
    %v377 = vld [vmem:[#allocation5] sm:$0x1]
    %v378 = vld [vmem:[#allocation5 + $0x1] sm:$0x1]
    %v379 = vsub.f32 1.0, %v377
    %v380 = vsub.f32 1.0, %v378
    %v381 = vmul.f32 %v379, -10000.0
    %v382 = vmul.f32 %v380, -10000.0
    %v383 = vld [vmem:[#allocation10] sm:$0xf]
    %v384 = vld [vmem:[#allocation10 + $0x4] sm:$0xf]
    %v385 = vld [vmem:[#allocation10 + $0x8] sm:$0xf]
    %v386 = vld [vmem:[#allocation10 + $0xc] sm:$0xf]
    %v387 = vld [vmem:[#allocation10 + $0x10] sm:$0xf]
    %v388 = vld [vmem:[#allocation10 + $0x14] sm:$0xf]
    %v389 = vld [vmem:[#allocation10 + $0x18] sm:$0xf]
    %v390 = vld [vmem:[#allocation10 + $0x1c] sm:$0xf]
    %v391 = vld [vmem:[#allocation10 + $0x20] sm:$0xf]
    %v392 = vld [vmem:[#allocation10 + $0x24] sm:$0xf]
    %v393 = vld [vmem:[#allocation10 + $0x28] sm:$0xf]
    %v394 = vld [vmem:[#allocation10 + $0x2c] sm:$0xf]
    %v395 = vld [vmem:[#allocation10 + $0x30] sm:$0xf]
    %v396 = vld [vmem:[#allocation10 + $0x34] sm:$0xf]
    %v397 = vld [vmem:[#allocation10 + $0x38] sm:$0xf]
    %v398 = vld [vmem:[#allocation10 + $0x3c] sm:$0xf]
    %v399 = vld [vmem:[#allocation13] sm:$0xf]
    %v400 = vld [vmem:[#allocation13 + $0x4] sm:$0xf]
    %v401 = vld [vmem:[#allocation13 + $0x8] sm:$0xf]
    %v402 = vld [vmem:[#allocation13 + $0xc] sm:$0xf]
    %v403 = vld [vmem:[#allocation13 + $0x10] sm:$0xf]
    %v404 = vld [vmem:[#allocation13 + $0x14] sm:$0xf]
    %v405 = vld [vmem:[#allocation13 + $0x18] sm:$0xf]
    %v406 = vld [vmem:[#allocation13 + $0x1c] sm:$0xf]
    %v407 = vld [vmem:[#allocation13 + $0x20] sm:$0xf]
    %v408 = vld [vmem:[#allocation13 + $0x24] sm:$0xf]
    %v409 = vld [vmem:[#allocation13 + $0x28] sm:$0xf]
    %v410 = vld [vmem:[#allocation13 + $0x2c] sm:$0xf]
    %v411 = vld [vmem:[#allocation13 + $0x30] sm:$0xf]
    %v412 = vld [vmem:[#allocation13 + $0x34] sm:$0xf]
    %v413 = vld [vmem:[#allocation13 + $0x38] sm:$0xf]
    %v414 = vld [vmem:[#allocation13 + $0x3c] sm:$0xf]
    %v415 = vld [vmem:[#allocation16] sm:$0xf]
    %v416 = vld [vmem:[#allocation16 + $0x4] sm:$0xf]
    %v417 = vld [vmem:[#allocation16 + $0x8] sm:$0xf]
    %v418 = vld [vmem:[#allocation16 + $0xc] sm:$0xf]
    %v419 = vld [vmem:[#allocation16 + $0x10] sm:$0xf]
    %v420 = vld [vmem:[#allocation16 + $0x14] sm:$0xf]
    %v421 = vld [vmem:[#allocation16 + $0x18] sm:$0xf]
    %v422 = vld [vmem:[#allocation16 + $0x1c] sm:$0xf]
    %v423 = vld [vmem:[#allocation16 + $0x20] sm:$0xf]
    %v424 = vld [vmem:[#allocation16 + $0x24] sm:$0xf]
    %v425 = vld [vmem:[#allocation16 + $0x28] sm:$0xf]
    %v426 = vld [vmem:[#allocation16 + $0x2c] sm:$0xf]
    %v427 = vld [vmem:[#allocation16 + $0x30] sm:$0xf]
    %v428 = vld [vmem:[#allocation16 + $0x34] sm:$0xf]
    %v429 = vld [vmem:[#allocation16 + $0x38] sm:$0xf]
    %v430 = vld [vmem:[#allocation16 + $0x3c] sm:$0xf]
    %v431 = vld [vmem:[#allocation19] sm:$0xf]
    %v432 = vld [vmem:[#allocation19 + $0x4] sm:$0xf]
    %v433 = vld [vmem:[#allocation19 + $0x8] sm:$0xf]
    %v434 = vld [vmem:[#allocation19 + $0xc] sm:$0xf]
    %v435 = vld [vmem:[#allocation19 + $0x10] sm:$0xf]
    %v436 = vld [vmem:[#allocation19 + $0x14] sm:$0xf]
    %v437 = vld [vmem:[#allocation19 + $0x18] sm:$0xf]
    %v438 = vld [vmem:[#allocation19 + $0x1c] sm:$0xf]
    %v439 = vld [vmem:[#allocation19 + $0x20] sm:$0xf]
    %v440 = vld [vmem:[#allocation19 + $0x24] sm:$0xf]
    %v441 = vld [vmem:[#allocation19 + $0x28] sm:$0xf]
    %v442 = vld [vmem:[#allocation19 + $0x2c] sm:$0xf]
    %v443 = vld [vmem:[#allocation19 + $0x30] sm:$0xf]
    %v444 = vld [vmem:[#allocation19 + $0x34] sm:$0xf]
    %v445 = vld [vmem:[#allocation19 + $0x38] sm:$0xf]
    %v446 = vld [vmem:[#allocation19 + $0x3c] sm:$0xf]
    %v447 = vld [vmem:[#allocation25] sm:$0xff]
    %v448 = vld [vmem:[#allocation25 + $0x8] sm:$0xff]
    %v449 = vld [vmem:[#allocation25 + $0x10] sm:$0xff]
    %v450 = vld [vmem:[#allocation25 + $0x18] sm:$0xff]
    %v451 = vld [vmem:[#allocation25 + $0x20] sm:$0xff]
    %v452 = vld [vmem:[#allocation25 + $0x28] sm:$0xff]
    %v453 = vld [vmem:[#allocation25 + $0x30] sm:$0xff]
    %v454 = vld [vmem:[#allocation25 + $0x38] sm:$0xff]
    %v455 = vld [vmem:[#allocation25 + $0x40] sm:$0xff]
    %v456 = vld [vmem:[#allocation25 + $0x48] sm:$0xff]
    %v457 = vld [vmem:[#allocation25 + $0x50] sm:$0xff]
    %v458 = vld [vmem:[#allocation25 + $0x58] sm:$0xff]
    %v459 = vld [vmem:[#allocation25 + $0x60] sm:$0xff]
    %v460 = vld [vmem:[#allocation25 + $0x68] sm:$0xff]
    %v461 = vld [vmem:[#allocation25 + $0x70] sm:$0xff]
    %v462 = vld [vmem:[#allocation25 + $0x78] sm:$0xff]
    %v463 = vld [vmem:[#allocation28] sm:$0xf]
    %v464 = vld [vmem:[#allocation28 + $0x4] sm:$0xf]
    %v465 = vld [vmem:[#allocation28 + $0x8] sm:$0xf]
    %v466 = vld [vmem:[#allocation28 + $0xc] sm:$0xf]
    %v467 = vld [vmem:[#allocation28 + $0x10] sm:$0xf]
    %v468 = vld [vmem:[#allocation28 + $0x14] sm:$0xf]
    %v469 = vld [vmem:[#allocation28 + $0x18] sm:$0xf]
    %v470 = vld [vmem:[#allocation28 + $0x1c] sm:$0xf]
    %v471 = vld [vmem:[#allocation28 + $0x20] sm:$0xf]
    %v472 = vld [vmem:[#allocation28 + $0x24] sm:$0xf]
    %v473 = vld [vmem:[#allocation28 + $0x28] sm:$0xf]
    %v474 = vld [vmem:[#allocation28 + $0x2c] sm:$0xf]
    %v475 = vld [vmem:[#allocation28 + $0x30] sm:$0xf]
    %v476 = vld [vmem:[#allocation28 + $0x34] sm:$0xf]
    %v477 = vld [vmem:[#allocation28 + $0x38] sm:$0xf]
    %v478 = vld [vmem:[#allocation28 + $0x3c] sm:$0xf]
    %v479 = vld [vmem:[#allocation28 + $0x40] sm:$0xf]
    %v480 = vld [vmem:[#allocation28 + $0x44] sm:$0xf]
    %v481 = vld [vmem:[#allocation28 + $0x48] sm:$0xf]
    %v482 = vld [vmem:[#allocation28 + $0x4c] sm:$0xf]
    %v483 = vld [vmem:[#allocation28 + $0x50] sm:$0xf]
    %v484 = vld [vmem:[#allocation28 + $0x54] sm:$0xf]
    %v485 = vld [vmem:[#allocation28 + $0x58] sm:$0xf]
    %v486 = vld [vmem:[#allocation28 + $0x5c] sm:$0xf]
    %v487 = vld [vmem:[#allocation28 + $0x60] sm:$0xf]
    %v488 = vld [vmem:[#allocation28 + $0x64] sm:$0xf]
    %v489 = vld [vmem:[#allocation28 + $0x68] sm:$0xf]
    %v490 = vld [vmem:[#allocation28 + $0x6c] sm:$0xf]
    %v491 = vld [vmem:[#allocation28 + $0x70] sm:$0xf]
    %v492 = vld [vmem:[#allocation28 + $0x74] sm:$0xf]
    %v493 = vld [vmem:[#allocation28 + $0x78] sm:$0xf]
    %v494 = vld [vmem:[#allocation28 + $0x7c] sm:$0xf]
    %v495 = vpack.c.bf16 %v376, %v375
    %v496 = vld [vmem:[#allocation11] sm:$0x1]
    %v498 = vlaneseq
    %v499 = vshrl.u32 %v498, 7
    %v500 = vsub.s32 0, %v499
    %v501 = vrot.slane %v496, %v500
    %v519 = vunpack.c.l.b16 %v383
    %v520 = vunpack.c.l.b16 %v384
    %v521 = vunpack.c.l.b16 %v385
    %v522 = vunpack.c.l.b16 %v386
    %v523 = vunpack.c.l.b16 %v387
    %v524 = vunpack.c.l.b16 %v388
    %v525 = vunpack.c.l.b16 %v389
    %v526 = vunpack.c.l.b16 %v390
    %v527 = vunpack.c.l.b16 %v391
    %v528 = vunpack.c.l.b16 %v392
    %v529 = vunpack.c.l.b16 %v393
    %v530 = vunpack.c.l.b16 %v394
    %v531 = vunpack.c.l.b16 %v395
    %v532 = vunpack.c.l.b16 %v396
    %v533 = vunpack.c.l.b16 %v397
    %v534 = vunpack.c.l.b16 %v398
    %v535 = vpack.c.b16 %v520, %v519
    %v536 = vpack.c.b16 %v522, %v521
    %v537 = vpack.c.b16 %v524, %v523
    %v538 = vpack.c.b16 %v526, %v525
    %v539 = vpack.c.b16 %v528, %v527
    %v540 = vpack.c.b16 %v530, %v529
    %v541 = vpack.c.b16 %v532, %v531
    %v542 = vpack.c.b16 %v534, %v533
    %551 = vmatprep.subr.bf16.mxu0 0
    %552 = vmatpush1.bf16.msra.mxu0 %v535
    %553 = vmatprep.subr.bf16.mxu0 0
    %554 = vmatpush1.bf16.msra.mxu0 %v536
    %555 = vmatprep.subr.bf16.mxu0 0
    %556 = vmatpush1.bf16.msra.mxu0 %v537
    %557 = vmatprep.subr.bf16.mxu0 0
    %558 = vmatpush1.bf16.msra.mxu0 %v538
    %559 = vmatprep.subr.bf16.mxu0 0
    %560 = vmatpush1.bf16.msra.mxu0 %v539
    %561 = vmatprep.subr.bf16.mxu0 0
    %562 = vmatpush1.bf16.msra.mxu0 %v540
    %563 = vmatprep.subr.bf16.mxu0 0
    %564 = vmatpush1.bf16.msra.mxu0 %v541
    %565 = vmatprep.subr.bf16.mxu0 0
    %566 = vmatpush1.bf16.msra.mxu0 %v542
    %567 = vmatprep.subr.bf16.mxu0 0
    %568 = vmatpush1.bf16.msra.mxu0 0
    %569 = vmatprep.subr.bf16.mxu0 0
    %570 = vmatpush1.bf16.msra.mxu0 0
    %571 = vmatprep.subr.bf16.mxu0 0
    %572 = vmatpush1.bf16.msra.mxu0 0
    %573 = vmatprep.subr.bf16.mxu0 0
    %574 = vmatpush1.bf16.msra.mxu0 0
    %575 = vmatprep.subr.bf16.mxu0 0
    %576 = vmatpush1.bf16.msra.mxu0 0
    %577 = vmatprep.subr.bf16.mxu0 0
    %578 = vmatpush1.bf16.msra.mxu0 0
    %579 = vmatprep.subr.bf16.mxu0 0
    %580 = vmatpush1.bf16.msra.mxu0 0
    %581 = vmatprep.subr.bf16.mxu0 0
    %582 = vmatpush1.bf16.msra.mxu0 0
    %583 = vmatprep.mubr.bf16.mxu0 0
    %584 = vmatmul.mubr.bf16.gmra.mrb[0].mxu0 %v495
    %v585 = vpop.f32.mrb[0].mxu0
    %v586 = vadd.f32 %v501, %v585
    %v587 = vpop.f32.mrb[0].mxu0
    %v588 = vpop.f32.mrb[0].mxu0
    %v589 = vadd.f32 %v501, %v588
    %v590 = vpop.f32.mrb[0].mxu0
    %591 = vdwg.mxu0
    %v592 = vld [vmem:[#allocation14] sm:$0x1]
    %v594 = vlaneseq
    %v595 = vshrl.u32 %v594, 7
    %v596 = vsub.s32 0, %v595
    %v597 = vrot.slane %v592, %v596
    %v615 = vunpack.c.l.b16 %v399
    %v616 = vunpack.c.l.b16 %v400
    %v617 = vunpack.c.l.b16 %v401
    %v618 = vunpack.c.l.b16 %v402
    %v619 = vunpack.c.l.b16 %v403
    %v620 = vunpack.c.l.b16 %v404
    %v621 = vunpack.c.l.b16 %v405
    %v622 = vunpack.c.l.b16 %v406
    %v623 = vunpack.c.l.b16 %v407
    %v624 = vunpack.c.l.b16 %v408
    %v625 = vunpack.c.l.b16 %v409
    %v626 = vunpack.c.l.b16 %v410
    %v627 = vunpack.c.l.b16 %v411
    %v628 = vunpack.c.l.b16 %v412
    %v629 = vunpack.c.l.b16 %v413
    %v630 = vunpack.c.l.b16 %v414
    %v631 = vpack.c.b16 %v616, %v615
    %v632 = vpack.c.b16 %v618, %v617
    %v633 = vpack.c.b16 %v620, %v619
    %v634 = vpack.c.b16 %v622, %v621
    %v635 = vpack.c.b16 %v624, %v623
    %v636 = vpack.c.b16 %v626, %v625
    %v637 = vpack.c.b16 %v628, %v627
    %v638 = vpack.c.b16 %v630, %v629
    %647 = vmatprep.subr.bf16.mxu0 0
    %648 = vmatpush1.bf16.msra.mxu0 %v631
    %649 = vmatprep.subr.bf16.mxu0 0
    %650 = vmatpush1.bf16.msra.mxu0 %v632
    %651 = vmatprep.subr.bf16.mxu0 0
    %652 = vmatpush1.bf16.msra.mxu0 %v633
    %653 = vmatprep.subr.bf16.mxu0 0
    %654 = vmatpush1.bf16.msra.mxu0 %v634
    %655 = vmatprep.subr.bf16.mxu0 0
    %656 = vmatpush1.bf16.msra.mxu0 %v635
    %657 = vmatprep.subr.bf16.mxu0 0
    %658 = vmatpush1.bf16.msra.mxu0 %v636
    %659 = vmatprep.subr.bf16.mxu0 0
    %660 = vmatpush1.bf16.msra.mxu0 %v637
    %661 = vmatprep.subr.bf16.mxu0 0
    %662 = vmatpush1.bf16.msra.mxu0 %v638
    %663 = vmatprep.subr.bf16.mxu0 0
    %664 = vmatpush1.bf16.msra.mxu0 0
    %665 = vmatprep.subr.bf16.mxu0 0
    %666 = vmatpush1.bf16.msra.mxu0 0
    %667 = vmatprep.subr.bf16.mxu0 0
    %668 = vmatpush1.bf16.msra.mxu0 0
    %669 = vmatprep.subr.bf16.mxu0 0
    %670 = vmatpush1.bf16.msra.mxu0 0
    %671 = vmatprep.subr.bf16.mxu0 0
    %672 = vmatpush1.bf16.msra.mxu0 0
    %673 = vmatprep.subr.bf16.mxu0 0
    %674 = vmatpush1.bf16.msra.mxu0 0
    %675 = vmatprep.subr.bf16.mxu0 0
    %676 = vmatpush1.bf16.msra.mxu0 0
    %677 = vmatprep.subr.bf16.mxu0 0
    %678 = vmatpush1.bf16.msra.mxu0 0
    %679 = vmatprep.mubr.bf16.mxu0 0
    %680 = vmatmul.mubr.bf16.gmra.mrb[0].mxu0 %v495
    %v681 = vpop.f32.mrb[0].mxu0
    %v682 = vadd.f32 %v597, %v681
    %v683 = vpop.f32.mrb[0].mxu0
    %v684 = vpop.f32.mrb[0].mxu0
    %v685 = vadd.f32 %v597, %v684
    %v686 = vpop.f32.mrb[0].mxu0
    %687 = vdwg.mxu0
    %v688 = vld [vmem:[#allocation17] sm:$0x1]
    %v690 = vlaneseq
    %v691 = vshrl.u32 %v690, 7
    %v692 = vsub.s32 0, %v691
    %v693 = vrot.slane %v688, %v692
    %v711 = vunpack.c.l.b16 %v415
    %v712 = vunpack.c.l.b16 %v416
    %v713 = vunpack.c.l.b16 %v417
    %v714 = vunpack.c.l.b16 %v418
    %v715 = vunpack.c.l.b16 %v419
    %v716 = vunpack.c.l.b16 %v420
    %v717 = vunpack.c.l.b16 %v421
    %v718 = vunpack.c.l.b16 %v422
    %v719 = vunpack.c.l.b16 %v423
    %v720 = vunpack.c.l.b16 %v424
    %v721 = vunpack.c.l.b16 %v425
    %v722 = vunpack.c.l.b16 %v426
    %v723 = vunpack.c.l.b16 %v427
    %v724 = vunpack.c.l.b16 %v428
    %v725 = vunpack.c.l.b16 %v429
    %v726 = vunpack.c.l.b16 %v430
    %v727 = vpack.c.b16 %v712, %v711
    %v728 = vpack.c.b16 %v714, %v713
    %v729 = vpack.c.b16 %v716, %v715
    %v730 = vpack.c.b16 %v718, %v717
    %v731 = vpack.c.b16 %v720, %v719
    %v732 = vpack.c.b16 %v722, %v721
    %v733 = vpack.c.b16 %v724, %v723
    %v734 = vpack.c.b16 %v726, %v725
    %743 = vmatprep.subr.bf16.mxu0 0
    %744 = vmatpush1.bf16.msra.mxu0 %v727
    %745 = vmatprep.subr.bf16.mxu0 0
    %746 = vmatpush1.bf16.msra.mxu0 %v728
    %747 = vmatprep.subr.bf16.mxu0 0
    %748 = vmatpush1.bf16.msra.mxu0 %v729
    %749 = vmatprep.subr.bf16.mxu0 0
    %750 = vmatpush1.bf16.msra.mxu0 %v730
    %751 = vmatprep.subr.bf16.mxu0 0
    %752 = vmatpush1.bf16.msra.mxu0 %v731
    %753 = vmatprep.subr.bf16.mxu0 0
    %754 = vmatpush1.bf16.msra.mxu0 %v732
    %755 = vmatprep.subr.bf16.mxu0 0
    %756 = vmatpush1.bf16.msra.mxu0 %v733
    %757 = vmatprep.subr.bf16.mxu0 0
    %758 = vmatpush1.bf16.msra.mxu0 %v734
    %759 = vmatprep.subr.bf16.mxu0 0
    %760 = vmatpush1.bf16.msra.mxu0 0
    %761 = vmatprep.subr.bf16.mxu0 0
    %762 = vmatpush1.bf16.msra.mxu0 0
    %763 = vmatprep.subr.bf16.mxu0 0
    %764 = vmatpush1.bf16.msra.mxu0 0
    %765 = vmatprep.subr.bf16.mxu0 0
    %766 = vmatpush1.bf16.msra.mxu0 0
    %767 = vmatprep.subr.bf16.mxu0 0
    %768 = vmatpush1.bf16.msra.mxu0 0
    %769 = vmatprep.subr.bf16.mxu0 0
    %770 = vmatpush1.bf16.msra.mxu0 0
    %771 = vmatprep.subr.bf16.mxu0 0
    %772 = vmatpush1.bf16.msra.mxu0 0
    %773 = vmatprep.subr.bf16.mxu0 0
    %774 = vmatpush1.bf16.msra.mxu0 0
    %775 = vmatprep.mubr.bf16.mxu0 0
    %776 = vmatmul.mubr.bf16.gmra.mrb[0].mxu0 %v495
    %v777 = vpop.f32.mrb[0].mxu0
    %v778 = vadd.f32 %v693, %v777
    %v779 = vpop.f32.mrb[0].mxu0
    %v780 = vpop.f32.mrb[0].mxu0
    %v781 = vadd.f32 %v693, %v780
    %v782 = vpop.f32.mrb[0].mxu0
    %783 = vdwg.mxu0
    %v784 = vpack.c.bf16 %v586, %v586
    %v785 = vpack.c.bf16 %v589, %v589
    %v786 = vpack.c.bf16 %v682, %v682
    %v787 = vpack.c.bf16 %v685, %v685
    %v788 = vpack.c.bf16 %v778, %v778
    %v789 = vpack.c.bf16 %v781, %v781
    %vm790 = vcmask 523264
    %v792 = vsel %vm790, %v784, 0
    %v795 = vsel %vm790, %v786, 0
    %797 = vmatprep.subr.bf16.mxu0 0
    %798 = vmatpush1.bf16.xpose.msra.mxu0 %v795
    %799 = vmatprep.subr.bf16.mxu0 0
    %800 = vmatpush1.bf16.xpose.msra.mxu0 0
    %801 = vmatprep.subr.bf16.mxu0 0
    %802 = vmatpush1.bf16.xpose.msra.mxu0 0
    %803 = vmatprep.subr.bf16.mxu0 0
    %804 = vmatpush1.bf16.xpose.msra.mxu0 0
    %805 = vmatprep.subr.bf16.mxu0 0
    %806 = vmatpush1.bf16.xpose.msra.mxu0 0
    %807 = vmatprep.subr.bf16.mxu0 0
    %808 = vmatpush1.bf16.xpose.msra.mxu0 0
    %809 = vmatprep.subr.bf16.mxu0 0
    %810 = vmatpush1.bf16.xpose.msra.mxu0 0
    %811 = vmatprep.subr.bf16.mxu0 0
    %812 = vmatpush1.bf16.xpose.msra.mxu0 0
    %813 = vmatprep.subr.bf16.mxu0 0
    %814 = vmatpush1.bf16.xpose.msra.mxu0 0
    %815 = vmatprep.subr.bf16.mxu0 0
    %816 = vmatpush1.bf16.xpose.msra.mxu0 0
    %817 = vmatprep.subr.bf16.mxu0 0
    %818 = vmatpush1.bf16.xpose.msra.mxu0 0
    %819 = vmatprep.subr.bf16.mxu0 0
    %820 = vmatpush1.bf16.xpose.msra.mxu0 0
    %821 = vmatprep.subr.bf16.mxu0 0
    %822 = vmatpush1.bf16.xpose.msra.mxu0 0
    %823 = vmatprep.subr.bf16.mxu0 0
    %824 = vmatpush1.bf16.xpose.msra.mxu0 0
    %825 = vmatprep.subr.bf16.mxu0 0
    %826 = vmatpush1.bf16.xpose.msra.mxu0 0
    %827 = vmatprep.subr.bf16.mxu0 0
    %828 = vmatpush1.bf16.xpose.msra.mxu0 0
    %829 = vmatprep.mubr.bf16.mxu0 0
    %830 = vmatmul.mubr.bf16.gmra.mrb[0].mxu0 %v792
    %v831 = vpop.f32.mrb[0].mxu0
    %v832 = vadd.f32 0.0, %v831
    %v833 = vpop.f32.mrb[0].mxu0
    %v834 = vpop.f32.mrb[0].mxu0
    %v835 = vpop.f32.mrb[0].mxu0
    %836 = vdwg.mxu0
    %v838 = vsel %vm790, %v785, 0
    %v841 = vsel %vm790, %v787, 0
    %843 = vmatprep.subr.bf16.mxu0 0
    %844 = vmatpush1.bf16.xpose.msra.mxu0 %v841
    %845 = vmatprep.subr.bf16.mxu0 0
    %846 = vmatpush1.bf16.xpose.msra.mxu0 0
    %847 = vmatprep.subr.bf16.mxu0 0
    %848 = vmatpush1.bf16.xpose.msra.mxu0 0
    %849 = vmatprep.subr.bf16.mxu0 0
    %850 = vmatpush1.bf16.xpose.msra.mxu0 0
    %851 = vmatprep.subr.bf16.mxu0 0
    %852 = vmatpush1.bf16.xpose.msra.mxu0 0
    %853 = vmatprep.subr.bf16.mxu0 0
    %854 = vmatpush1.bf16.xpose.msra.mxu0 0
    %855 = vmatprep.subr.bf16.mxu0 0
    %856 = vmatpush1.bf16.xpose.msra.mxu0 0
    %857 = vmatprep.subr.bf16.mxu0 0
    %858 = vmatpush1.bf16.xpose.msra.mxu0 0
    %859 = vmatprep.subr.bf16.mxu0 0
    %860 = vmatpush1.bf16.xpose.msra.mxu0 0
    %861 = vmatprep.subr.bf16.mxu0 0
    %862 = vmatpush1.bf16.xpose.msra.mxu0 0
    %863 = vmatprep.subr.bf16.mxu0 0
    %864 = vmatpush1.bf16.xpose.msra.mxu0 0
    %865 = vmatprep.subr.bf16.mxu0 0
    %866 = vmatpush1.bf16.xpose.msra.mxu0 0
    %867 = vmatprep.subr.bf16.mxu0 0
    %868 = vmatpush1.bf16.xpose.msra.mxu0 0
    %869 = vmatprep.subr.bf16.mxu0 0
    %870 = vmatpush1.bf16.xpose.msra.mxu0 0
    %871 = vmatprep.subr.bf16.mxu0 0
    %872 = vmatpush1.bf16.xpose.msra.mxu0 0
    %873 = vmatprep.subr.bf16.mxu0 0
    %874 = vmatpush1.bf16.xpose.msra.mxu0 0
    %875 = vmatprep.mubr.bf16.mxu0 0
    %876 = vmatmul.mubr.bf16.gmra.mrb[0].mxu0 %v838
    %v877 = vpop.f32.mrb[0].mxu0
    %v878 = vadd.f32 0.0, %v877
    %v879 = vpop.f32.mrb[0].mxu0
    %v880 = vpop.f32.mrb[0].mxu0
    %v881 = vpop.f32.mrb[0].mxu0
    %882 = vdwg.mxu0
    %v883 = vmul.f32 %v832, 0.125
    %v884 = vmul.f32 %v878, 0.125
    %v887 = vlaneseq
    %v888 = vshrl.u32 %v887, 7
    %v889 = vsub.s32 0, %v888
    %v890 = vrot.slane %v381, %v889
    %v891 = vlaneseq
    %v892 = vshrl.u32 %v891, 7
    %v893 = vsub.s32 0, %v892
    %v894 = vrot.slane %v382, %v893
    %v897 = vadd.f32 %v883, %v890
    %v898 = vadd.f32 %v884, %v894
    %vm899 = vcmask 64512
    %v900 = vsel %vm899, %v897, -inf
    %901 = vmax.xlane.f32.xlu0 %v900
    %v902 = vpop.xlane.xlu0 %901
    %v903 = vsel %vm899, %v898, -inf
    %904 = vmax.xlane.f32.xlu0 %v903
    %v905 = vpop.xlane.xlu0 %904
    %v906 = vsub.f32 %v897, %v902
    %v907 = vsub.f32 %v898, %v905
    %v908 = vmul.f32 %v906, 1.442695
    %v909 = vpow.pop %v908
    %v910 = vmul.f32 %v907, 1.442695
    %v911 = vpow.pop %v910
    %v912 = vsel %vm899, %v909, 0.0
    %913 = vadd.xlane.f32.xlu0 %v912
    %v914 = vpop.xlane.xlu0 %913
    %v915 = vsel %vm899, %v911, 0.0
    %916 = vadd.xlane.f32.xlu0 %v915
    %v917 = vpop.xlane.xlu0 %916
    %v918 = vrcp.pop %v914
    %v919 = vrcp.pop %v917
    %v920 = vmul.f32 %v909, %v918
    %v921 = vmul.f32 %v911, %v919
    %v922 = vpack.c.bf16 %v920, %v920
    %v923 = vpack.c.bf16 %v921, %v921
    %v925 = vsel %vm899, %v922, 0
    %vm927 = vcmask 1043456
    %v929 = vsel %vm927, %v788, 0
    %931 = vmatprep.subr.bf16.mxu0 0
    %932 = vmatpush1.bf16.msra.mxu0 %v929
    %933 = vmatprep.subr.bf16.mxu0 0
    %934 = vmatpush1.bf16.msra.mxu0 0
    %935 = vmatprep.subr.bf16.mxu0 0
    %936 = vmatpush1.bf16.msra.mxu0 0
    %937 = vmatprep.subr.bf16.mxu0 0
    %938 = vmatpush1.bf16.msra.mxu0 0
    %939 = vmatprep.subr.bf16.mxu0 0
    %940 = vmatpush1.bf16.msra.mxu0 0
    %941 = vmatprep.subr.bf16.mxu0 0
    %942 = vmatpush1.bf16.msra.mxu0 0
    %943 = vmatprep.subr.bf16.mxu0 0
    %944 = vmatpush1.bf16.msra.mxu0 0
    %945 = vmatprep.subr.bf16.mxu0 0
    %946 = vmatpush1.bf16.msra.mxu0 0
    %947 = vmatprep.subr.bf16.mxu0 0
    %948 = vmatpush1.bf16.msra.mxu0 0
    %949 = vmatprep.subr.bf16.mxu0 0
    %950 = vmatpush1.bf16.msra.mxu0 0
    %951 = vmatprep.subr.bf16.mxu0 0
    %952 = vmatpush1.bf16.msra.mxu0 0
    %953 = vmatprep.subr.bf16.mxu0 0
    %954 = vmatpush1.bf16.msra.mxu0 0
    %955 = vmatprep.subr.bf16.mxu0 0
    %956 = vmatpush1.bf16.msra.mxu0 0
    %957 = vmatprep.subr.bf16.mxu0 0
    %958 = vmatpush1.bf16.msra.mxu0 0
    %959 = vmatprep.subr.bf16.mxu0 0
    %960 = vmatpush1.bf16.msra.mxu0 0
    %961 = vmatprep.subr.bf16.mxu0 0
    %962 = vmatpush1.bf16.msra.mxu0 0
    %963 = vmatprep.mubr.bf16.mxu0 0
    %964 = vmatmul.mubr.bf16.gmra.mrb[0].mxu0 %v925
    %v965 = vpop.f32.mrb[0].mxu0
    %v966 = vadd.f32 0.0, %v965
    %v967 = vpop.f32.mrb[0].mxu0
    %v968 = vpop.f32.mrb[0].mxu0
    %v969 = vpop.f32.mrb[0].mxu0
    %970 = vdwg.mxu0
    %v972 = vsel %vm899, %v923, 0
    %v975 = vsel %vm927, %v789, 0
    %977 = vmatprep.subr.bf16.mxu0 0
    %978 = vmatpush1.bf16.msra.mxu0 %v975
    %979 = vmatprep.subr.bf16.mxu0 0
    %980 = vmatpush1.bf16.msra.mxu0 0
    %981 = vmatprep.subr.bf16.mxu0 0
    %982 = vmatpush1.bf16.msra.mxu0 0
    %983 = vmatprep.subr.bf16.mxu0 0
    %984 = vmatpush1.bf16.msra.mxu0 0
    %985 = vmatprep.subr.bf16.mxu0 0
    %986 = vmatpush1.bf16.msra.mxu0 0
    %987 = vmatprep.subr.bf16.mxu0 0
    %988 = vmatpush1.bf16.msra.mxu0 0
    %989 = vmatprep.subr.bf16.mxu0 0
    %990 = vmatpush1.bf16.msra.mxu0 0
    %991 = vmatprep.subr.bf16.mxu0 0
    %992 = vmatpush1.bf16.msra.mxu0 0
    %993 = vmatprep.subr.bf16.mxu0 0
    %994 = vmatpush1.bf16.msra.mxu0 0
    %995 = vmatprep.subr.bf16.mxu0 0
    %996 = vmatpush1.bf16.msra.mxu0 0
    %997 = vmatprep.subr.bf16.mxu0 0
    %998 = vmatpush1.bf16.msra.mxu0 0
    %999 = vmatprep.subr.bf16.mxu0 0
    %1000 = vmatpush1.bf16.msra.mxu0 0
    %1001 = vmatprep.subr.bf16.mxu0 0
    %1002 = vmatpush1.bf16.msra.mxu0 0
    %1003 = vmatprep.subr.bf16.mxu0 0
    %1004 = vmatpush1.bf16.msra.mxu0 0
    %1005 = vmatprep.subr.bf16.mxu0 0
    %1006 = vmatpush1.bf16.msra.mxu0 0
    %1007 = vmatprep.subr.bf16.mxu0 0
    %1008 = vmatpush1.bf16.msra.mxu0 0
    %1009 = vmatprep.mubr.bf16.mxu0 0
    %1010 = vmatmul.mubr.bf16.gmra.mrb[0].mxu0 %v972
    %v1011 = vpop.f32.mrb[0].mxu0
    %v1012 = vadd.f32 0.0, %v1011
    %v1013 = vpop.f32.mrb[0].mxu0
    %v1014 = vpop.f32.mrb[0].mxu0
    %v1015 = vpop.f32.mrb[0].mxu0
    %1016 = vdwg.mxu0
    %v1017 = vpack.c.bf16 %v1012, %v966
    %1019 = vrot.lane.b32.xlu0 %v784, 64
    %v1020 = vpop.permute.xlu0 %1019
    %1022 = vrot.lane.b32.xlu0 %v786, 64
    %v1023 = vpop.permute.xlu0 %1022
    %v1025 = vsel %vm790, %v1020, 0
    %v1028 = vsel %vm790, %v1023, 0
    %1030 = vmatprep.subr.bf16.mxu0 0
    %1031 = vmatpush1.bf16.xpose.msra.mxu0 %v1028
    %1032 = vmatprep.subr.bf16.mxu0 0
    %1033 = vmatpush1.bf16.xpose.msra.mxu0 0
    %1034 = vmatprep.subr.bf16.mxu0 0
    %1035 = vmatpush1.bf16.xpose.msra.mxu0 0
    %1036 = vmatprep.subr.bf16.mxu0 0
    %1037 = vmatpush1.bf16.xpose.msra.mxu0 0
    %1038 = vmatprep.subr.bf16.mxu0 0
    %1039 = vmatpush1.bf16.xpose.msra.mxu0 0
    %1040 = vmatprep.subr.bf16.mxu0 0
    %1041 = vmatpush1.bf16.xpose.msra.mxu0 0
    %1042 = vmatprep.subr.bf16.mxu0 0
    %1043 = vmatpush1.bf16.xpose.msra.mxu0 0
    %1044 = vmatprep.subr.bf16.mxu0 0
    %1045 = vmatpush1.bf16.xpose.msra.mxu0 0
    %1046 = vmatprep.subr.bf16.mxu0 0
    %1047 = vmatpush1.bf16.xpose.msra.mxu0 0
    %1048 = vmatprep.subr.bf16.mxu0 0
    %1049 = vmatpush1.bf16.xpose.msra.mxu0 0
    %1050 = vmatprep.subr.bf16.mxu0 0
    %1051 = vmatpush1.bf16.xpose.msra.mxu0 0
    %1052 = vmatprep.subr.bf16.mxu0 0
    %1053 = vmatpush1.bf16.xpose.msra.mxu0 0
    %1054 = vmatprep.subr.bf16.mxu0 0
    %1055 = vmatpush1.bf16.xpose.msra.mxu0 0
    %1056 = vmatprep.subr.bf16.mxu0 0
    %1057 = vmatpush1.bf16.xpose.msra.mxu0 0
    %1058 = vmatprep.subr.bf16.mxu0 0
    %1059 = vmatpush1.bf16.xpose.msra.mxu0 0
    %1060 = vmatprep.subr.bf16.mxu0 0
    %1061 = vmatpush1.bf16.xpose.msra.mxu0 0
    %1062 = vmatprep.mubr.bf16.mxu0 0
    %1063 = vmatmul.mubr.bf16.gmra.mrb[0].mxu0 %v1025
    %v1064 = vpop.f32.mrb[0].mxu0
    %v1065 = vadd.f32 0.0, %v1064
    %v1066 = vpop.f32.mrb[0].mxu0
    %v1067 = vpop.f32.mrb[0].mxu0
    %v1068 = vpop.f32.mrb[0].mxu0
    %1069 = vdwg.mxu0
    %1071 = vrot.lane.b32.xlu0 %v785, 64
    %v1072 = vpop.permute.xlu0 %1071
    %1074 = vrot.lane.b32.xlu0 %v787, 64
    %v1075 = vpop.permute.xlu0 %1074
    %v1077 = vsel %vm790, %v1072, 0
    %v1080 = vsel %vm790, %v1075, 0
    %1082 = vmatprep.subr.bf16.mxu0 0
    %1083 = vmatpush1.bf16.xpose.msra.mxu0 %v1080
    %1084 = vmatprep.subr.bf16.mxu0 0
    %1085 = vmatpush1.bf16.xpose.msra.mxu0 0
    %1086 = vmatprep.subr.bf16.mxu0 0
    %1087 = vmatpush1.bf16.xpose.msra.mxu0 0
    %1088 = vmatprep.subr.bf16.mxu0 0
    %1089 = vmatpush1.bf16.xpose.msra.mxu0 0
    %1090 = vmatprep.subr.bf16.mxu0 0
    %1091 = vmatpush1.bf16.xpose.msra.mxu0 0
    %1092 = vmatprep.subr.bf16.mxu0 0
    %1093 = vmatpush1.bf16.xpose.msra.mxu0 0
    %1094 = vmatprep.subr.bf16.mxu0 0
    %1095 = vmatpush1.bf16.xpose.msra.mxu0 0
    %1096 = vmatprep.subr.bf16.mxu0 0
    %1097 = vmatpush1.bf16.xpose.msra.mxu0 0
    %1098 = vmatprep.subr.bf16.mxu0 0
    %1099 = vmatpush1.bf16.xpose.msra.mxu0 0
    %1100 = vmatprep.subr.bf16.mxu0 0
    %1101 = vmatpush1.bf16.xpose.msra.mxu0 0
    %1102 = vmatprep.subr.bf16.mxu0 0
    %1103 = vmatpush1.bf16.xpose.msra.mxu0 0
    %1104 = vmatprep.subr.bf16.mxu0 0
    %1105 = vmatpush1.bf16.xpose.msra.mxu0 0
    %1106 = vmatprep.subr.bf16.mxu0 0
    %1107 = vmatpush1.bf16.xpose.msra.mxu0 0
    %1108 = vmatprep.subr.bf16.mxu0 0
    %1109 = vmatpush1.bf16.xpose.msra.mxu0 0
    %1110 = vmatprep.subr.bf16.mxu0 0
    %1111 = vmatpush1.bf16.xpose.msra.mxu0 0
    %1112 = vmatprep.subr.bf16.mxu0 0
    %1113 = vmatpush1.bf16.xpose.msra.mxu0 0
    %1114 = vmatprep.mubr.bf16.mxu0 0
    %1115 = vmatmul.mubr.bf16.gmra.mrb[0].mxu0 %v1077
    %v1116 = vpop.f32.mrb[0].mxu0
    %v1117 = vadd.f32 0.0, %v1116
    %v1118 = vpop.f32.mrb[0].mxu0
    %v1119 = vpop.f32.mrb[0].mxu0
    %v1120 = vpop.f32.mrb[0].mxu0
    %1121 = vdwg.mxu0
    %v1122 = vmul.f32 %v1065, 0.125
    %v1123 = vmul.f32 %v1117, 0.125
    %v1124 = vadd.f32 %v1122, %v890
    %v1125 = vadd.f32 %v1123, %v894
    %v1126 = vsel %vm899, %v1124, -inf
    %1127 = vmax.xlane.f32.xlu0 %v1126
    %v1128 = vpop.xlane.xlu0 %1127
    %v1129 = vsel %vm899, %v1125, -inf
    %1130 = vmax.xlane.f32.xlu0 %v1129
    %v1131 = vpop.xlane.xlu0 %1130
    %v1132 = vsub.f32 %v1124, %v1128
    %v1133 = vsub.f32 %v1125, %v1131
    %v1134 = vmul.f32 %v1132, 1.442695
    %v1135 = vpow.pop %v1134
    %v1136 = vmul.f32 %v1133, 1.442695
    %v1137 = vpow.pop %v1136
    %v1138 = vsel %vm899, %v1135, 0.0
    %1139 = vadd.xlane.f32.xlu0 %v1138
    %v1140 = vpop.xlane.xlu0 %1139
    %v1141 = vsel %vm899, %v1137, 0.0
    %1142 = vadd.xlane.f32.xlu0 %v1141
    %v1143 = vpop.xlane.xlu0 %1142
    %v1144 = vrcp.pop %v1140
    %v1145 = vrcp.pop %v1143
    %v1146 = vmul.f32 %v1135, %v1144
    %v1147 = vmul.f32 %v1137, %v1145
    %v1148 = vpack.c.bf16 %v1146, %v1146
    %v1149 = vpack.c.bf16 %v1147, %v1147
    %1151 = vrot.lane.b32.xlu0 %v788, 64
    %v1152 = vpop.permute.xlu0 %1151
    %v1154 = vsel %vm899, %v1148, 0
    %v1157 = vsel %vm927, %v1152, 0
    %1159 = vmatprep.subr.bf16.mxu0 0
    %1160 = vmatpush1.bf16.msra.mxu0 %v1157
    %1161 = vmatprep.subr.bf16.mxu0 0
    %1162 = vmatpush1.bf16.msra.mxu0 0
    %1163 = vmatprep.subr.bf16.mxu0 0
    %1164 = vmatpush1.bf16.msra.mxu0 0
    %1165 = vmatprep.subr.bf16.mxu0 0
    %1166 = vmatpush1.bf16.msra.mxu0 0
    %1167 = vmatprep.subr.bf16.mxu0 0
    %1168 = vmatpush1.bf16.msra.mxu0 0
    %1169 = vmatprep.subr.bf16.mxu0 0
    %1170 = vmatpush1.bf16.msra.mxu0 0
    %1171 = vmatprep.subr.bf16.mxu0 0
    %1172 = vmatpush1.bf16.msra.mxu0 0
    %1173 = vmatprep.subr.bf16.mxu0 0
    %1174 = vmatpush1.bf16.msra.mxu0 0
    %1175 = vmatprep.subr.bf16.mxu0 0
    %1176 = vmatpush1.bf16.msra.mxu0 0
    %1177 = vmatprep.subr.bf16.mxu0 0
    %1178 = vmatpush1.bf16.msra.mxu0 0
    %1179 = vmatprep.subr.bf16.mxu0 0
    %1180 = vmatpush1.bf16.msra.mxu0 0
    %1181 = vmatprep.subr.bf16.mxu0 0
    %1182 = vmatpush1.bf16.msra.mxu0 0
    %1183 = vmatprep.subr.bf16.mxu0 0
    %1184 = vmatpush1.bf16.msra.mxu0 0
    %1185 = vmatprep.subr.bf16.mxu0 0
    %1186 = vmatpush1.bf16.msra.mxu0 0
    %1187 = vmatprep.subr.bf16.mxu0 0
    %1188 = vmatpush1.bf16.msra.mxu0 0
    %1189 = vmatprep.subr.bf16.mxu0 0
    %1190 = vmatpush1.bf16.msra.mxu0 0
    %1191 = vmatprep.mubr.bf16.mxu0 0
    %1192 = vmatmul.mubr.bf16.gmra.mrb[0].mxu0 %v1154
    %v1193 = vpop.f32.mrb[0].mxu0
    %v1194 = vadd.f32 0.0, %v1193
    %v1195 = vpop.f32.mrb[0].mxu0
    %v1196 = vpop.f32.mrb[0].mxu0
    %v1197 = vpop.f32.mrb[0].mxu0
    %1198 = vdwg.mxu0
    %1200 = vrot.lane.b32.xlu0 %v789, 64
    %v1201 = vpop.permute.xlu0 %1200
    %v1203 = vsel %vm899, %v1149, 0
    %v1206 = vsel %vm927, %v1201, 0
    %1208 = vmatprep.subr.bf16.mxu0 0
    %1209 = vmatpush1.bf16.msra.mxu0 %v1206
    %1210 = vmatprep.subr.bf16.mxu0 0
    %1211 = vmatpush1.bf16.msra.mxu0 0
    %1212 = vmatprep.subr.bf16.mxu0 0
    %1213 = vmatpush1.bf16.msra.mxu0 0
    %1214 = vmatprep.subr.bf16.mxu0 0
    %1215 = vmatpush1.bf16.msra.mxu0 0
    %1216 = vmatprep.subr.bf16.mxu0 0
    %1217 = vmatpush1.bf16.msra.mxu0 0
    %1218 = vmatprep.subr.bf16.mxu0 0
    %1219 = vmatpush1.bf16.msra.mxu0 0
    %1220 = vmatprep.subr.bf16.mxu0 0
    %1221 = vmatpush1.bf16.msra.mxu0 0
    %1222 = vmatprep.subr.bf16.mxu0 0
    %1223 = vmatpush1.bf16.msra.mxu0 0
    %1224 = vmatprep.subr.bf16.mxu0 0
    %1225 = vmatpush1.bf16.msra.mxu0 0
    %1226 = vmatprep.subr.bf16.mxu0 0
    %1227 = vmatpush1.bf16.msra.mxu0 0
    %1228 = vmatprep.subr.bf16.mxu0 0
    %1229 = vmatpush1.bf16.msra.mxu0 0
    %1230 = vmatprep.subr.bf16.mxu0 0
    %1231 = vmatpush1.bf16.msra.mxu0 0
    %1232 = vmatprep.subr.bf16.mxu0 0
    %1233 = vmatpush1.bf16.msra.mxu0 0
    %1234 = vmatprep.subr.bf16.mxu0 0
    %1235 = vmatpush1.bf16.msra.mxu0 0
    %1236 = vmatprep.subr.bf16.mxu0 0
    %1237 = vmatpush1.bf16.msra.mxu0 0
    %1238 = vmatprep.subr.bf16.mxu0 0
    %1239 = vmatpush1.bf16.msra.mxu0 0
    %1240 = vmatprep.mubr.bf16.mxu0 0
    %1241 = vmatmul.mubr.bf16.gmra.mrb[0].mxu0 %v1203
    %v1242 = vpop.f32.mrb[0].mxu0
    %v1243 = vadd.f32 0.0, %v1242
    %v1244 = vpop.f32.mrb[0].mxu0
    %v1245 = vpop.f32.mrb[0].mxu0
    %v1246 = vpop.f32.mrb[0].mxu0
    %1247 = vdwg.mxu0
    %v1248 = vpack.c.bf16 %v1243, %v1194
    %v1257 = vunpack.c.l.b16 %v439
    %v1258 = vunpack.c.l.b16 %v440
    %v1259 = vunpack.c.l.b16 %v441
    %v1260 = vunpack.c.l.b16 %v442
    %v1261 = vunpack.c.l.b16 %v443
    %v1262 = vunpack.c.l.b16 %v444
    %v1263 = vunpack.c.l.b16 %v445
    %v1264 = vunpack.c.l.b16 %v446
    %v1265 = vpack.c.b16 %v1258, %v1257
    %v1266 = vpack.c.b16 %v1260, %v1259
    %v1267 = vpack.c.b16 %v1262, %v1261
    %v1268 = vpack.c.b16 %v1264, %v1263
    %v1274 = vsel %vm790, %v1248, 0
    %1276 = vmatprep.subr.bf16.mxu0 0
    %1277 = vmatpush1.bf16.msra.mxu0 %v1265
    %1278 = vmatprep.subr.bf16.mxu0 0
    %1279 = vmatpush1.bf16.msra.mxu0 %v1266
    %1280 = vmatprep.subr.bf16.mxu0 0
    %1281 = vmatpush1.bf16.msra.mxu0 %v1267
    %1282 = vmatprep.subr.bf16.mxu0 0
    %1283 = vmatpush1.bf16.msra.mxu0 %v1268
    %1284 = vmatprep.subr.bf16.mxu0 0
    %1285 = vmatpush1.bf16.msra.mxu0 0
    %1286 = vmatprep.subr.bf16.mxu0 0
    %1287 = vmatpush1.bf16.msra.mxu0 0
    %1288 = vmatprep.subr.bf16.mxu0 0
    %1289 = vmatpush1.bf16.msra.mxu0 0
    %1290 = vmatprep.subr.bf16.mxu0 0
    %1291 = vmatpush1.bf16.msra.mxu0 0
    %1292 = vmatprep.subr.bf16.mxu0 0
    %1293 = vmatpush1.bf16.msra.mxu0 0
    %1294 = vmatprep.subr.bf16.mxu0 0
    %1295 = vmatpush1.bf16.msra.mxu0 0
    %1296 = vmatprep.subr.bf16.mxu0 0
    %1297 = vmatpush1.bf16.msra.mxu0 0
    %1298 = vmatprep.subr.bf16.mxu0 0
    %1299 = vmatpush1.bf16.msra.mxu0 0
    %1300 = vmatprep.subr.bf16.mxu0 0
    %1301 = vmatpush1.bf16.msra.mxu0 0
    %1302 = vmatprep.subr.bf16.mxu0 0
    %1303 = vmatpush1.bf16.msra.mxu0 0
    %1304 = vmatprep.subr.bf16.mxu0 0
    %1305 = vmatpush1.bf16.msra.mxu0 0
    %1306 = vmatprep.subr.bf16.mxu0 0
    %1307 = vmatpush1.bf16.msra.mxu0 0
    %1308 = vmatprep.mubr.bf16.mxu0 0
    %1309 = vmatmul.mubr.bf16.gmra.mrb[0].mxu0 %v1274
    %v1310 = vpop.f32.mrb[0].mxu0
    %v1311 = vadd.f32 0.0, %v1310
    %v1312 = vpop.f32.mrb[0].mxu0
    %v1313 = vpop.f32.mrb[0].mxu0
    %v1314 = vadd.f32 0.0, %v1313
    %v1315 = vpop.f32.mrb[0].mxu0
    %1316 = vdwg.mxu0
    %v1325 = vunpack.c.l.b16 %v431
    %v1326 = vunpack.c.l.b16 %v432
    %v1327 = vunpack.c.l.b16 %v433
    %v1328 = vunpack.c.l.b16 %v434
    %v1329 = vunpack.c.l.b16 %v435
    %v1330 = vunpack.c.l.b16 %v436
    %v1331 = vunpack.c.l.b16 %v437
    %v1332 = vunpack.c.l.b16 %v438
    %v1333 = vpack.c.b16 %v1326, %v1325
    %v1334 = vpack.c.b16 %v1328, %v1327
    %v1335 = vpack.c.b16 %v1330, %v1329
    %v1336 = vpack.c.b16 %v1332, %v1331
    %v1342 = vsel %vm790, %v1017, 0
    %1344 = vmatprep.subr.bf16.mxu0 0
    %1345 = vmatpush1.bf16.msra.mxu0 %v1333
    %1346 = vmatprep.subr.bf16.mxu0 0
    %1347 = vmatpush1.bf16.msra.mxu0 %v1334
    %1348 = vmatprep.subr.bf16.mxu0 0
    %1349 = vmatpush1.bf16.msra.mxu0 %v1335
    %1350 = vmatprep.subr.bf16.mxu0 0
    %1351 = vmatpush1.bf16.msra.mxu0 %v1336
    %1352 = vmatprep.subr.bf16.mxu0 0
    %1353 = vmatpush1.bf16.msra.mxu0 0
    %1354 = vmatprep.subr.bf16.mxu0 0
    %1355 = vmatpush1.bf16.msra.mxu0 0
    %1356 = vmatprep.subr.bf16.mxu0 0
    %1357 = vmatpush1.bf16.msra.mxu0 0
    %1358 = vmatprep.subr.bf16.mxu0 0
    %1359 = vmatpush1.bf16.msra.mxu0 0
    %1360 = vmatprep.subr.bf16.mxu0 0
    %1361 = vmatpush1.bf16.msra.mxu0 0
    %1362 = vmatprep.subr.bf16.mxu0 0
    %1363 = vmatpush1.bf16.msra.mxu0 0
    %1364 = vmatprep.subr.bf16.mxu0 0
    %1365 = vmatpush1.bf16.msra.mxu0 0
    %1366 = vmatprep.subr.bf16.mxu0 0
    %1367 = vmatpush1.bf16.msra.mxu0 0
    %1368 = vmatprep.subr.bf16.mxu0 0
    %1369 = vmatpush1.bf16.msra.mxu0 0
    %1370 = vmatprep.subr.bf16.mxu0 0
    %1371 = vmatpush1.bf16.msra.mxu0 0
    %1372 = vmatprep.subr.bf16.mxu0 0
    %1373 = vmatpush1.bf16.msra.mxu0 0
    %1374 = vmatprep.subr.bf16.mxu0 0
    %1375 = vmatpush1.bf16.msra.mxu0 0
    %1376 = vmatprep.mubr.bf16.mxu0 0
    %1377 = vmatmul.mubr.bf16.gmra.mrb[0].mxu0 %v1342
    %v1378 = vpop.f32.mrb[0].mxu0
    %v1379 = vadd.f32 %v1311, %v1378
    %v1380 = vpop.f32.mrb[0].mxu0
    %v1381 = vpop.f32.mrb[0].mxu0
    %v1382 = vadd.f32 %v1314, %v1381
    %v1383 = vpop.f32.mrb[0].mxu0
    %1384 = vdwg.mxu0
    %v1385 = vld [vmem:[#allocation20] sm:$0x1]
    %v1387 = vlaneseq
    %v1388 = vshrl.u32 %v1387, 7
    %v1389 = vsub.s32 0, %v1388
    %v1390 = vrot.slane %v1385, %v1389
    %v1392 = vadd.f32 %v1379, %v1390
    %v1393 = vadd.f32 %v1382, %v1390
    %v1394 = vadd.f32 %v375, %v1392
    %v1395 = vadd.f32 %v376, %v1393
    %v1396 = vld [vmem:[#allocation22] sm:$0x1]
    %v1397 = vld [vmem:[#allocation23] sm:$0x1]
    %1398 = vadd.xlane.f32.xlu0 %v1394
    %v1399 = vpop.xlane.xlu0 %1398
    %1400 = vadd.xlane.f32.xlu0 %v1395
    %v1401 = vpop.xlane.xlu0 %1400
    %v1402 = vmul.f32 %v1399, %v342
    %v1403 = vmul.f32 %v1401, %v342
    %v1404 = vsub.f32 %v1394, %v1402
    %v1405 = vsub.f32 %v1395, %v1403
    %v1406 = vmul.f32 %v1404, %v1404
    %v1407 = vmul.f32 %v1405, %v1405
    %1408 = vadd.xlane.f32.xlu0 %v1406
    %v1409 = vpop.xlane.xlu0 %1408
    %1410 = vadd.xlane.f32.xlu0 %v1407
    %v1411 = vpop.xlane.xlu0 %1410
    %v1412 = vmul.f32 %v1409, %v342
    %v1413 = vmul.f32 %v1411, %v342
    %v1414 = vadd.f32 %v1412, 1e-12
    %v1415 = vadd.f32 %v1413, 1e-12
    %v1416 = vrsqrt.pop %v1414
    %v1417 = vrsqrt.pop %v1415
    %v1418 = vmul.f32 %v1404, %v1416
    %v1419 = vmul.f32 %v1405, %v1417
    %v1421 = vlaneseq
    %v1422 = vshrl.u32 %v1421, 7
    %v1423 = vsub.s32 0, %v1422
    %v1424 = vrot.slane %v1396, %v1423
    %v1426 = vmul.f32 %v1418, %v1424
    %v1427 = vmul.f32 %v1419, %v1424
    %v1429 = vlaneseq
    %v1430 = vshrl.u32 %v1429, 7
    %v1431 = vsub.s32 0, %v1430
    %v1432 = vrot.slane %v1397, %v1431
    %v1434 = vadd.f32 %v1426, %v1432
    %v1435 = vadd.f32 %v1427, %v1432
    %v1436 = vpack.c.bf16 %v1435, %v1434
    %v1437 = vld [vmem:[#allocation26] sm:$0x3]
    %v1439 = vlaneseq
    %v1440 = vshrl.u32 %v1439, 7
    %v1441 = vsub.s32 0, %v1440
    %v1442 = vrot.slane %v1437, %v1441
    %v1443 = vlaneseq
    %v1444 = vshrl.u32 %v1443, 7
    %v1445 = vsub.s32 1, %v1444
    %v1446 = vrot.slane %v1437, %v1445
    %v1465 = vunpack.c.l.b16 %v447
    %v1466 = vunpack.c.h.b16 %v447
    %v1467 = vunpack.c.l.b16 %v448
    %v1468 = vunpack.c.h.b16 %v448
    %v1469 = vunpack.c.l.b16 %v449
    %v1470 = vunpack.c.h.b16 %v449
    %v1471 = vunpack.c.l.b16 %v450
    %v1472 = vunpack.c.h.b16 %v450
    %v1473 = vunpack.c.l.b16 %v451
    %v1474 = vunpack.c.h.b16 %v451
    %v1475 = vunpack.c.l.b16 %v452
    %v1476 = vunpack.c.h.b16 %v452
    %v1477 = vunpack.c.l.b16 %v453
    %v1478 = vunpack.c.h.b16 %v453
    %v1479 = vunpack.c.l.b16 %v454
    %v1480 = vunpack.c.h.b16 %v454
    %v1481 = vunpack.c.l.b16 %v455
    %v1482 = vunpack.c.h.b16 %v455
    %v1483 = vunpack.c.l.b16 %v456
    %v1484 = vunpack.c.h.b16 %v456
    %v1485 = vunpack.c.l.b16 %v457
    %v1486 = vunpack.c.h.b16 %v457
    %v1487 = vunpack.c.l.b16 %v458
    %v1488 = vunpack.c.h.b16 %v458
    %v1489 = vunpack.c.l.b16 %v459
    %v1490 = vunpack.c.h.b16 %v459
    %v1491 = vunpack.c.l.b16 %v460
    %v1492 = vunpack.c.h.b16 %v460
    %v1493 = vunpack.c.l.b16 %v461
    %v1494 = vunpack.c.h.b16 %v461
    %v1495 = vunpack.c.l.b16 %v462
    %v1496 = vunpack.c.h.b16 %v462
    %v1497 = vpack.c.b16 %v1467, %v1465
    %v1498 = vpack.c.b16 %v1468, %v1466
    %v1499 = vpack.c.b16 %v1471, %v1469
    %v1500 = vpack.c.b16 %v1472, %v1470
    %v1501 = vpack.c.b16 %v1475, %v1473
    %v1502 = vpack.c.b16 %v1476, %v1474
    %v1503 = vpack.c.b16 %v1479, %v1477
    %v1504 = vpack.c.b16 %v1480, %v1478
    %v1505 = vpack.c.b16 %v1483, %v1481
    %v1506 = vpack.c.b16 %v1484, %v1482
    %v1507 = vpack.c.b16 %v1487, %v1485
    %v1508 = vpack.c.b16 %v1488, %v1486
    %v1509 = vpack.c.b16 %v1491, %v1489
    %v1510 = vpack.c.b16 %v1492, %v1490
    %v1511 = vpack.c.b16 %v1495, %v1493
    %v1512 = vpack.c.b16 %v1496, %v1494
    %1529 = vmatprep.subr.bf16.mxu0 %v1498
    %1530 = vmatpush1.bf16.msra.mxu0 %v1497
    %1531 = vmatprep.subr.bf16.mxu0 %v1500
    %1532 = vmatpush1.bf16.msra.mxu0 %v1499
    %1533 = vmatprep.subr.bf16.mxu0 %v1502
    %1534 = vmatpush1.bf16.msra.mxu0 %v1501
    %1535 = vmatprep.subr.bf16.mxu0 %v1504
    %1536 = vmatpush1.bf16.msra.mxu0 %v1503
    %1537 = vmatprep.subr.bf16.mxu0 %v1506
    %1538 = vmatpush1.bf16.msra.mxu0 %v1505
    %1539 = vmatprep.subr.bf16.mxu0 %v1508
    %1540 = vmatpush1.bf16.msra.mxu0 %v1507
    %1541 = vmatprep.subr.bf16.mxu0 %v1510
    %1542 = vmatpush1.bf16.msra.mxu0 %v1509
    %1543 = vmatprep.subr.bf16.mxu0 %v1512
    %1544 = vmatpush1.bf16.msra.mxu0 %v1511
    %1545 = vmatprep.subr.bf16.mxu0 0
    %1546 = vmatpush1.bf16.msra.mxu0 0
    %1547 = vmatprep.subr.bf16.mxu0 0
    %1548 = vmatpush1.bf16.msra.mxu0 0
    %1549 = vmatprep.subr.bf16.mxu0 0
    %1550 = vmatpush1.bf16.msra.mxu0 0
    %1551 = vmatprep.subr.bf16.mxu0 0
    %1552 = vmatpush1.bf16.msra.mxu0 0
    %1553 = vmatprep.subr.bf16.mxu0 0
    %1554 = vmatpush1.bf16.msra.mxu0 0
    %1555 = vmatprep.subr.bf16.mxu0 0
    %1556 = vmatpush1.bf16.msra.mxu0 0
    %1557 = vmatprep.subr.bf16.mxu0 0
    %1558 = vmatpush1.bf16.msra.mxu0 0
    %1559 = vmatprep.subr.bf16.mxu0 0
    %1560 = vmatpush1.bf16.msra.mxu0 0
    %1561 = vmatprep.mubr.bf16.mxu0 0
    %1562 = vmatmul.mubr.bf16.gmra.mrb[0].mxu0 %v1436
    %v1563 = vpop.f32.mrb[0].mxu0
    %v1564 = vadd.f32 %v1442, %v1563
    %v1565 = vpop.f32.mrb[0].mxu0
    %v1566 = vadd.f32 %v1446, %v1565
    %v1567 = vpop.f32.mrb[0].mxu0
    %v1568 = vadd.f32 %v1442, %v1567
    %v1569 = vpop.f32.mrb[0].mxu0
    %v1570 = vadd.f32 %v1446, %v1569
    %1571 = vdwg.mxu0
    %v1572 = vmul.f32 %v1564, 0.5
    %v1573 = vmul.f32 %v1566, 0.5
    %v1574 = vmul.f32 %v1568, 0.5
    %v1575 = vmul.f32 %v1570, 0.5
    %v1576 = vmul.f32 %v1564, 0.044715
    %v1577 = vmul.f32 %v1566, 0.044715
    %v1578 = vmul.f32 %v1568, 0.044715
    %v1579 = vmul.f32 %v1570, 0.044715
    %v1580 = vmul.f32 %v1576, %v1564
    %v1581 = vmul.f32 %v1577, %v1566
    %v1582 = vmul.f32 %v1578, %v1568
    %v1583 = vmul.f32 %v1579, %v1570
    %v1584 = vmul.f32 %v1580, %v1564
    %v1585 = vmul.f32 %v1581, %v1566
    %v1586 = vmul.f32 %v1582, %v1568
    %v1587 = vmul.f32 %v1583, %v1570
    %v1588 = vadd.f32 %v1564, %v1584
    %v1589 = vadd.f32 %v1566, %v1585
    %v1590 = vadd.f32 %v1568, %v1586
    %v1591 = vadd.f32 %v1570, %v1587
    %v1592 = vmul.f32 %v1588, 0.7978846
    %v1593 = vmul.f32 %v1589, 0.7978846
    %v1594 = vmul.f32 %v1590, 0.7978846
    %v1595 = vmul.f32 %v1591, 0.7978846
    %v1596 = vtanh.pop %v1592
    %v1597 = vtanh.pop %v1593
    %v1598 = vtanh.pop %v1594
    %v1599 = vtanh.pop %v1595
    %v1600 = vadd.f32 %v1596, 1.0
    %v1601 = vadd.f32 %v1597, 1.0
    %v1602 = vadd.f32 %v1598, 1.0
    %v1603 = vadd.f32 %v1599, 1.0
    %v1604 = vmul.f32 %v1572, %v1600
    %v1605 = vmul.f32 %v1573, %v1601
    %v1606 = vmul.f32 %v1574, %v1602
    %v1607 = vmul.f32 %v1575, %v1603
    %v1608 = vpack.c.bf16 %v1606, %v1604
    %v1609 = vpack.c.bf16 %v1607, %v1605
    %v1610 = vld [vmem:[#allocation29] sm:$0x1]
    %v1612 = vlaneseq
    %v1613 = vshrl.u32 %v1612, 7
    %v1614 = vsub.s32 0, %v1613
    %v1615 = vrot.slane %v1610, %v1614
    %v1649 = vunpack.c.l.b16 %v463
    %v1650 = vunpack.c.l.b16 %v464
    %v1651 = vunpack.c.l.b16 %v465
    %v1652 = vunpack.c.l.b16 %v466
    %v1653 = vunpack.c.l.b16 %v467
    %v1654 = vunpack.c.l.b16 %v468
    %v1655 = vunpack.c.l.b16 %v469
    %v1656 = vunpack.c.l.b16 %v470
    %v1657 = vunpack.c.l.b16 %v471
    %v1658 = vunpack.c.l.b16 %v472
    %v1659 = vunpack.c.l.b16 %v473
    %v1660 = vunpack.c.l.b16 %v474
    %v1661 = vunpack.c.l.b16 %v475
    %v1662 = vunpack.c.l.b16 %v476
    %v1663 = vunpack.c.l.b16 %v477
    %v1664 = vunpack.c.l.b16 %v478
    %v1665 = vunpack.c.l.b16 %v479
    %v1666 = vunpack.c.l.b16 %v480
    %v1667 = vunpack.c.l.b16 %v481
    %v1668 = vunpack.c.l.b16 %v482
    %v1669 = vunpack.c.l.b16 %v483
    %v1670 = vunpack.c.l.b16 %v484
    %v1671 = vunpack.c.l.b16 %v485
    %v1672 = vunpack.c.l.b16 %v486
    %v1673 = vunpack.c.l.b16 %v487
    %v1674 = vunpack.c.l.b16 %v488
    %v1675 = vunpack.c.l.b16 %v489
    %v1676 = vunpack.c.l.b16 %v490
    %v1677 = vunpack.c.l.b16 %v491
    %v1678 = vunpack.c.l.b16 %v492
    %v1679 = vunpack.c.l.b16 %v493
    %v1680 = vunpack.c.l.b16 %v494
    %v1681 = vpack.c.b16 %v1650, %v1649
    %v1682 = vpack.c.b16 %v1652, %v1651
    %v1683 = vpack.c.b16 %v1654, %v1653
    %v1684 = vpack.c.b16 %v1656, %v1655
    %v1685 = vpack.c.b16 %v1658, %v1657
    %v1686 = vpack.c.b16 %v1660, %v1659
    %v1687 = vpack.c.b16 %v1662, %v1661
    %v1688 = vpack.c.b16 %v1664, %v1663
    %v1689 = vpack.c.b16 %v1666, %v1665
    %v1690 = vpack.c.b16 %v1668, %v1667
    %v1691 = vpack.c.b16 %v1670, %v1669
    %v1692 = vpack.c.b16 %v1672, %v1671
    %v1693 = vpack.c.b16 %v1674, %v1673
    %v1694 = vpack.c.b16 %v1676, %v1675
    %v1695 = vpack.c.b16 %v1678, %v1677
    %v1696 = vpack.c.b16 %v1680, %v1679
    %1713 = vmatprep.subr.bf16.mxu0 0
    %1714 = vmatpush1.bf16.msra.mxu0 %v1681
    %1715 = vmatprep.subr.bf16.mxu0 0
    %1716 = vmatpush1.bf16.msra.mxu0 %v1682
    %1717 = vmatprep.subr.bf16.mxu0 0
    %1718 = vmatpush1.bf16.msra.mxu0 %v1683
    %1719 = vmatprep.subr.bf16.mxu0 0
    %1720 = vmatpush1.bf16.msra.mxu0 %v1684
    %1721 = vmatprep.subr.bf16.mxu0 0
    %1722 = vmatpush1.bf16.msra.mxu0 %v1685
    %1723 = vmatprep.subr.bf16.mxu0 0
    %1724 = vmatpush1.bf16.msra.mxu0 %v1686
    %1725 = vmatprep.subr.bf16.mxu0 0
    %1726 = vmatpush1.bf16.msra.mxu0 %v1687
    %1727 = vmatprep.subr.bf16.mxu0 0
    %1728 = vmatpush1.bf16.msra.mxu0 %v1688
    %1729 = vmatprep.subr.bf16.mxu0 0
    %1730 = vmatpush1.bf16.msra.mxu0 %v1689
    %1731 = vmatprep.subr.bf16.mxu0 0
    %1732 = vmatpush1.bf16.msra.mxu0 %v1690
    %1733 = vmatprep.subr.bf16.mxu0 0
    %1734 = vmatpush1.bf16.msra.mxu0 %v1691
    %1735 = vmatprep.subr.bf16.mxu0 0
    %1736 = vmatpush1.bf16.msra.mxu0 %v1692
    %1737 = vmatprep.subr.bf16.mxu0 0
    %1738 = vmatpush1.bf16.msra.mxu0 %v1693
    %1739 = vmatprep.subr.bf16.mxu0 0
    %1740 = vmatpush1.bf16.msra.mxu0 %v1694
    %1741 = vmatprep.subr.bf16.mxu0 0
    %1742 = vmatpush1.bf16.msra.mxu0 %v1695
    %1743 = vmatprep.subr.bf16.mxu0 0
    %1744 = vmatpush1.bf16.msra.mxu0 %v1696
    %1745 = vmatprep.mubr.bf16.mxu0 %v1609
    %1746 = vmatmul.mubr.bf16.gmra.mrb[0].mxu0 %v1608
    %v1747 = vpop.f32.mrb[0].mxu0
    %v1748 = vadd.f32 %v1615, %v1747
    %v1749 = vpop.f32.mrb[0].mxu0
    %v1750 = vpop.f32.mrb[0].mxu0
    %v1751 = vadd.f32 %v1615, %v1750
    %v1752 = vpop.f32.mrb[0].mxu0
    %1753 = vdwg.mxu0
    %v1754 = vadd.f32 %v1434, %v1748
    %v1755 = vadd.f32 %v1435, %v1751
    %v1756 = vld [vmem:[#allocation31] sm:$0x1]
    %v1757 = vld [vmem:[#allocation32] sm:$0x1]
    %1758 = vadd.xlane.f32.xlu0 %v1754
    %v1759 = vpop.xlane.xlu0 %1758
    %1760 = vadd.xlane.f32.xlu0 %v1755
    %v1761 = vpop.xlane.xlu0 %1760
    %v1762 = vmul.f32 %v1759, %v342
    %v1763 = vmul.f32 %v1761, %v342
    %v1764 = vsub.f32 %v1754, %v1762
    %v1765 = vsub.f32 %v1755, %v1763
    %v1766 = vmul.f32 %v1764, %v1764
    %v1767 = vmul.f32 %v1765, %v1765
    %1768 = vadd.xlane.f32.xlu0 %v1766
    %v1769 = vpop.xlane.xlu0 %1768
    %1770 = vadd.xlane.f32.xlu0 %v1767
    %v1771 = vpop.xlane.xlu0 %1770
    %v1772 = vmul.f32 %v1769, %v342
    %v1773 = vmul.f32 %v1771, %v342
    %v1774 = vadd.f32 %v1772, 1e-12
    %v1775 = vadd.f32 %v1773, 1e-12
    %v1776 = vrsqrt.pop %v1774
    %v1777 = vrsqrt.pop %v1775
    %v1778 = vmul.f32 %v1764, %v1776
    %v1779 = vmul.f32 %v1765, %v1777
    %v1781 = vlaneseq
    %v1782 = vshrl.u32 %v1781, 7
    %v1783 = vsub.s32 0, %v1782
    %v1784 = vrot.slane %v1756, %v1783
    %v1786 = vmul.f32 %v1778, %v1784
    %v1787 = vmul.f32 %v1779, %v1784
    %v1789 = vlaneseq
    %v1790 = vshrl.u32 %v1789, 7
    %v1791 = vsub.s32 0, %v1790
    %v1792 = vrot.slane %v1757, %v1791
    %v1794 = vadd.f32 %v1786, %v1792
    %v1795 = vadd.f32 %v1787, %v1792
    %s1796 = scalar_lea.vmem [#allocation10], 64
    %v1797 = vld [vmem:[%s1796] sm:$0xf]
    %v1798 = vld [vmem:[%s1796 + $0x4] sm:$0xf]
    %v1799 = vld [vmem:[%s1796 + $0x8] sm:$0xf]
    %v1800 = vld [vmem:[%s1796 + $0xc] sm:$0xf]
    %v1801 = vld [vmem:[%s1796 + $0x10] sm:$0xf]
    %v1802 = vld [vmem:[%s1796 + $0x14] sm:$0xf]
    %v1803 = vld [vmem:[%s1796 + $0x18] sm:$0xf]
    %v1804 = vld [vmem:[%s1796 + $0x1c] sm:$0xf]
    %v1805 = vld [vmem:[%s1796 + $0x20] sm:$0xf]
    %v1806 = vld [vmem:[%s1796 + $0x24] sm:$0xf]
    %v1807 = vld [vmem:[%s1796 + $0x28] sm:$0xf]
    %v1808 = vld [vmem:[%s1796 + $0x2c] sm:$0xf]
    %v1809 = vld [vmem:[%s1796 + $0x30] sm:$0xf]
    %v1810 = vld [vmem:[%s1796 + $0x34] sm:$0xf]
    %v1811 = vld [vmem:[%s1796 + $0x38] sm:$0xf]
    %v1812 = vld [vmem:[%s1796 + $0x3c] sm:$0xf]
    %s1813 = scalar_lea.vmem [#allocation13], 64
    %v1814 = vld [vmem:[%s1813] sm:$0xf]
    %v1815 = vld [vmem:[%s1813 + $0x4] sm:$0xf]
    %v1816 = vld [vmem:[%s1813 + $0x8] sm:$0xf]
    %v1817 = vld [vmem:[%s1813 + $0xc] sm:$0xf]
    %v1818 = vld [vmem:[%s1813 + $0x10] sm:$0xf]
    %v1819 = vld [vmem:[%s1813 + $0x14] sm:$0xf]
    %v1820 = vld [vmem:[%s1813 + $0x18] sm:$0xf]
    %v1821 = vld [vmem:[%s1813 + $0x1c] sm:$0xf]
    %v1822 = vld [vmem:[%s1813 + $0x20] sm:$0xf]
    %v1823 = vld [vmem:[%s1813 + $0x24] sm:$0xf]
    %v1824 = vld [vmem:[%s1813 + $0x28] sm:$0xf]
    %v1825 = vld [vmem:[%s1813 + $0x2c] sm:$0xf]
    %v1826 = vld [vmem:[%s1813 + $0x30] sm:$0xf]
    %v1827 = vld [vmem:[%s1813 + $0x34] sm:$0xf]
    %v1828 = vld [vmem:[%s1813 + $0x38] sm:$0xf]
    %v1829 = vld [vmem:[%s1813 + $0x3c] sm:$0xf]
    %s1830 = scalar_lea.vmem [#allocation16], 64
    %v1831 = vld [vmem:[%s1830] sm:$0xf]
    %v1832 = vld [vmem:[%s1830 + $0x4] sm:$0xf]
    %v1833 = vld [vmem:[%s1830 + $0x8] sm:$0xf]
    %v1834 = vld [vmem:[%s1830 + $0xc] sm:$0xf]
    %v1835 = vld [vmem:[%s1830 + $0x10] sm:$0xf]
    %v1836 = vld [vmem:[%s1830 + $0x14] sm:$0xf]
    %v1837 = vld [vmem:[%s1830 + $0x18] sm:$0xf]
    %v1838 = vld [vmem:[%s1830 + $0x1c] sm:$0xf]
    %v1839 = vld [vmem:[%s1830 + $0x20] sm:$0xf]
    %v1840 = vld [vmem:[%s1830 + $0x24] sm:$0xf]
    %v1841 = vld [vmem:[%s1830 + $0x28] sm:$0xf]
    %v1842 = vld [vmem:[%s1830 + $0x2c] sm:$0xf]
    %v1843 = vld [vmem:[%s1830 + $0x30] sm:$0xf]
    %v1844 = vld [vmem:[%s1830 + $0x34] sm:$0xf]
    %v1845 = vld [vmem:[%s1830 + $0x38] sm:$0xf]
    %v1846 = vld [vmem:[%s1830 + $0x3c] sm:$0xf]
    %s1847 = scalar_lea.vmem [#allocation19], 64
    %v1848 = vld [vmem:[%s1847] sm:$0xf]
    %v1849 = vld [vmem:[%s1847 + $0x4] sm:$0xf]
    %v1850 = vld [vmem:[%s1847 + $0x8] sm:$0xf]
    %v1851 = vld [vmem:[%s1847 + $0xc] sm:$0xf]
    %v1852 = vld [vmem:[%s1847 + $0x10] sm:$0xf]
    %v1853 = vld [vmem:[%s1847 + $0x14] sm:$0xf]
    %v1854 = vld [vmem:[%s1847 + $0x18] sm:$0xf]
    %v1855 = vld [vmem:[%s1847 + $0x1c] sm:$0xf]
    %v1856 = vld [vmem:[%s1847 + $0x20] sm:$0xf]
    %v1857 = vld [vmem:[%s1847 + $0x24] sm:$0xf]
    %v1858 = vld [vmem:[%s1847 + $0x28] sm:$0xf]
    %v1859 = vld [vmem:[%s1847 + $0x2c] sm:$0xf]
    %v1860 = vld [vmem:[%s1847 + $0x30] sm:$0xf]
    %v1861 = vld [vmem:[%s1847 + $0x34] sm:$0xf]
    %v1862 = vld [vmem:[%s1847 + $0x38] sm:$0xf]
    %v1863 = vld [vmem:[%s1847 + $0x3c] sm:$0xf]
    %s1864 = scalar_lea.vmem [#allocation25], 128
    %v1865 = vld [vmem:[%s1864] sm:$0xff]
    %v1866 = vld [vmem:[%s1864 + $0x8] sm:$0xff]
    %v1867 = vld [vmem:[%s1864 + $0x10] sm:$0xff]
    %v1868 = vld [vmem:[%s1864 + $0x18] sm:$0xff]
    %v1869 = vld [vmem:[%s1864 + $0x20] sm:$0xff]
    %v1870 = vld [vmem:[%s1864 + $0x28] sm:$0xff]
    %v1871 = vld [vmem:[%s1864 + $0x30] sm:$0xff]
    %v1872 = vld [vmem:[%s1864 + $0x38] sm:$0xff]
    %v1873 = vld [vmem:[%s1864 + $0x40] sm:$0xff]
    %v1874 = vld [vmem:[%s1864 + $0x48] sm:$0xff]
    %v1875 = vld [vmem:[%s1864 + $0x50] sm:$0xff]
    %v1876 = vld [vmem:[%s1864 + $0x58] sm:$0xff]
    %v1877 = vld [vmem:[%s1864 + $0x60] sm:$0xff]
    %v1878 = vld [vmem:[%s1864 + $0x68] sm:$0xff]
    %v1879 = vld [vmem:[%s1864 + $0x70] sm:$0xff]
    %v1880 = vld [vmem:[%s1864 + $0x78] sm:$0xff]
    %s1881 = scalar_lea.vmem [#allocation28], 128
    %v1882 = vld [vmem:[%s1881] sm:$0xf]
    %v1883 = vld [vmem:[%s1881 + $0x4] sm:$0xf]
    %v1884 = vld [vmem:[%s1881 + $0x8] sm:$0xf]
    %v1885 = vld [vmem:[%s1881 + $0xc] sm:$0xf]
    %v1886 = vld [vmem:[%s1881 + $0x10] sm:$0xf]
    %v1887 = vld [vmem:[%s1881 + $0x14] sm:$0xf]
    %v1888 = vld [vmem:[%s1881 + $0x18] sm:$0xf]
    %v1889 = vld [vmem:[%s1881 + $0x1c] sm:$0xf]
    %v1890 = vld [vmem:[%s1881 + $0x20] sm:$0xf]
    %v1891 = vld [vmem:[%s1881 + $0x24] sm:$0xf]
    %v1892 = vld [vmem:[%s1881 + $0x28] sm:$0xf]
    %v1893 = vld [vmem:[%s1881 + $0x2c] sm:$0xf]
    %v1894 = vld [vmem:[%s1881 + $0x30] sm:$0xf]
    %v1895 = vld [vmem:[%s1881 + $0x34] sm:$0xf]
    %v1896 = vld [vmem:[%s1881 + $0x38] sm:$0xf]
    %v1897 = vld [vmem:[%s1881 + $0x3c] sm:$0xf]
    %v1898 = vld [vmem:[%s1881 + $0x40] sm:$0xf]
    %v1899 = vld [vmem:[%s1881 + $0x44] sm:$0xf]
    %v1900 = vld [vmem:[%s1881 + $0x48] sm:$0xf]
    %v1901 = vld [vmem:[%s1881 + $0x4c] sm:$0xf]
    %v1902 = vld [vmem:[%s1881 + $0x50] sm:$0xf]
    %v1903 = vld [vmem:[%s1881 + $0x54] sm:$0xf]
    %v1904 = vld [vmem:[%s1881 + $0x58] sm:$0xf]
    %v1905 = vld [vmem:[%s1881 + $0x5c] sm:$0xf]
    %v1906 = vld [vmem:[%s1881 + $0x60] sm:$0xf]
    %v1907 = vld [vmem:[%s1881 + $0x64] sm:$0xf]
    %v1908 = vld [vmem:[%s1881 + $0x68] sm:$0xf]
    %v1909 = vld [vmem:[%s1881 + $0x6c] sm:$0xf]
    %v1910 = vld [vmem:[%s1881 + $0x70] sm:$0xf]
    %v1911 = vld [vmem:[%s1881 + $0x74] sm:$0xf]
    %v1912 = vld [vmem:[%s1881 + $0x78] sm:$0xf]
    %v1913 = vld [vmem:[%s1881 + $0x7c] sm:$0xf]
    %v1914 = vpack.c.bf16 %v1795, %v1794
    %s1915 = scalar_lea.vmem [#allocation11], 1
    %v1916 = vld [vmem:[%s1915] sm:$0x1]
    %v1918 = vlaneseq
    %v1919 = vshrl.u32 %v1918, 7
    %v1920 = vsub.s32 0, %v1919
    %v1921 = vrot.slane %v1916, %v1920
    %v1939 = vunpack.c.l.b16 %v1797
    %v1940 = vunpack.c.l.b16 %v1798
    %v1941 = vunpack.c.l.b16 %v1799
    %v1942 = vunpack.c.l.b16 %v1800
    %v1943 = vunpack.c.l.b16 %v1801
    %v1944 = vunpack.c.l.b16 %v1802
    %v1945 = vunpack.c.l.b16 %v1803
    %v1946 = vunpack.c.l.b16 %v1804
    %v1947 = vunpack.c.l.b16 %v1805
    %v1948 = vunpack.c.l.b16 %v1806
    %v1949 = vunpack.c.l.b16 %v1807
    %v1950 = vunpack.c.l.b16 %v1808
    %v1951 = vunpack.c.l.b16 %v1809
    %v1952 = vunpack.c.l.b16 %v1810
    %v1953 = vunpack.c.l.b16 %v1811
    %v1954 = vunpack.c.l.b16 %v1812
    %v1955 = vpack.c.b16 %v1940, %v1939
    %v1956 = vpack.c.b16 %v1942, %v1941
    %v1957 = vpack.c.b16 %v1944, %v1943
    %v1958 = vpack.c.b16 %v1946, %v1945
    %v1959 = vpack.c.b16 %v1948, %v1947
    %v1960 = vpack.c.b16 %v1950, %v1949
    %v1961 = vpack.c.b16 %v1952, %v1951
    %v1962 = vpack.c.b16 %v1954, %v1953
    %1971 = vmatprep.subr.bf16.mxu0 0
    %1972 = vmatpush1.bf16.msra.mxu0 %v1955
    %1973 = vmatprep.subr.bf16.mxu0 0
    %1974 = vmatpush1.bf16.msra.mxu0 %v1956
    %1975 = vmatprep.subr.bf16.mxu0 0
    %1976 = vmatpush1.bf16.msra.mxu0 %v1957
    %1977 = vmatprep.subr.bf16.mxu0 0
    %1978 = vmatpush1.bf16.msra.mxu0 %v1958
    %1979 = vmatprep.subr.bf16.mxu0 0
    %1980 = vmatpush1.bf16.msra.mxu0 %v1959
    %1981 = vmatprep.subr.bf16.mxu0 0
    %1982 = vmatpush1.bf16.msra.mxu0 %v1960
    %1983 = vmatprep.subr.bf16.mxu0 0
    %1984 = vmatpush1.bf16.msra.mxu0 %v1961
    %1985 = vmatprep.subr.bf16.mxu0 0
    %1986 = vmatpush1.bf16.msra.mxu0 %v1962
    %1987 = vmatprep.subr.bf16.mxu0 0
    %1988 = vmatpush1.bf16.msra.mxu0 0
    %1989 = vmatprep.subr.bf16.mxu0 0
    %1990 = vmatpush1.bf16.msra.mxu0 0
    %1991 = vmatprep.subr.bf16.mxu0 0
    %1992 = vmatpush1.bf16.msra.mxu0 0
    %1993 = vmatprep.subr.bf16.mxu0 0
    %1994 = vmatpush1.bf16.msra.mxu0 0
    %1995 = vmatprep.subr.bf16.mxu0 0
    %1996 = vmatpush1.bf16.msra.mxu0 0
    %1997 = vmatprep.subr.bf16.mxu0 0
    %1998 = vmatpush1.bf16.msra.mxu0 0
    %1999 = vmatprep.subr.bf16.mxu0 0
    %2000 = vmatpush1.bf16.msra.mxu0 0
    %2001 = vmatprep.subr.bf16.mxu0 0
    %2002 = vmatpush1.bf16.msra.mxu0 0
    %2003 = vmatprep.mubr.bf16.mxu0 0
    %2004 = vmatmul.mubr.bf16.gmra.mrb[0].mxu0 %v1914
    %v2005 = vpop.f32.mrb[0].mxu0
    %v2006 = vadd.f32 %v1921, %v2005
    %v2007 = vpop.f32.mrb[0].mxu0
    %v2008 = vpop.f32.mrb[0].mxu0
    %v2009 = vadd.f32 %v1921, %v2008
    %v2010 = vpop.f32.mrb[0].mxu0
    %2011 = vdwg.mxu0
    %s2012 = scalar_lea.vmem [#allocation14], 1
    %v2013 = vld [vmem:[%s2012] sm:$0x1]
    %v2015 = vlaneseq
    %v2016 = vshrl.u32 %v2015, 7
    %v2017 = vsub.s32 0, %v2016
    %v2018 = vrot.slane %v2013, %v2017
    %v2036 = vunpack.c.l.b16 %v1814
    %v2037 = vunpack.c.l.b16 %v1815
    %v2038 = vunpack.c.l.b16 %v1816
    %v2039 = vunpack.c.l.b16 %v1817
    %v2040 = vunpack.c.l.b16 %v1818
    %v2041 = vunpack.c.l.b16 %v1819
    %v2042 = vunpack.c.l.b16 %v1820
    %v2043 = vunpack.c.l.b16 %v1821
    %v2044 = vunpack.c.l.b16 %v1822
    %v2045 = vunpack.c.l.b16 %v1823
    %v2046 = vunpack.c.l.b16 %v1824
    %v2047 = vunpack.c.l.b16 %v1825
    %v2048 = vunpack.c.l.b16 %v1826
    %v2049 = vunpack.c.l.b16 %v1827
    %v2050 = vunpack.c.l.b16 %v1828
    %v2051 = vunpack.c.l.b16 %v1829
    %v2052 = vpack.c.b16 %v2037, %v2036
    %v2053 = vpack.c.b16 %v2039, %v2038
    %v2054 = vpack.c.b16 %v2041, %v2040
    %v2055 = vpack.c.b16 %v2043, %v2042
    %v2056 = vpack.c.b16 %v2045, %v2044
    %v2057 = vpack.c.b16 %v2047, %v2046
    %v2058 = vpack.c.b16 %v2049, %v2048
    %v2059 = vpack.c.b16 %v2051, %v2050
    %2068 = vmatprep.subr.bf16.mxu0 0
    %2069 = vmatpush1.bf16.msra.mxu0 %v2052
    %2070 = vmatprep.subr.bf16.mxu0 0
    %2071 = vmatpush1.bf16.msra.mxu0 %v2053
    %2072 = vmatprep.subr.bf16.mxu0 0
    %2073 = vmatpush1.bf16.msra.mxu0 %v2054
    %2074 = vmatprep.subr.bf16.mxu0 0
    %2075 = vmatpush1.bf16.msra.mxu0 %v2055
    %2076 = vmatprep.subr.bf16.mxu0 0
    %2077 = vmatpush1.bf16.msra.mxu0 %v2056
    %2078 = vmatprep.subr.bf16.mxu0 0
    %2079 = vmatpush1.bf16.msra.mxu0 %v2057
    %2080 = vmatprep.subr.bf16.mxu0 0
    %2081 = vmatpush1.bf16.msra.mxu0 %v2058
    %2082 = vmatprep.subr.bf16.mxu0 0
    %2083 = vmatpush1.bf16.msra.mxu0 %v2059
    %2084 = vmatprep.subr.bf16.mxu0 0
    %2085 = vmatpush1.bf16.msra.mxu0 0
    %2086 = vmatprep.subr.bf16.mxu0 0
    %2087 = vmatpush1.bf16.msra.mxu0 0
    %2088 = vmatprep.subr.bf16.mxu0 0
    %2089 = vmatpush1.bf16.msra.mxu0 0
    %2090 = vmatprep.subr.bf16.mxu0 0
    %2091 = vmatpush1.bf16.msra.mxu0 0
    %2092 = vmatprep.subr.bf16.mxu0 0
    %2093 = vmatpush1.bf16.msra.mxu0 0
    %2094 = vmatprep.subr.bf16.mxu0 0
    %2095 = vmatpush1.bf16.msra.mxu0 0
    %2096 = vmatprep.subr.bf16.mxu0 0
    %2097 = vmatpush1.bf16.msra.mxu0 0
    %2098 = vmatprep.subr.bf16.mxu0 0
    %2099 = vmatpush1.bf16.msra.mxu0 0
    %2100 = vmatprep.mubr.bf16.mxu0 0
    %2101 = vmatmul.mubr.bf16.gmra.mrb[0].mxu0 %v1914
    %v2102 = vpop.f32.mrb[0].mxu0
    %v2103 = vadd.f32 %v2018, %v2102
    %v2104 = vpop.f32.mrb[0].mxu0
    %v2105 = vpop.f32.mrb[0].mxu0
    %v2106 = vadd.f32 %v2018, %v2105
    %v2107 = vpop.f32.mrb[0].mxu0
    %2108 = vdwg.mxu0
    %s2109 = scalar_lea.vmem [#allocation17], 1
    %v2110 = vld [vmem:[%s2109] sm:$0x1]
    %v2112 = vlaneseq
    %v2113 = vshrl.u32 %v2112, 7
    %v2114 = vsub.s32 0, %v2113
    %v2115 = vrot.slane %v2110, %v2114
    %v2133 = vunpack.c.l.b16 %v1831
    %v2134 = vunpack.c.l.b16 %v1832
    %v2135 = vunpack.c.l.b16 %v1833
    %v2136 = vunpack.c.l.b16 %v1834
    %v2137 = vunpack.c.l.b16 %v1835
    %v2138 = vunpack.c.l.b16 %v1836
    %v2139 = vunpack.c.l.b16 %v1837
    %v2140 = vunpack.c.l.b16 %v1838
    %v2141 = vunpack.c.l.b16 %v1839
    %v2142 = vunpack.c.l.b16 %v1840
    %v2143 = vunpack.c.l.b16 %v1841
    %v2144 = vunpack.c.l.b16 %v1842
    %v2145 = vunpack.c.l.b16 %v1843
    %v2146 = vunpack.c.l.b16 %v1844
    %v2147 = vunpack.c.l.b16 %v1845
    %v2148 = vunpack.c.l.b16 %v1846
    %v2149 = vpack.c.b16 %v2134, %v2133
    %v2150 = vpack.c.b16 %v2136, %v2135
    %v2151 = vpack.c.b16 %v2138, %v2137
    %v2152 = vpack.c.b16 %v2140, %v2139
    %v2153 = vpack.c.b16 %v2142, %v2141
    %v2154 = vpack.c.b16 %v2144, %v2143
    %v2155 = vpack.c.b16 %v2146, %v2145
    %v2156 = vpack.c.b16 %v2148, %v2147
    %2165 = vmatprep.subr.bf16.mxu0 0
    %2166 = vmatpush1.bf16.msra.mxu0 %v2149
    %2167 = vmatprep.subr.bf16.mxu0 0
    %2168 = vmatpush1.bf16.msra.mxu0 %v2150
    %2169 = vmatprep.subr.bf16.mxu0 0
    %2170 = vmatpush1.bf16.msra.mxu0 %v2151
    %2171 = vmatprep.subr.bf16.mxu0 0
    %2172 = vmatpush1.bf16.msra.mxu0 %v2152
    %2173 = vmatprep.subr.bf16.mxu0 0
    %2174 = vmatpush1.bf16.msra.mxu0 %v2153
    %2175 = vmatprep.subr.bf16.mxu0 0
    %2176 = vmatpush1.bf16.msra.mxu0 %v2154
    %2177 = vmatprep.subr.bf16.mxu0 0
    %2178 = vmatpush1.bf16.msra.mxu0 %v2155
    %2179 = vmatprep.subr.bf16.mxu0 0
    %2180 = vmatpush1.bf16.msra.mxu0 %v2156
    %2181 = vmatprep.subr.bf16.mxu0 0
    %2182 = vmatpush1.bf16.msra.mxu0 0
    %2183 = vmatprep.subr.bf16.mxu0 0
    %2184 = vmatpush1.bf16.msra.mxu0 0
    %2185 = vmatprep.subr.bf16.mxu0 0
    %2186 = vmatpush1.bf16.msra.mxu0 0
    %2187 = vmatprep.subr.bf16.mxu0 0
    %2188 = vmatpush1.bf16.msra.mxu0 0
    %2189 = vmatprep.subr.bf16.mxu0 0
    %2190 = vmatpush1.bf16.msra.mxu0 0
    %2191 = vmatprep.subr.bf16.mxu0 0
    %2192 = vmatpush1.bf16.msra.mxu0 0
    %2193 = vmatprep.subr.bf16.mxu0 0
    %2194 = vmatpush1.bf16.msra.mxu0 0
    %2195 = vmatprep.subr.bf16.mxu0 0
    %2196 = vmatpush1.bf16.msra.mxu0 0
    %2197 = vmatprep.mubr.bf16.mxu0 0
    %2198 = vmatmul.mubr.bf16.gmra.mrb[0].mxu0 %v1914
    %v2199 = vpop.f32.mrb[0].mxu0
    %v2200 = vadd.f32 %v2115, %v2199
    %v2201 = vpop.f32.mrb[0].mxu0
    %v2202 = vpop.f32.mrb[0].mxu0
    %v2203 = vadd.f32 %v2115, %v2202
    %v2204 = vpop.f32.mrb[0].mxu0
    %2205 = vdwg.mxu0
    %v2206 = vpack.c.bf16 %v2006, %v2006
    %v2207 = vpack.c.bf16 %v2009, %v2009
    %v2208 = vpack.c.bf16 %v2103, %v2103
    %v2209 = vpack.c.bf16 %v2106, %v2106
    %v2210 = vpack.c.bf16 %v2200, %v2200
    %v2211 = vpack.c.bf16 %v2203, %v2203
    %v2213 = vsel %vm790, %v2206, 0
    %v2216 = vsel %vm790, %v2208, 0
    %2218 = vmatprep.subr.bf16.mxu0 0
    %2219 = vmatpush1.bf16.xpose.msra.mxu0 %v2216
    %2220 = vmatprep.subr.bf16.mxu0 0
    %2221 = vmatpush1.bf16.xpose.msra.mxu0 0
    %2222 = vmatprep.subr.bf16.mxu0 0
    %2223 = vmatpush1.bf16.xpose.msra.mxu0 0
    %2224 = vmatprep.subr.bf16.mxu0 0
    %2225 = vmatpush1.bf16.xpose.msra.mxu0 0
    %2226 = vmatprep.subr.bf16.mxu0 0
    %2227 = vmatpush1.bf16.xpose.msra.mxu0 0
    %2228 = vmatprep.subr.bf16.mxu0 0
    %2229 = vmatpush1.bf16.xpose.msra.mxu0 0
    %2230 = vmatprep.subr.bf16.mxu0 0
    %2231 = vmatpush1.bf16.xpose.msra.mxu0 0
    %2232 = vmatprep.subr.bf16.mxu0 0
    %2233 = vmatpush1.bf16.xpose.msra.mxu0 0
    %2234 = vmatprep.subr.bf16.mxu0 0
    %2235 = vmatpush1.bf16.xpose.msra.mxu0 0
    %2236 = vmatprep.subr.bf16.mxu0 0
    %2237 = vmatpush1.bf16.xpose.msra.mxu0 0
    %2238 = vmatprep.subr.bf16.mxu0 0
    %2239 = vmatpush1.bf16.xpose.msra.mxu0 0
    %2240 = vmatprep.subr.bf16.mxu0 0
    %2241 = vmatpush1.bf16.xpose.msra.mxu0 0
    %2242 = vmatprep.subr.bf16.mxu0 0
    %2243 = vmatpush1.bf16.xpose.msra.mxu0 0
    %2244 = vmatprep.subr.bf16.mxu0 0
    %2245 = vmatpush1.bf16.xpose.msra.mxu0 0
    %2246 = vmatprep.subr.bf16.mxu0 0
    %2247 = vmatpush1.bf16.xpose.msra.mxu0 0
    %2248 = vmatprep.subr.bf16.mxu0 0
    %2249 = vmatpush1.bf16.xpose.msra.mxu0 0
    %2250 = vmatprep.mubr.bf16.mxu0 0
    %2251 = vmatmul.mubr.bf16.gmra.mrb[0].mxu0 %v2213
    %v2252 = vpop.f32.mrb[0].mxu0
    %v2253 = vadd.f32 0.0, %v2252
    %v2254 = vpop.f32.mrb[0].mxu0
    %v2255 = vpop.f32.mrb[0].mxu0
    %v2256 = vpop.f32.mrb[0].mxu0
    %2257 = vdwg.mxu0
    %v2259 = vsel %vm790, %v2207, 0
    %v2262 = vsel %vm790, %v2209, 0
    %2264 = vmatprep.subr.bf16.mxu0 0
    %2265 = vmatpush1.bf16.xpose.msra.mxu0 %v2262
    %2266 = vmatprep.subr.bf16.mxu0 0
    %2267 = vmatpush1.bf16.xpose.msra.mxu0 0
    %2268 = vmatprep.subr.bf16.mxu0 0
    %2269 = vmatpush1.bf16.xpose.msra.mxu0 0
    %2270 = vmatprep.subr.bf16.mxu0 0
    %2271 = vmatpush1.bf16.xpose.msra.mxu0 0
    %2272 = vmatprep.subr.bf16.mxu0 0
    %2273 = vmatpush1.bf16.xpose.msra.mxu0 0
    %2274 = vmatprep.subr.bf16.mxu0 0
    %2275 = vmatpush1.bf16.xpose.msra.mxu0 0
    %2276 = vmatprep.subr.bf16.mxu0 0
    %2277 = vmatpush1.bf16.xpose.msra.mxu0 0
    %2278 = vmatprep.subr.bf16.mxu0 0
    %2279 = vmatpush1.bf16.xpose.msra.mxu0 0
    %2280 = vmatprep.subr.bf16.mxu0 0
    %2281 = vmatpush1.bf16.xpose.msra.mxu0 0
    %2282 = vmatprep.subr.bf16.mxu0 0
    %2283 = vmatpush1.bf16.xpose.msra.mxu0 0
    %2284 = vmatprep.subr.bf16.mxu0 0
    %2285 = vmatpush1.bf16.xpose.msra.mxu0 0
    %2286 = vmatprep.subr.bf16.mxu0 0
    %2287 = vmatpush1.bf16.xpose.msra.mxu0 0
    %2288 = vmatprep.subr.bf16.mxu0 0
    %2289 = vmatpush1.bf16.xpose.msra.mxu0 0
    %2290 = vmatprep.subr.bf16.mxu0 0
    %2291 = vmatpush1.bf16.xpose.msra.mxu0 0
    %2292 = vmatprep.subr.bf16.mxu0 0
    %2293 = vmatpush1.bf16.xpose.msra.mxu0 0
    %2294 = vmatprep.subr.bf16.mxu0 0
    %2295 = vmatpush1.bf16.xpose.msra.mxu0 0
    %2296 = vmatprep.mubr.bf16.mxu0 0
    %2297 = vmatmul.mubr.bf16.gmra.mrb[0].mxu0 %v2259
    %v2298 = vpop.f32.mrb[0].mxu0
    %v2299 = vadd.f32 0.0, %v2298
    %v2300 = vpop.f32.mrb[0].mxu0
    %v2301 = vpop.f32.mrb[0].mxu0
    %v2302 = vpop.f32.mrb[0].mxu0
    %2303 = vdwg.mxu0
    %v2304 = vmul.f32 %v2253, 0.125
    %v2305 = vmul.f32 %v2299, 0.125
    %v2306 = vadd.f32 %v2304, %v890
    %v2307 = vadd.f32 %v2305, %v894
    %v2308 = vsel %vm899, %v2306, -inf
    %2309 = vmax.xlane.f32.xlu0 %v2308
    %v2310 = vpop.xlane.xlu0 %2309
    %v2311 = vsel %vm899, %v2307, -inf
    %2312 = vmax.xlane.f32.xlu0 %v2311
    %v2313 = vpop.xlane.xlu0 %2312
    %v2314 = vsub.f32 %v2306, %v2310
    %v2315 = vsub.f32 %v2307, %v2313
    %v2316 = vmul.f32 %v2314, 1.442695
    %v2317 = vpow.pop %v2316
    %v2318 = vmul.f32 %v2315, 1.442695
    %v2319 = vpow.pop %v2318
    %v2320 = vsel %vm899, %v2317, 0.0
    %2321 = vadd.xlane.f32.xlu0 %v2320
    %v2322 = vpop.xlane.xlu0 %2321
    %v2323 = vsel %vm899, %v2319, 0.0
    %2324 = vadd.xlane.f32.xlu0 %v2323
    %v2325 = vpop.xlane.xlu0 %2324
    %v2326 = vrcp.pop %v2322
    %v2327 = vrcp.pop %v2325
    %v2328 = vmul.f32 %v2317, %v2326
    %v2329 = vmul.f32 %v2319, %v2327
    %v2330 = vpack.c.bf16 %v2328, %v2328
    %v2331 = vpack.c.bf16 %v2329, %v2329
    %v2333 = vsel %vm899, %v2330, 0
    %v2336 = vsel %vm927, %v2210, 0
    %2338 = vmatprep.subr.bf16.mxu0 0
    %2339 = vmatpush1.bf16.msra.mxu0 %v2336
    %2340 = vmatprep.subr.bf16.mxu0 0
    %2341 = vmatpush1.bf16.msra.mxu0 0
    %2342 = vmatprep.subr.bf16.mxu0 0
    %2343 = vmatpush1.bf16.msra.mxu0 0
    %2344 = vmatprep.subr.bf16.mxu0 0
    %2345 = vmatpush1.bf16.msra.mxu0 0
    %2346 = vmatprep.subr.bf16.mxu0 0
    %2347 = vmatpush1.bf16.msra.mxu0 0
    %2348 = vmatprep.subr.bf16.mxu0 0
    %2349 = vmatpush1.bf16.msra.mxu0 0
    %2350 = vmatprep.subr.bf16.mxu0 0
    %2351 = vmatpush1.bf16.msra.mxu0 0
    %2352 = vmatprep.subr.bf16.mxu0 0
    %2353 = vmatpush1.bf16.msra.mxu0 0
    %2354 = vmatprep.subr.bf16.mxu0 0
    %2355 = vmatpush1.bf16.msra.mxu0 0
    %2356 = vmatprep.subr.bf16.mxu0 0
    %2357 = vmatpush1.bf16.msra.mxu0 0
    %2358 = vmatprep.subr.bf16.mxu0 0
    %2359 = vmatpush1.bf16.msra.mxu0 0
    %2360 = vmatprep.subr.bf16.mxu0 0
    %2361 = vmatpush1.bf16.msra.mxu0 0
    %2362 = vmatprep.subr.bf16.mxu0 0
    %2363 = vmatpush1.bf16.msra.mxu0 0
    %2364 = vmatprep.subr.bf16.mxu0 0
    %2365 = vmatpush1.bf16.msra.mxu0 0
    %2366 = vmatprep.subr.bf16.mxu0 0
    %2367 = vmatpush1.bf16.msra.mxu0 0
    %2368 = vmatprep.subr.bf16.mxu0 0
    %2369 = vmatpush1.bf16.msra.mxu0 0
    %2370 = vmatprep.mubr.bf16.mxu0 0
    %2371 = vmatmul.mubr.bf16.gmra.mrb[0].mxu0 %v2333
    %v2372 = vpop.f32.mrb[0].mxu0
    %v2373 = vadd.f32 0.0, %v2372
    %v2374 = vpop.f32.mrb[0].mxu0
    %v2375 = vpop.f32.mrb[0].mxu0
    %v2376 = vpop.f32.mrb[0].mxu0
    %2377 = vdwg.mxu0
    %v2379 = vsel %vm899, %v2331, 0
    %v2382 = vsel %vm927, %v2211, 0
    %2384 = vmatprep.subr.bf16.mxu0 0
    %2385 = vmatpush1.bf16.msra.mxu0 %v2382
    %2386 = vmatprep.subr.bf16.mxu0 0
    %2387 = vmatpush1.bf16.msra.mxu0 0
    %2388 = vmatprep.subr.bf16.mxu0 0
    %2389 = vmatpush1.bf16.msra.mxu0 0
    %2390 = vmatprep.subr.bf16.mxu0 0
    %2391 = vmatpush1.bf16.msra.mxu0 0
    %2392 = vmatprep.subr.bf16.mxu0 0
    %2393 = vmatpush1.bf16.msra.mxu0 0
    %2394 = vmatprep.subr.bf16.mxu0 0
    %2395 = vmatpush1.bf16.msra.mxu0 0
    %2396 = vmatprep.subr.bf16.mxu0 0
    %2397 = vmatpush1.bf16.msra.mxu0 0
    %2398 = vmatprep.subr.bf16.mxu0 0
    %2399 = vmatpush1.bf16.msra.mxu0 0
    %2400 = vmatprep.subr.bf16.mxu0 0
    %2401 = vmatpush1.bf16.msra.mxu0 0
    %2402 = vmatprep.subr.bf16.mxu0 0
    %2403 = vmatpush1.bf16.msra.mxu0 0
    %2404 = vmatprep.subr.bf16.mxu0 0
    %2405 = vmatpush1.bf16.msra.mxu0 0
    %2406 = vmatprep.subr.bf16.mxu0 0
    %2407 = vmatpush1.bf16.msra.mxu0 0
    %2408 = vmatprep.subr.bf16.mxu0 0
    %2409 = vmatpush1.bf16.msra.mxu0 0
    %2410 = vmatprep.subr.bf16.mxu0 0
    %2411 = vmatpush1.bf16.msra.mxu0 0
    %2412 = vmatprep.subr.bf16.mxu0 0
    %2413 = vmatpush1.bf16.msra.mxu0 0
    %2414 = vmatprep.subr.bf16.mxu0 0
    %2415 = vmatpush1.bf16.msra.mxu0 0
    %2416 = vmatprep.mubr.bf16.mxu0 0
    %2417 = vmatmul.mubr.bf16.gmra.mrb[0].mxu0 %v2379
    %v2418 = vpop.f32.mrb[0].mxu0
    %v2419 = vadd.f32 0.0, %v2418
    %v2420 = vpop.f32.mrb[0].mxu0
    %v2421 = vpop.f32.mrb[0].mxu0
    %v2422 = vpop.f32.mrb[0].mxu0
    %2423 = vdwg.mxu0
    %v2424 = vpack.c.bf16 %v2419, %v2373
    %2426 = vrot.lane.b32.xlu0 %v2206, 64
    %v2427 = vpop.permute.xlu0 %2426
    %2429 = vrot.lane.b32.xlu0 %v2208, 64
    %v2430 = vpop.permute.xlu0 %2429
    %v2432 = vsel %vm790, %v2427, 0
    %v2435 = vsel %vm790, %v2430, 0
    %2437 = vmatprep.subr.bf16.mxu0 0
    %2438 = vmatpush1.bf16.xpose.msra.mxu0 %v2435
    %2439 = vmatprep.subr.bf16.mxu0 0
    %2440 = vmatpush1.bf16.xpose.msra.mxu0 0
    %2441 = vmatprep.subr.bf16.mxu0 0
    %2442 = vmatpush1.bf16.xpose.msra.mxu0 0
    %2443 = vmatprep.subr.bf16.mxu0 0
    %2444 = vmatpush1.bf16.xpose.msra.mxu0 0
    %2445 = vmatprep.subr.bf16.mxu0 0
    %2446 = vmatpush1.bf16.xpose.msra.mxu0 0
    %2447 = vmatprep.subr.bf16.mxu0 0
    %2448 = vmatpush1.bf16.xpose.msra.mxu0 0
    %2449 = vmatprep.subr.bf16.mxu0 0
    %2450 = vmatpush1.bf16.xpose.msra.mxu0 0
    %2451 = vmatprep.subr.bf16.mxu0 0
    %2452 = vmatpush1.bf16.xpose.msra.mxu0 0
    %2453 = vmatprep.subr.bf16.mxu0 0
    %2454 = vmatpush1.bf16.xpose.msra.mxu0 0
    %2455 = vmatprep.subr.bf16.mxu0 0
    %2456 = vmatpush1.bf16.xpose.msra.mxu0 0
    %2457 = vmatprep.subr.bf16.mxu0 0
    %2458 = vmatpush1.bf16.xpose.msra.mxu0 0
    %2459 = vmatprep.subr.bf16.mxu0 0
    %2460 = vmatpush1.bf16.xpose.msra.mxu0 0
    %2461 = vmatprep.subr.bf16.mxu0 0
    %2462 = vmatpush1.bf16.xpose.msra.mxu0 0
    %2463 = vmatprep.subr.bf16.mxu0 0
    %2464 = vmatpush1.bf16.xpose.msra.mxu0 0
    %2465 = vmatprep.subr.bf16.mxu0 0
    %2466 = vmatpush1.bf16.xpose.msra.mxu0 0
    %2467 = vmatprep.subr.bf16.mxu0 0
    %2468 = vmatpush1.bf16.xpose.msra.mxu0 0
    %2469 = vmatprep.mubr.bf16.mxu0 0
    %2470 = vmatmul.mubr.bf16.gmra.mrb[0].mxu0 %v2432
    %v2471 = vpop.f32.mrb[0].mxu0
    %v2472 = vadd.f32 0.0, %v2471
    %v2473 = vpop.f32.mrb[0].mxu0
    %v2474 = vpop.f32.mrb[0].mxu0
    %v2475 = vpop.f32.mrb[0].mxu0
    %2476 = vdwg.mxu0
    %2478 = vrot.lane.b32.xlu0 %v2207, 64
    %v2479 = vpop.permute.xlu0 %2478
    %2481 = vrot.lane.b32.xlu0 %v2209, 64
    %v2482 = vpop.permute.xlu0 %2481
    %v2484 = vsel %vm790, %v2479, 0
    %v2487 = vsel %vm790, %v2482, 0
    %2489 = vmatprep.subr.bf16.mxu0 0
    %2490 = vmatpush1.bf16.xpose.msra.mxu0 %v2487
    %2491 = vmatprep.subr.bf16.mxu0 0
    %2492 = vmatpush1.bf16.xpose.msra.mxu0 0
    %2493 = vmatprep.subr.bf16.mxu0 0
    %2494 = vmatpush1.bf16.xpose.msra.mxu0 0
    %2495 = vmatprep.subr.bf16.mxu0 0
    %2496 = vmatpush1.bf16.xpose.msra.mxu0 0
    %2497 = vmatprep.subr.bf16.mxu0 0
    %2498 = vmatpush1.bf16.xpose.msra.mxu0 0
    %2499 = vmatprep.subr.bf16.mxu0 0
    %2500 = vmatpush1.bf16.xpose.msra.mxu0 0
    %2501 = vmatprep.subr.bf16.mxu0 0
    %2502 = vmatpush1.bf16.xpose.msra.mxu0 0
    %2503 = vmatprep.subr.bf16.mxu0 0
    %2504 = vmatpush1.bf16.xpose.msra.mxu0 0
    %2505 = vmatprep.subr.bf16.mxu0 0
    %2506 = vmatpush1.bf16.xpose.msra.mxu0 0
    %2507 = vmatprep.subr.bf16.mxu0 0
    %2508 = vmatpush1.bf16.xpose.msra.mxu0 0
    %2509 = vmatprep.subr.bf16.mxu0 0
    %2510 = vmatpush1.bf16.xpose.msra.mxu0 0
    %2511 = vmatprep.subr.bf16.mxu0 0
    %2512 = vmatpush1.bf16.xpose.msra.mxu0 0
    %2513 = vmatprep.subr.bf16.mxu0 0
    %2514 = vmatpush1.bf16.xpose.msra.mxu0 0
    %2515 = vmatprep.subr.bf16.mxu0 0
    %2516 = vmatpush1.bf16.xpose.msra.mxu0 0
    %2517 = vmatprep.subr.bf16.mxu0 0
    %2518 = vmatpush1.bf16.xpose.msra.mxu0 0
    %2519 = vmatprep.subr.bf16.mxu0 0
    %2520 = vmatpush1.bf16.xpose.msra.mxu0 0
    %2521 = vmatprep.mubr.bf16.mxu0 0
    %2522 = vmatmul.mubr.bf16.gmra.mrb[0].mxu0 %v2484
    %v2523 = vpop.f32.mrb[0].mxu0
    %v2524 = vadd.f32 0.0, %v2523
    %v2525 = vpop.f32.mrb[0].mxu0
    %v2526 = vpop.f32.mrb[0].mxu0
    %v2527 = vpop.f32.mrb[0].mxu0
    %2528 = vdwg.mxu0
    %v2529 = vmul.f32 %v2472, 0.125
    %v2530 = vmul.f32 %v2524, 0.125
    %v2531 = vadd.f32 %v2529, %v890
    %v2532 = vadd.f32 %v2530, %v894
    %v2533 = vsel %vm899, %v2531, -inf
    %2534 = vmax.xlane.f32.xlu0 %v2533
    %v2535 = vpop.xlane.xlu0 %2534
    %v2536 = vsel %vm899, %v2532, -inf
    %2537 = vmax.xlane.f32.xlu0 %v2536
    %v2538 = vpop.xlane.xlu0 %2537
    %v2539 = vsub.f32 %v2531, %v2535
    %v2540 = vsub.f32 %v2532, %v2538
    %v2541 = vmul.f32 %v2539, 1.442695
    %v2542 = vpow.pop %v2541
    %v2543 = vmul.f32 %v2540, 1.442695
    %v2544 = vpow.pop %v2543
    %v2545 = vsel %vm899, %v2542, 0.0
    %2546 = vadd.xlane.f32.xlu0 %v2545
    %v2547 = vpop.xlane.xlu0 %2546
    %v2548 = vsel %vm899, %v2544, 0.0
    %2549 = vadd.xlane.f32.xlu0 %v2548
    %v2550 = vpop.xlane.xlu0 %2549
    %v2551 = vrcp.pop %v2547
    %v2552 = vrcp.pop %v2550
    %v2553 = vmul.f32 %v2542, %v2551
    %v2554 = vmul.f32 %v2544, %v2552
    %v2555 = vpack.c.bf16 %v2553, %v2553
    %v2556 = vpack.c.bf16 %v2554, %v2554
    %2558 = vrot.lane.b32.xlu0 %v2210, 64
    %v2559 = vpop.permute.xlu0 %2558
    %v2561 = vsel %vm899, %v2555, 0
    %v2564 = vsel %vm927, %v2559, 0
    %2566 = vmatprep.subr.bf16.mxu0 0
    %2567 = vmatpush1.bf16.msra.mxu0 %v2564
    %2568 = vmatprep.subr.bf16.mxu0 0
    %2569 = vmatpush1.bf16.msra.mxu0 0
    %2570 = vmatprep.subr.bf16.mxu0 0
    %2571 = vmatpush1.bf16.msra.mxu0 0
    %2572 = vmatprep.subr.bf16.mxu0 0
    %2573 = vmatpush1.bf16.msra.mxu0 0
    %2574 = vmatprep.subr.bf16.mxu0 0
    %2575 = vmatpush1.bf16.msra.mxu0 0
    %2576 = vmatprep.subr.bf16.mxu0 0
    %2577 = vmatpush1.bf16.msra.mxu0 0
    %2578 = vmatprep.subr.bf16.mxu0 0
    %2579 = vmatpush1.bf16.msra.mxu0 0
    %2580 = vmatprep.subr.bf16.mxu0 0
    %2581 = vmatpush1.bf16.msra.mxu0 0
    %2582 = vmatprep.subr.bf16.mxu0 0
    %2583 = vmatpush1.bf16.msra.mxu0 0
    %2584 = vmatprep.subr.bf16.mxu0 0
    %2585 = vmatpush1.bf16.msra.mxu0 0
    %2586 = vmatprep.subr.bf16.mxu0 0
    %2587 = vmatpush1.bf16.msra.mxu0 0
    %2588 = vmatprep.subr.bf16.mxu0 0
    %2589 = vmatpush1.bf16.msra.mxu0 0
    %2590 = vmatprep.subr.bf16.mxu0 0
    %2591 = vmatpush1.bf16.msra.mxu0 0
    %2592 = vmatprep.subr.bf16.mxu0 0
    %2593 = vmatpush1.bf16.msra.mxu0 0
    %2594 = vmatprep.subr.bf16.mxu0 0
    %2595 = vmatpush1.bf16.msra.mxu0 0
    %2596 = vmatprep.subr.bf16.mxu0 0
    %2597 = vmatpush1.bf16.msra.mxu0 0
    %2598 = vmatprep.mubr.bf16.mxu0 0
    %2599 = vmatmul.mubr.bf16.gmra.mrb[0].mxu0 %v2561
    %v2600 = vpop.f32.mrb[0].mxu0
    %v2601 = vadd.f32 0.0, %v2600
    %v2602 = vpop.f32.mrb[0].mxu0
    %v2603 = vpop.f32.mrb[0].mxu0
    %v2604 = vpop.f32.mrb[0].mxu0
    %2605 = vdwg.mxu0
    %2607 = vrot.lane.b32.xlu0 %v2211, 64
    %v2608 = vpop.permute.xlu0 %2607
    %v2610 = vsel %vm899, %v2556, 0
    %v2613 = vsel %vm927, %v2608, 0
    %2615 = vmatprep.subr.bf16.mxu0 0
    %2616 = vmatpush1.bf16.msra.mxu0 %v2613
    %2617 = vmatprep.subr.bf16.mxu0 0
    %2618 = vmatpush1.bf16.msra.mxu0 0
    %2619 = vmatprep.subr.bf16.mxu0 0
    %2620 = vmatpush1.bf16.msra.mxu0 0
    %2621 = vmatprep.subr.bf16.mxu0 0
    %2622 = vmatpush1.bf16.msra.mxu0 0
    %2623 = vmatprep.subr.bf16.mxu0 0
    %2624 = vmatpush1.bf16.msra.mxu0 0
    %2625 = vmatprep.subr.bf16.mxu0 0
    %2626 = vmatpush1.bf16.msra.mxu0 0
    %2627 = vmatprep.subr.bf16.mxu0 0
    %2628 = vmatpush1.bf16.msra.mxu0 0
    %2629 = vmatprep.subr.bf16.mxu0 0
    %2630 = vmatpush1.bf16.msra.mxu0 0
    %2631 = vmatprep.subr.bf16.mxu0 0
    %2632 = vmatpush1.bf16.msra.mxu0 0
    %2633 = vmatprep.subr.bf16.mxu0 0
    %2634 = vmatpush1.bf16.msra.mxu0 0
    %2635 = vmatprep.subr.bf16.mxu0 0
    %2636 = vmatpush1.bf16.msra.mxu0 0
    %2637 = vmatprep.subr.bf16.mxu0 0
    %2638 = vmatpush1.bf16.msra.mxu0 0
    %2639 = vmatprep.subr.bf16.mxu0 0
    %2640 = vmatpush1.bf16.msra.mxu0 0
    %2641 = vmatprep.subr.bf16.mxu0 0
    %2642 = vmatpush1.bf16.msra.mxu0 0
    %2643 = vmatprep.subr.bf16.mxu0 0
    %2644 = vmatpush1.bf16.msra.mxu0 0
    %2645 = vmatprep.subr.bf16.mxu0 0
    %2646 = vmatpush1.bf16.msra.mxu0 0
    %2647 = vmatprep.mubr.bf16.mxu0 0
    %2648 = vmatmul.mubr.bf16.gmra.mrb[0].mxu0 %v2610
    %v2649 = vpop.f32.mrb[0].mxu0
    %v2650 = vadd.f32 0.0, %v2649
    %v2651 = vpop.f32.mrb[0].mxu0
    %v2652 = vpop.f32.mrb[0].mxu0
    %v2653 = vpop.f32.mrb[0].mxu0
    %2654 = vdwg.mxu0
    %v2655 = vpack.c.bf16 %v2650, %v2601
    %v2664 = vunpack.c.l.b16 %v1856
    %v2665 = vunpack.c.l.b16 %v1857
    %v2666 = vunpack.c.l.b16 %v1858
    %v2667 = vunpack.c.l.b16 %v1859
    %v2668 = vunpack.c.l.b16 %v1860
    %v2669 = vunpack.c.l.b16 %v1861
    %v2670 = vunpack.c.l.b16 %v1862
    %v2671 = vunpack.c.l.b16 %v1863
    %v2672 = vpack.c.b16 %v2665, %v2664
    %v2673 = vpack.c.b16 %v2667, %v2666
    %v2674 = vpack.c.b16 %v2669, %v2668
    %v2675 = vpack.c.b16 %v2671, %v2670
    %v2681 = vsel %vm790, %v2655, 0
    %2683 = vmatprep.subr.bf16.mxu0 0
    %2684 = vmatpush1.bf16.msra.mxu0 %v2672
    %2685 = vmatprep.subr.bf16.mxu0 0
    %2686 = vmatpush1.bf16.msra.mxu0 %v2673
    %2687 = vmatprep.subr.bf16.mxu0 0
    %2688 = vmatpush1.bf16.msra.mxu0 %v2674
    %2689 = vmatprep.subr.bf16.mxu0 0
    %2690 = vmatpush1.bf16.msra.mxu0 %v2675
    %2691 = vmatprep.subr.bf16.mxu0 0
    %2692 = vmatpush1.bf16.msra.mxu0 0
    %2693 = vmatprep.subr.bf16.mxu0 0
    %2694 = vmatpush1.bf16.msra.mxu0 0
    %2695 = vmatprep.subr.bf16.mxu0 0
    %2696 = vmatpush1.bf16.msra.mxu0 0
    %2697 = vmatprep.subr.bf16.mxu0 0
    %2698 = vmatpush1.bf16.msra.mxu0 0
    %2699 = vmatprep.subr.bf16.mxu0 0
    %2700 = vmatpush1.bf16.msra.mxu0 0
    %2701 = vmatprep.subr.bf16.mxu0 0
    %2702 = vmatpush1.bf16.msra.mxu0 0
    %2703 = vmatprep.subr.bf16.mxu0 0
    %2704 = vmatpush1.bf16.msra.mxu0 0
    %2705 = vmatprep.subr.bf16.mxu0 0
    %2706 = vmatpush1.bf16.msra.mxu0 0
    %2707 = vmatprep.subr.bf16.mxu0 0
    %2708 = vmatpush1.bf16.msra.mxu0 0
    %2709 = vmatprep.subr.bf16.mxu0 0
    %2710 = vmatpush1.bf16.msra.mxu0 0
    %2711 = vmatprep.subr.bf16.mxu0 0
    %2712 = vmatpush1.bf16.msra.mxu0 0
    %2713 = vmatprep.subr.bf16.mxu0 0
    %2714 = vmatpush1.bf16.msra.mxu0 0
    %2715 = vmatprep.mubr.bf16.mxu0 0
    %2716 = vmatmul.mubr.bf16.gmra.mrb[0].mxu0 %v2681
    %v2717 = vpop.f32.mrb[0].mxu0
    %v2718 = vadd.f32 0.0, %v2717
    %v2719 = vpop.f32.mrb[0].mxu0
    %v2720 = vpop.f32.mrb[0].mxu0
    %v2721 = vadd.f32 0.0, %v2720
    %v2722 = vpop.f32.mrb[0].mxu0
    %2723 = vdwg.mxu0
    %v2732 = vunpack.c.l.b16 %v1848
    %v2733 = vunpack.c.l.b16 %v1849
    %v2734 = vunpack.c.l.b16 %v1850
    %v2735 = vunpack.c.l.b16 %v1851
    %v2736 = vunpack.c.l.b16 %v1852
    %v2737 = vunpack.c.l.b16 %v1853
    %v2738 = vunpack.c.l.b16 %v1854
    %v2739 = vunpack.c.l.b16 %v1855
    %v2740 = vpack.c.b16 %v2733, %v2732
    %v2741 = vpack.c.b16 %v2735, %v2734
    %v2742 = vpack.c.b16 %v2737, %v2736
    %v2743 = vpack.c.b16 %v2739, %v2738
    %v2749 = vsel %vm790, %v2424, 0
    %2751 = vmatprep.subr.bf16.mxu0 0
    %2752 = vmatpush1.bf16.msra.mxu0 %v2740
    %2753 = vmatprep.subr.bf16.mxu0 0
    %2754 = vmatpush1.bf16.msra.mxu0 %v2741
    %2755 = vmatprep.subr.bf16.mxu0 0
    %2756 = vmatpush1.bf16.msra.mxu0 %v2742
    %2757 = vmatprep.subr.bf16.mxu0 0
    %2758 = vmatpush1.bf16.msra.mxu0 %v2743
    %2759 = vmatprep.subr.bf16.mxu0 0
    %2760 = vmatpush1.bf16.msra.mxu0 0
    %2761 = vmatprep.subr.bf16.mxu0 0
    %2762 = vmatpush1.bf16.msra.mxu0 0
    %2763 = vmatprep.subr.bf16.mxu0 0
    %2764 = vmatpush1.bf16.msra.mxu0 0
    %2765 = vmatprep.subr.bf16.mxu0 0
    %2766 = vmatpush1.bf16.msra.mxu0 0
    %2767 = vmatprep.subr.bf16.mxu0 0
    %2768 = vmatpush1.bf16.msra.mxu0 0
    %2769 = vmatprep.subr.bf16.mxu0 0
    %2770 = vmatpush1.bf16.msra.mxu0 0
    %2771 = vmatprep.subr.bf16.mxu0 0
    %2772 = vmatpush1.bf16.msra.mxu0 0
    %2773 = vmatprep.subr.bf16.mxu0 0
    %2774 = vmatpush1.bf16.msra.mxu0 0
    %2775 = vmatprep.subr.bf16.mxu0 0
    %2776 = vmatpush1.bf16.msra.mxu0 0
    %2777 = vmatprep.subr.bf16.mxu0 0
    %2778 = vmatpush1.bf16.msra.mxu0 0
    %2779 = vmatprep.subr.bf16.mxu0 0
    %2780 = vmatpush1.bf16.msra.mxu0 0
    %2781 = vmatprep.subr.bf16.mxu0 0
    %2782 = vmatpush1.bf16.msra.mxu0 0
    %2783 = vmatprep.mubr.bf16.mxu0 0
    %2784 = vmatmul.mubr.bf16.gmra.mrb[0].mxu0 %v2749
    %v2785 = vpop.f32.mrb[0].mxu0
    %v2786 = vadd.f32 %v2718, %v2785
    %v2787 = vpop.f32.mrb[0].mxu0
    %v2788 = vpop.f32.mrb[0].mxu0
    %v2789 = vadd.f32 %v2721, %v2788
    %v2790 = vpop.f32.mrb[0].mxu0
    %2791 = vdwg.mxu0
    %s2792 = scalar_lea.vmem [#allocation20], 1
    %v2793 = vld [vmem:[%s2792] sm:$0x1]
    %v2795 = vlaneseq
    %v2796 = vshrl.u32 %v2795, 7
    %v2797 = vsub.s32 0, %v2796
    %v2798 = vrot.slane %v2793, %v2797
    %v2800 = vadd.f32 %v2786, %v2798
    %v2801 = vadd.f32 %v2789, %v2798
    %v2802 = vadd.f32 %v1794, %v2800
    %v2803 = vadd.f32 %v1795, %v2801
    %s2804 = scalar_lea.vmem [#allocation22], 1
    %v2805 = vld [vmem:[%s2804] sm:$0x1]
    %s2806 = scalar_lea.vmem [#allocation23], 1
    %v2807 = vld [vmem:[%s2806] sm:$0x1]
    %2808 = vadd.xlane.f32.xlu0 %v2802
    %v2809 = vpop.xlane.xlu0 %2808
    %2810 = vadd.xlane.f32.xlu0 %v2803
    %v2811 = vpop.xlane.xlu0 %2810
    %v2812 = vmul.f32 %v2809, %v342
    %v2813 = vmul.f32 %v2811, %v342
    %v2814 = vsub.f32 %v2802, %v2812
    %v2815 = vsub.f32 %v2803, %v2813
    %v2816 = vmul.f32 %v2814, %v2814
    %v2817 = vmul.f32 %v2815, %v2815
    %2818 = vadd.xlane.f32.xlu0 %v2816
    %v2819 = vpop.xlane.xlu0 %2818
    %2820 = vadd.xlane.f32.xlu0 %v2817
    %v2821 = vpop.xlane.xlu0 %2820
    %v2822 = vmul.f32 %v2819, %v342
    %v2823 = vmul.f32 %v2821, %v342
    %v2824 = vadd.f32 %v2822, 1e-12
    %v2825 = vadd.f32 %v2823, 1e-12
    %v2826 = vrsqrt.pop %v2824
    %v2827 = vrsqrt.pop %v2825
    %v2828 = vmul.f32 %v2814, %v2826
    %v2829 = vmul.f32 %v2815, %v2827
    %v2831 = vlaneseq
    %v2832 = vshrl.u32 %v2831, 7
    %v2833 = vsub.s32 0, %v2832
    %v2834 = vrot.slane %v2805, %v2833
    %v2836 = vmul.f32 %v2828, %v2834
    %v2837 = vmul.f32 %v2829, %v2834
    %v2839 = vlaneseq
    %v2840 = vshrl.u32 %v2839, 7
    %v2841 = vsub.s32 0, %v2840
    %v2842 = vrot.slane %v2807, %v2841
    %v2844 = vadd.f32 %v2836, %v2842
    %v2845 = vadd.f32 %v2837, %v2842
    %v2846 = vpack.c.bf16 %v2845, %v2844
    %s2847 = scalar_lea.vmem [#allocation26], 2
    %v2848 = vld [vmem:[%s2847] sm:$0x3]
    %v2850 = vlaneseq
    %v2851 = vshrl.u32 %v2850, 7
    %v2852 = vsub.s32 0, %v2851
    %v2853 = vrot.slane %v2848, %v2852
    %v2854 = vlaneseq
    %v2855 = vshrl.u32 %v2854, 7
    %v2856 = vsub.s32 1, %v2855
    %v2857 = vrot.slane %v2848, %v2856
    %v2876 = vunpack.c.l.b16 %v1865
    %v2877 = vunpack.c.h.b16 %v1865
    %v2878 = vunpack.c.l.b16 %v1866
    %v2879 = vunpack.c.h.b16 %v1866
    %v2880 = vunpack.c.l.b16 %v1867
    %v2881 = vunpack.c.h.b16 %v1867
    %v2882 = vunpack.c.l.b16 %v1868
    %v2883 = vunpack.c.h.b16 %v1868
    %v2884 = vunpack.c.l.b16 %v1869
    %v2885 = vunpack.c.h.b16 %v1869
    %v2886 = vunpack.c.l.b16 %v1870
    %v2887 = vunpack.c.h.b16 %v1870
    %v2888 = vunpack.c.l.b16 %v1871
    %v2889 = vunpack.c.h.b16 %v1871
    %v2890 = vunpack.c.l.b16 %v1872
    %v2891 = vunpack.c.h.b16 %v1872
    %v2892 = vunpack.c.l.b16 %v1873
    %v2893 = vunpack.c.h.b16 %v1873
    %v2894 = vunpack.c.l.b16 %v1874
    %v2895 = vunpack.c.h.b16 %v1874
    %v2896 = vunpack.c.l.b16 %v1875
    %v2897 = vunpack.c.h.b16 %v1875
    %v2898 = vunpack.c.l.b16 %v1876
    %v2899 = vunpack.c.h.b16 %v1876
    %v2900 = vunpack.c.l.b16 %v1877
    %v2901 = vunpack.c.h.b16 %v1877
    %v2902 = vunpack.c.l.b16 %v1878
    %v2903 = vunpack.c.h.b16 %v1878
    %v2904 = vunpack.c.l.b16 %v1879
    %v2905 = vunpack.c.h.b16 %v1879
    %v2906 = vunpack.c.l.b16 %v1880
    %v2907 = vunpack.c.h.b16 %v1880
    %v2908 = vpack.c.b16 %v2878, %v2876
    %v2909 = vpack.c.b16 %v2879, %v2877
    %v2910 = vpack.c.b16 %v2882, %v2880
    %v2911 = vpack.c.b16 %v2883, %v2881
    %v2912 = vpack.c.b16 %v2886, %v2884
    %v2913 = vpack.c.b16 %v2887, %v2885
    %v2914 = vpack.c.b16 %v2890, %v2888
    %v2915 = vpack.c.b16 %v2891, %v2889
    %v2916 = vpack.c.b16 %v2894, %v2892
    %v2917 = vpack.c.b16 %v2895, %v2893
    %v2918 = vpack.c.b16 %v2898, %v2896
    %v2919 = vpack.c.b16 %v2899, %v2897
    %v2920 = vpack.c.b16 %v2902, %v2900
    %v2921 = vpack.c.b16 %v2903, %v2901
    %v2922 = vpack.c.b16 %v2906, %v2904
    %v2923 = vpack.c.b16 %v2907, %v2905
    %2940 = vmatprep.subr.bf16.mxu0 %v2909
    %2941 = vmatpush1.bf16.msra.mxu0 %v2908
    %2942 = vmatprep.subr.bf16.mxu0 %v2911
    %2943 = vmatpush1.bf16.msra.mxu0 %v2910
    %2944 = vmatprep.subr.bf16.mxu0 %v2913
    %2945 = vmatpush1.bf16.msra.mxu0 %v2912
    %2946 = vmatprep.subr.bf16.mxu0 %v2915
    %2947 = vmatpush1.bf16.msra.mxu0 %v2914
    %2948 = vmatprep.subr.bf16.mxu0 %v2917
    %2949 = vmatpush1.bf16.msra.mxu0 %v2916
    %2950 = vmatprep.subr.bf16.mxu0 %v2919
    %2951 = vmatpush1.bf16.msra.mxu0 %v2918
    %2952 = vmatprep.subr.bf16.mxu0 %v2921
    %2953 = vmatpush1.bf16.msra.mxu0 %v2920
    %2954 = vmatprep.subr.bf16.mxu0 %v2923
    %2955 = vmatpush1.bf16.msra.mxu0 %v2922
    %2956 = vmatprep.subr.bf16.mxu0 0
    %2957 = vmatpush1.bf16.msra.mxu0 0
    %2958 = vmatprep.subr.bf16.mxu0 0
    %2959 = vmatpush1.bf16.msra.mxu0 0
    %2960 = vmatprep.subr.bf16.mxu0 0
    %2961 = vmatpush1.bf16.msra.mxu0 0
    %2962 = vmatprep.subr.bf16.mxu0 0
    %2963 = vmatpush1.bf16.msra.mxu0 0
    %2964 = vmatprep.subr.bf16.mxu0 0
    %2965 = vmatpush1.bf16.msra.mxu0 0
    %2966 = vmatprep.subr.bf16.mxu0 0
    %2967 = vmatpush1.bf16.msra.mxu0 0
    %2968 = vmatprep.subr.bf16.mxu0 0
    %2969 = vmatpush1.bf16.msra.mxu0 0
    %2970 = vmatprep.subr.bf16.mxu0 0
    %2971 = vmatpush1.bf16.msra.mxu0 0
    %2972 = vmatprep.mubr.bf16.mxu0 0
    %2973 = vmatmul.mubr.bf16.gmra.mrb[0].mxu0 %v2846
    %v2974 = vpop.f32.mrb[0].mxu0
    %v2975 = vadd.f32 %v2853, %v2974
    %v2976 = vpop.f32.mrb[0].mxu0
    %v2977 = vadd.f32 %v2857, %v2976
    %v2978 = vpop.f32.mrb[0].mxu0
    %v2979 = vadd.f32 %v2853, %v2978
    %v2980 = vpop.f32.mrb[0].mxu0
    %v2981 = vadd.f32 %v2857, %v2980
    %2982 = vdwg.mxu0
    %v2983 = vmul.f32 %v2975, 0.5
    %v2984 = vmul.f32 %v2977, 0.5
    %v2985 = vmul.f32 %v2979, 0.5
    %v2986 = vmul.f32 %v2981, 0.5
    %v2987 = vmul.f32 %v2975, 0.044715
    %v2988 = vmul.f32 %v2977, 0.044715
    %v2989 = vmul.f32 %v2979, 0.044715
    %v2990 = vmul.f32 %v2981, 0.044715
    %v2991 = vmul.f32 %v2987, %v2975
    %v2992 = vmul.f32 %v2988, %v2977
    %v2993 = vmul.f32 %v2989, %v2979
    %v2994 = vmul.f32 %v2990, %v2981
    %v2995 = vmul.f32 %v2991, %v2975
    %v2996 = vmul.f32 %v2992, %v2977
    %v2997 = vmul.f32 %v2993, %v2979
    %v2998 = vmul.f32 %v2994, %v2981
    %v2999 = vadd.f32 %v2975, %v2995
    %v3000 = vadd.f32 %v2977, %v2996
    %v3001 = vadd.f32 %v2979, %v2997
    %v3002 = vadd.f32 %v2981, %v2998
    %v3003 = vmul.f32 %v2999, 0.7978846
    %v3004 = vmul.f32 %v3000, 0.7978846
    %v3005 = vmul.f32 %v3001, 0.7978846
    %v3006 = vmul.f32 %v3002, 0.7978846
    %v3007 = vtanh.pop %v3003
    %v3008 = vtanh.pop %v3004
    %v3009 = vtanh.pop %v3005
    %v3010 = vtanh.pop %v3006
    %v3011 = vadd.f32 %v3007, 1.0
    %v3012 = vadd.f32 %v3008, 1.0
    %v3013 = vadd.f32 %v3009, 1.0
    %v3014 = vadd.f32 %v3010, 1.0
    %v3015 = vmul.f32 %v2983, %v3011
    %v3016 = vmul.f32 %v2984, %v3012
    %v3017 = vmul.f32 %v2985, %v3013
    %v3018 = vmul.f32 %v2986, %v3014
    %v3019 = vpack.c.bf16 %v3017, %v3015
    %v3020 = vpack.c.bf16 %v3018, %v3016
    %s3021 = scalar_lea.vmem [#allocation29], 1
    %v3022 = vld [vmem:[%s3021] sm:$0x1]
    %v3024 = vlaneseq
    %v3025 = vshrl.u32 %v3024, 7
    %v3026 = vsub.s32 0, %v3025
    %v3027 = vrot.slane %v3022, %v3026
    %v3061 = vunpack.c.l.b16 %v1882
    %v3062 = vunpack.c.l.b16 %v1883
    %v3063 = vunpack.c.l.b16 %v1884
    %v3064 = vunpack.c.l.b16 %v1885
    %v3065 = vunpack.c.l.b16 %v1886
    %v3066 = vunpack.c.l.b16 %v1887
    %v3067 = vunpack.c.l.b16 %v1888
    %v3068 = vunpack.c.l.b16 %v1889
    %v3069 = vunpack.c.l.b16 %v1890
    %v3070 = vunpack.c.l.b16 %v1891
    %v3071 = vunpack.c.l.b16 %v1892
    %v3072 = vunpack.c.l.b16 %v1893
    %v3073 = vunpack.c.l.b16 %v1894
    %v3074 = vunpack.c.l.b16 %v1895
    %v3075 = vunpack.c.l.b16 %v1896
    %v3076 = vunpack.c.l.b16 %v1897
    %v3077 = vunpack.c.l.b16 %v1898
    %v3078 = vunpack.c.l.b16 %v1899
    %v3079 = vunpack.c.l.b16 %v1900
    %v3080 = vunpack.c.l.b16 %v1901
    %v3081 = vunpack.c.l.b16 %v1902
    %v3082 = vunpack.c.l.b16 %v1903
    %v3083 = vunpack.c.l.b16 %v1904
    %v3084 = vunpack.c.l.b16 %v1905
    %v3085 = vunpack.c.l.b16 %v1906
    %v3086 = vunpack.c.l.b16 %v1907
    %v3087 = vunpack.c.l.b16 %v1908
    %v3088 = vunpack.c.l.b16 %v1909
    %v3089 = vunpack.c.l.b16 %v1910
    %v3090 = vunpack.c.l.b16 %v1911
    %v3091 = vunpack.c.l.b16 %v1912
    %v3092 = vunpack.c.l.b16 %v1913
    %v3093 = vpack.c.b16 %v3062, %v3061
    %v3094 = vpack.c.b16 %v3064, %v3063
    %v3095 = vpack.c.b16 %v3066, %v3065
    %v3096 = vpack.c.b16 %v3068, %v3067
    %v3097 = vpack.c.b16 %v3070, %v3069
    %v3098 = vpack.c.b16 %v3072, %v3071
    %v3099 = vpack.c.b16 %v3074, %v3073
    %v3100 = vpack.c.b16 %v3076, %v3075
    %v3101 = vpack.c.b16 %v3078, %v3077
    %v3102 = vpack.c.b16 %v3080, %v3079
    %v3103 = vpack.c.b16 %v3082, %v3081
    %v3104 = vpack.c.b16 %v3084, %v3083
    %v3105 = vpack.c.b16 %v3086, %v3085
    %v3106 = vpack.c.b16 %v3088, %v3087
    %v3107 = vpack.c.b16 %v3090, %v3089
    %v3108 = vpack.c.b16 %v3092, %v3091
    %3125 = vmatprep.subr.bf16.mxu0 0
    %3126 = vmatpush1.bf16.msra.mxu0 %v3093
    %3127 = vmatprep.subr.bf16.mxu0 0
    %3128 = vmatpush1.bf16.msra.mxu0 %v3094
    %3129 = vmatprep.subr.bf16.mxu0 0
    %3130 = vmatpush1.bf16.msra.mxu0 %v3095
    %3131 = vmatprep.subr.bf16.mxu0 0
    %3132 = vmatpush1.bf16.msra.mxu0 %v3096
    %3133 = vmatprep.subr.bf16.mxu0 0
    %3134 = vmatpush1.bf16.msra.mxu0 %v3097
    %3135 = vmatprep.subr.bf16.mxu0 0
    %3136 = vmatpush1.bf16.msra.mxu0 %v3098
    %3137 = vmatprep.subr.bf16.mxu0 0
    %3138 = vmatpush1.bf16.msra.mxu0 %v3099
    %3139 = vmatprep.subr.bf16.mxu0 0
    %3140 = vmatpush1.bf16.msra.mxu0 %v3100
    %3141 = vmatprep.subr.bf16.mxu0 0
    %3142 = vmatpush1.bf16.msra.mxu0 %v3101
    %3143 = vmatprep.subr.bf16.mxu0 0
    %3144 = vmatpush1.bf16.msra.mxu0 %v3102
    %3145 = vmatprep.subr.bf16.mxu0 0
    %3146 = vmatpush1.bf16.msra.mxu0 %v3103
    %3147 = vmatprep.subr.bf16.mxu0 0
    %3148 = vmatpush1.bf16.msra.mxu0 %v3104
    %3149 = vmatprep.subr.bf16.mxu0 0
    %3150 = vmatpush1.bf16.msra.mxu0 %v3105
    %3151 = vmatprep.subr.bf16.mxu0 0
    %3152 = vmatpush1.bf16.msra.mxu0 %v3106
    %3153 = vmatprep.subr.bf16.mxu0 0
    %3154 = vmatpush1.bf16.msra.mxu0 %v3107
    %3155 = vmatprep.subr.bf16.mxu0 0
    %3156 = vmatpush1.bf16.msra.mxu0 %v3108
    %3157 = vmatprep.mubr.bf16.mxu0 %v3020
    %3158 = vmatmul.mubr.bf16.gmra.mrb[0].mxu0 %v3019
    %v3159 = vpop.f32.mrb[0].mxu0
    %v3160 = vadd.f32 %v3027, %v3159
    %v3161 = vpop.f32.mrb[0].mxu0
    %v3162 = vpop.f32.mrb[0].mxu0
    %v3163 = vadd.f32 %v3027, %v3162
    %v3164 = vpop.f32.mrb[0].mxu0
    %3165 = vdwg.mxu0
    %v3166 = vadd.f32 %v2844, %v3160
    %v3167 = vadd.f32 %v2845, %v3163
    %s3168 = scalar_lea.vmem [#allocation31], 1
    %v3169 = vld [vmem:[%s3168] sm:$0x1]
    %s3170 = scalar_lea.vmem [#allocation32], 1
    %v3171 = vld [vmem:[%s3170] sm:$0x1]
    %3172 = vadd.xlane.f32.xlu0 %v3166
    %v3173 = vpop.xlane.xlu0 %3172
    %3174 = vadd.xlane.f32.xlu0 %v3167
    %v3175 = vpop.xlane.xlu0 %3174
    %v3176 = vmul.f32 %v3173, %v342
    %v3177 = vmul.f32 %v3175, %v342
    %v3178 = vsub.f32 %v3166, %v3176
    %v3179 = vsub.f32 %v3167, %v3177
    %v3180 = vmul.f32 %v3178, %v3178
    %v3181 = vmul.f32 %v3179, %v3179
    %3182 = vadd.xlane.f32.xlu0 %v3180
    %v3183 = vpop.xlane.xlu0 %3182
    %3184 = vadd.xlane.f32.xlu0 %v3181
    %v3185 = vpop.xlane.xlu0 %3184
    %v3186 = vmul.f32 %v3183, %v342
    %v3187 = vmul.f32 %v3185, %v342
    %v3188 = vadd.f32 %v3186, 1e-12
    %v3189 = vadd.f32 %v3187, 1e-12
    %v3190 = vrsqrt.pop %v3188
    %v3191 = vrsqrt.pop %v3189
    %v3192 = vmul.f32 %v3178, %v3190
    %v3193 = vmul.f32 %v3179, %v3191
    %v3195 = vlaneseq
    %v3196 = vshrl.u32 %v3195, 7
    %v3197 = vsub.s32 0, %v3196
    %v3198 = vrot.slane %v3169, %v3197
    %v3200 = vmul.f32 %v3192, %v3198
    %v3201 = vmul.f32 %v3193, %v3198
    %v3203 = vlaneseq
    %v3204 = vshrl.u32 %v3203, 7
    %v3205 = vsub.s32 0, %v3204
    %v3206 = vrot.slane %v3171, %v3205
    %v3208 = vadd.f32 %v3200, %v3206
    %v3209 = vadd.f32 %v3201, %v3206
    %3210 = vst [vmem:[#allocation34] sm:$0xff] %v3208
    %3211 = vst [vmem:[#allocation34 + $0x8] sm:$0xff] %v3209
    // Predicated region
    $region162: #{tpu_custom_call.1} parent=1 // pred_check
      _
    $region163: #{tpu_custom_call.1} parent=1 // pred_check_branch
      %3213 = sbr.rel (0) target = $region165
    $region164: #{tpu_custom_call.1} parent=1 // pred_region
      %s3215 = ssub.s32 256, 256
      %3216 = vsyncadd [#allocation4], %s3215
      %s3217 = sshll.u32 [#allocation34], 4
      %s3218 = int_to_ptr.vmem [resolvable:$true] %s3217
      %3223 = dma.vmem_to_hbm [thread:$0]  %s3218, 256, %s20, [#allocation4], 128, 128, 8
    $region165: #{tpu_custom_call.1} parent=1 // pred_fallthru
      _
    // Predicated region
    $region166: #{tpu_custom_call.1} parent=1 // pred_check
      _
    $region167: #{tpu_custom_call.1} parent=1 // pred_check_branch
      %3225 = sbr.rel (0) target = $region169
    $region168: #{tpu_custom_call.1} parent=1 // pred_region
      %3226 = dma.done [#allocation4], 256
    $region169: #{tpu_custom_call.1} parent=1 // pred_fallthru
      _
    %3227 = vsyncpa [#allocation3], 1
    %3228 = vsyncpa [#allocation6], 1
    %3229 = vsyncpa [#allocation9], 1
    %3230 = vsyncpa [#allocation12], 1
    %3231 = vsyncpa [#allocation15], 1
    %3232 = vsyncpa [#allocation18], 1
    %3233 = vsyncpa [#allocation21], 1
    %3234 = vsyncpa [#allocation24], 1
    %3235 = vsyncpa [#allocation27], 1
    %3236 = vsyncpa [#allocation30], 1
    %3237 = vsyncpa [#allocation33], 1
    %3238 = vsyncpa [#allocation4], 1

</llo_original>
